<compile_context>
chip_gen: v7x
topology: tpu7x:2x2x1
jax: 0.10.0
libtpu: 0.0.40
codegen_flags: <defaults>
</compile_context>

<pallas_src>
import functools
import numpy as np

import jax
import jax.numpy as jnp
from jax import lax
from jax.experimental import pallas as pl
from jax.experimental.pallas import tpu as pltpu

HIGHEST = jax.lax.Precision.HIGHEST


# ----------------------------------------------------------------------------
# Host-side constant builders (numpy, tiny)
# ----------------------------------------------------------------------------
def _bilinear_matrix(n_in, n_out):
    """PyTorch F.interpolate(mode='bilinear', align_corners=False) 1-D matrix."""
    M = np.zeros((n_out, n_in), dtype=np.float32)
    for i in range(n_out):
        src = (i + 0.5) * n_in / n_out - 0.5
        src = max(src, 0.0)                      # PyTorch clamps negative src
        i0 = min(int(np.floor(src)), n_in - 1)
        i1 = min(i0 + 1, n_in - 1)
        frac = src - i0
        M[i, i0] += 1.0 - frac
        M[i, i1] += frac
    return M


def _bilinear_pad_flat_matrix(h, w, H, W, Hp, Wp, Lpp):
    """(Lpp, h*w) matrix mapping flattened pm to the lane-padded padded-flat
    upsample (zero rows on the padding ring and on the lane-pad columns)."""
    A_h = _bilinear_matrix(h, H)                 # (H, h)
    A_w = _bilinear_matrix(w, W)                 # (W, w)
    B = np.zeros((Lpp, h * w), np.float32)
    for hp in range(1, H + 1):
        for wp in range(1, W + 1):
            B[hp * Wp + wp] = np.outer(A_h[hp - 1], A_w[wp - 1]).reshape(-1)
    return B


def _interior_mask(H, W, Hp, Wp, Lpp):
    mm = np.zeros((Hp, Wp), np.float32)
    mm[1:H + 1, 1:W + 1] = 1.0
    m = np.zeros((Lpp,), np.float32)
    m[:Hp * Wp] = mm.reshape(-1)
    return m.reshape(1, Lpp)


# ----------------------------------------------------------------------------
# Fused Refine forward kernel (one grid step = one image)
# ----------------------------------------------------------------------------
def _refine_kernel(f_ref, pm_ref, wfs_ref, wres_ref, b_ref, bt_ref, mask_ref,
                   out_ref, act_scr, col_scr, *, Wp, Lpp, E, C, Cin_pad):
    base = E - Wp - 1
    mask = mask_ref[...]                                   # (1, Lpp) f32

    # Zero the extended-activation scratch ONCE per image.  Every activation
    # placed into its interior below carries a zero padding ring / zero lane-pad
    # columns (guaranteed by the `* mask` before each place()), and the halo
    # columns [0:E) / [E+Lpp:) are never written, so one clear per step suffices.
    act_scr[...] = jnp.zeros_like(act_scr)

    def place(val):
        # lane-aligned dense store of a (C, Lpp) padded-flat activation
        act_scr[:, E:E + Lpp] = val

    def conv(src_ref, w2, b, cx):
        # src_ref: (cx, Lext) f32 ref with zero halo and zero padding ring
        # w2:      (C, 9*cx) bf16 packed 3x3 weights ;  b: (C, 1) f32 bias
        for dh in range(3):
            for dw in range(3):
                t = dh * 3 + dw
                start = base + dh * Wp + dw
                col_scr[t * cx:(t + 1) * cx, :] = (
                    src_ref[:, start:start + Lpp].astype(jnp.bfloat16))
        y = jnp.dot(w2, col_scr[0:9 * cx, :],
                    preferred_element_type=jnp.float32)    # (C, Lpp) f32
        return y + b

    relu = lambda v: jnp.maximum(v, 0.0)

    # convFS (no input relu)
    s0 = conv(f_ref, wfs_ref[...], b_ref[0], Cin_pad) * mask
    # ResFS:  s = s0 + conv2(relu(conv1(relu(s0))))
    place(relu(s0))
    r1 = conv(act_scr, wres_ref[0], b_ref[1], C) * mask
    place(relu(r1))
    r2 = conv(act_scr, wres_ref[1], b_ref[2], C)
    # bilinear x2 upsample of pm, fused as one matmul straight into the
    # padded-flat layout (ring / lane-pad rows of B are zero)
    up = jnp.dot(pm_ref[...], bt_ref[...],
                 preferred_element_type=jnp.float32)       # (C, Lpp)
    m0 = (s0 + r2 + up) * mask
    # ResMM:  m = m0 + conv2(relu(conv1(relu(m0))))
    place(relu(m0))
    r3 = conv(act_scr, wres_ref[2], b_ref[3], C) * mask
    place(relu(r3))
    r4 = conv(act_scr, wres_ref[3], b_ref[4], C)
    # NOTE: padding-ring / lane-pad columns of out_ref hold unmasked r4 values;
    # they are sliced off by the wrapper and must not be consumed directly.
    out_ref[...] = m0 + r4


def refine_forward(f_nchw, pm_nchw, p):
    N, Cin, H, W = f_nchw.shape
    _, C, h, w = pm_nchw.shape
    Hp, Wp = H + 2, W + 2
    Lp = Hp * Wp
    Lpp = ((Lp + 127) // 128) * 128              # lane-dense padded-flat width
    E = ((Wp + 1 + 127) // 128) * 128            # lane-aligned halo extension
    Lext = Lpp + 2 * E
    Cin_pad = ((Cin + 7) // 8) * 8
    n_col = 9 * max(Cin_pad, C)

    # ---- one-time layout plumbing on the tiny raw inputs (plain JAX) ----
    fp = jnp.pad(f_nchw, ((0, 0), (0, Cin_pad - Cin), (1, 1), (1, 1)))
    f_flat = jnp.pad(fp.reshape(N, Cin_pad, Lp), ((0, 0), (0, 0), (0, Lpp - Lp)))
    f_ext = jnp.pad(f_flat, ((0, 0), (0, 0), (E, E)))              # (N,Cp,Lext)
    pm_flat = pm_nchw.reshape(N, C, h * w).astype(jnp.bfloat16)

    # ---- host-packed constants (weights -> (Cout, 9*Cin), bilinear matrix) ----
    wfs = jnp.pad(p['wFS'], ((0, 0), (0, 0), (0, Cin_pad - Cin), (0, 0)))
    wfs = jnp.transpose(wfs, (3, 0, 1, 2)).reshape(C, 9 * Cin_pad).astype(jnp.bfloat16)
    wres = jnp.stack([jnp.transpose(p[k], (3, 0, 1, 2)).reshape(C, 9 * C)
                      for k in ('w1a', 'w1b', 'w2a', 'w2b')]).astype(jnp.bfloat16)
    b_all = jnp.stack([p[k].reshape(C, 1) for k in
                       ('bFS', 'b1a', 'b1b', 'b2a', 'b2b')]).astype(jnp.float32)
    bt = jnp.asarray(_bilinear_pad_flat_matrix(h, w, H, W, Hp, Wp, Lpp).T,
                     dtype=jnp.bfloat16)                   # (h*w, Lpp)
    mask = jnp.asarray(_interior_mask(H, W, Hp, Wp, Lpp))  # (1, Lpp) f32

    kern = functools.partial(_refine_kernel, Wp=Wp, Lpp=Lpp, E=E,
                             C=C, Cin_pad=Cin_pad)
    out_flat = pl.pallas_call(
        kern,
        out_shape=jax.ShapeDtypeStruct((N, C, Lpp), jnp.float32),
        grid_spec=pltpu.PrefetchScalarGridSpec(
            num_scalar_prefetch=0,
            grid=(N,),
            in_specs=[
                pl.BlockSpec((None, Cin_pad, Lext), lambda i: (i, 0, 0)),  # f_ext
                pl.BlockSpec((None, C, h * w), lambda i: (i, 0, 0)),       # pm bf16
                pl.BlockSpec((C, 9 * Cin_pad), lambda i: (0, 0)),          # wFS
                pl.BlockSpec((4, C, 9 * C), lambda i: (0, 0, 0)),          # res weights
                pl.BlockSpec((5, C, 1), lambda i: (0, 0, 0)),              # biases
                pl.BlockSpec((h * w, Lpp), lambda i: (0, 0)),              # bilinear B^T
                pl.BlockSpec((1, Lpp), lambda i: (0, 0)),                  # interior mask
            ],
            out_specs=pl.BlockSpec((None, C, Lpp), lambda i: (i, 0, 0)),
            scratch_shapes=[pltpu.VMEM((C, Lext), jnp.float32),       # extended act
                            pltpu.VMEM((n_col, Lpp), jnp.bfloat16)]), # bf16 im2col
        compiler_params=pltpu.CompilerParams(
            dimension_semantics=("parallel",),
            vmem_limit_bytes=32 * 1024 * 1024),
    )(f_ext, pm_flat, wfs, wres, b_all, bt, mask)

    out = out_flat[:, :, :Lp].reshape(N, C, Hp, Wp)[:, :, 1:H + 1, 1:W + 1]
    return out


# ----------------------------------------------------------------------------
# Plain-JAX reference (f32, HIGHEST precision) and parameter init
# ----------------------------------------------------------------------------
def _conv_ref(x, w, b):
    y = lax.conv_general_dilated(x, w, window_strides=(1, 1), padding='SAME',
                                 dimension_numbers=('NHWC', 'HWIO', 'NHWC'),
                                 precision=HIGHEST)
    return y + b.reshape(1, 1, 1, -1)


def refine_reference(f_nchw, pm_nchw, p):
    f = jnp.transpose(f_nchw, (0, 2, 3, 1))
    pm = jnp.transpose(pm_nchw, (0, 2, 3, 1))
    s0 = _conv_ref(f, p['wFS'], p['bFS'])
    r1 = _conv_ref(jax.nn.relu(s0), p['w1a'], p['b1a'])
    r2 = _conv_ref(jax.nn.relu(r1), p['w1b'], p['b1b'])
    s = s0 + r2
    _, h, w, _ = pm.shape
    A_h = jnp.asarray(_bilinear_matrix(h, 2 * h))
    A_w = jnp.asarray(_bilinear_matrix(w, 2 * w))
    up = jnp.einsum('Hh,nhwc->nHwc', A_h, pm, precision=HIGHEST)
    up = jnp.einsum('Ww,nHwc->nHWc', A_w, up, precision=HIGHEST)
    m0 = s + up
    r3 = _conv_ref(jax.nn.relu(m0), p['w2a'], p['b2a'])
    r4 = _conv_ref(jax.nn.relu(r3), p['w2b'], p['b2b'])
    m = m0 + r4
    return jnp.transpose(m, (0, 3, 1, 2))


def init_params(key, inplanes, planes):
    ks = jax.random.split(key, 10)

    def conv_init(kw, kb, cin, cout):
        w = jax.random.normal(kw, (3, 3, cin, cout), jnp.float32) * np.sqrt(2.0 / (9 * cin))
        b = jax.random.normal(kb, (cout,), jnp.float32) * 0.1
        return w, b

    p = {}
    p['wFS'], p['bFS'] = conv_init(ks[0], ks[1], inplanes, planes)
    p['w1a'], p['b1a'] = conv_init(ks[2], ks[3], planes, planes)
    p['w1b'], p['b1b'] = conv_init(ks[4], ks[5], planes, planes)
    p['w2a'], p['b2a'] = conv_init(ks[6], ks[7], planes, planes)
    p['w2b'], p['b2b'] = conv_init(ks[8], ks[9], planes, planes)
    return p


if __name__ == "__main__":
    key = jax.random.PRNGKey(0)
    k_f, k_pm, k_p = jax.random.split(key, 3)

    N, inplanes, planes, H, W = 2, 4, 8, 16, 16
    f = jax.random.normal(k_f, (N, inplanes, H, W), jnp.float32)            # NCHW
    pm = jax.random.normal(k_pm, (N, planes, H // 2, W // 2), jnp.float32)  # NCHW
    params = init_params(k_p, inplanes, planes)

    out = jax.block_until_ready(refine_forward(f, pm, params))
    ref = jax.block_until_ready(refine_reference(f, pm, params))

    assert out.shape == (N, planes, H, W), out.shape
    err = float(np.max(np.abs(np.asarray(out) - np.asarray(ref))))
    # Tolerance absorbs bf16 MXU-operand quantization vs. the f32 HIGHEST reference.
    assert np.allclose(np.asarray(out), np.asarray(ref), atol=5e-2, rtol=3e-2), err

    print("KERNEL_OK")
</pallas_src>

<mosaic_0001>
module attributes {stable_mosaic.version = 11 : i64} {
  func.func @_refine_kernel(%arg0: i32, %arg1: memref<1x8x640xf32, #tpu.memory_space<vmem>>, %arg2: memref<1x8x64xbf16, #tpu.memory_space<vmem>>, %arg3: memref<8x72xbf16, #tpu.memory_space<vmem>>, %arg4: memref<4x8x72xbf16, #tpu.memory_space<vmem>>, %arg5: memref<5x8x1xf32, #tpu.memory_space<vmem>>, %arg6: memref<64x384xbf16, #tpu.memory_space<vmem>>, %arg7: memref<1x384xf32, #tpu.memory_space<vmem>>, %arg8: memref<1x8x384xf32, #tpu.memory_space<vmem>>, %arg9: memref<8x640xf32, #tpu.memory_space<vmem>>, %arg10: memref<72x384xbf16, #tpu.memory_space<vmem>>) attributes {dimension_semantics = [#tpu.dimension_semantics<parallel>], iteration_bounds = array<i64: 2>, scalar_prefetch = 0 : i64, scratch_operands = 2 : i64, tpu.core_type = #tpu.core_type<tc>, window_params = [{transform_indices = @transform_0, window_bounds = array<i64: 1, 8, 640>}, {transform_indices = @transform_1, window_bounds = array<i64: 1, 8, 64>}, {pipeline_mode = #tpu.pipeline_mode<synchronous>, transform_indices = @transform_2, window_bounds = array<i64: 8, 72>}, {pipeline_mode = #tpu.pipeline_mode<synchronous>, transform_indices = @transform_3, window_bounds = array<i64: 4, 8, 72>}, {pipeline_mode = #tpu.pipeline_mode<synchronous>, transform_indices = @transform_4, window_bounds = array<i64: 5, 8, 1>}, {pipeline_mode = #tpu.pipeline_mode<synchronous>, transform_indices = @transform_5, window_bounds = array<i64: 64, 384>}, {pipeline_mode = #tpu.pipeline_mode<synchronous>, transform_indices = @transform_6, window_bounds = array<i64: 1, 384>}, {transform_indices = @transform_7, window_bounds = array<i64: 1, 8, 384>}]} {
    %c0 = arith.constant 0 : index
    %c0_0 = arith.constant 0 : index
    %0 = vector.load %arg7[%c0, %c0_0] : memref<1x384xf32, #tpu.memory_space<vmem>>, vector<1x384xf32>
    %cst = arith.constant 0.000000e+00 : f32
    %1 = vector.broadcast %cst : f32 to vector<8x640xf32>
    %c0_1 = arith.constant 0 : index
    %c0_2 = arith.constant 0 : index
    %2 = vector.load %arg9[%c0_1, %c0_2] : memref<8x640xf32, #tpu.memory_space<vmem>>, vector<8x640xf32>
    tpu.vector_store %arg9[%c0_1, %c0_2], %1 {strides = array<i32>} : memref<8x640xf32, #tpu.memory_space<vmem>>, vector<8x640xf32>,
    %c0_3 = arith.constant 0 : index
    %c0_4 = arith.constant 0 : index
    %3 = vector.load %arg3[%c0_3, %c0_4] : memref<8x72xbf16, #tpu.memory_space<vmem>>, vector<8x72xbf16>
    %c0_5 = arith.constant 0 : index
    %c0_6 = arith.constant 0 : index
    %c0_7 = arith.constant 0 : index
    %4 = vector.load %arg5[%c0_5, %c0_6, %c0_7] : memref<5x8x1xf32, #tpu.memory_space<vmem>>, vector<1x8x1xf32>
    %5 = vector.shape_cast %4 : vector<1x8x1xf32> to vector<8x1xf32>
    %c0_8 = arith.constant 0 : index
    %c0_9 = arith.constant 0 : index
    %c109 = arith.constant 109 : index
    %6 = vector.load %arg1[%c0_8, %c0_9, %c109] : memref<1x8x640xf32, #tpu.memory_space<vmem>>, vector<1x8x384xf32>
    %7 = vector.shape_cast %6 : vector<1x8x384xf32> to vector<8x384xf32>
    %8 = arith.truncf %7 : vector<8x384xf32> to vector<8x384xbf16>
    %c0_10 = arith.constant 0 : index
    %c0_11 = arith.constant 0 : index
    %9 = vector.load %arg10[%c0_10, %c0_11] : memref<72x384xbf16, #tpu.memory_space<vmem>>, vector<8x384xbf16>
    tpu.vector_store %arg10[%c0_10, %c0_11], %8 {strides = array<i32>} : memref<72x384xbf16, #tpu.memory_space<vmem>>, vector<8x384xbf16>,
    %c0_12 = arith.constant 0 : index
    %c0_13 = arith.constant 0 : index
    %c110 = arith.constant 110 : index
    %10 = vector.load %arg1[%c0_12, %c0_13, %c110] : memref<1x8x640xf32, #tpu.memory_space<vmem>>, vector<1x8x384xf32>
    %11 = vector.shape_cast %10 : vector<1x8x384xf32> to vector<8x384xf32>
    %12 = arith.truncf %11 : vector<8x384xf32> to vector<8x384xbf16>
    %c8 = arith.constant 8 : index
    %c0_14 = arith.constant 0 : index
    %13 = vector.load %arg10[%c8, %c0_14] : memref<72x384xbf16, #tpu.memory_space<vmem>>, vector<8x384xbf16>
    tpu.vector_store %arg10[%c8, %c0_14], %12 {strides = array<i32>} : memref<72x384xbf16, #tpu.memory_space<vmem>>, vector<8x384xbf16>,
    %c0_15 = arith.constant 0 : index
    %c0_16 = arith.constant 0 : index
    %c111 = arith.constant 111 : index
    %14 = vector.load %arg1[%c0_15, %c0_16, %c111] : memref<1x8x640xf32, #tpu.memory_space<vmem>>, vector<1x8x384xf32>
    %15 = vector.shape_cast %14 : vector<1x8x384xf32> to vector<8x384xf32>
    %16 = arith.truncf %15 : vector<8x384xf32> to vector<8x384xbf16>
    %c16 = arith.constant 16 : index
    %c0_17 = arith.constant 0 : index
    %17 = vector.load %arg10[%c16, %c0_17] : memref<72x384xbf16, #tpu.memory_space<vmem>>, vector<8x384xbf16>
    tpu.vector_store %arg10[%c16, %c0_17], %16 {strides = array<i32>} : memref<72x384xbf16, #tpu.memory_space<vmem>>, vector<8x384xbf16>,
    %c0_18 = arith.constant 0 : index
    %c0_19 = arith.constant 0 : index
    %c127 = arith.constant 127 : index
    %18 = vector.load %arg1[%c0_18, %c0_19, %c127] : memref<1x8x640xf32, #tpu.memory_space<vmem>>, vector<1x8x384xf32>
    %19 = vector.shape_cast %18 : vector<1x8x384xf32> to vector<8x384xf32>
    %20 = arith.truncf %19 : vector<8x384xf32> to vector<8x384xbf16>
    %c24 = arith.constant 24 : index
    %c0_20 = arith.constant 0 : index
    %21 = vector.load %arg10[%c24, %c0_20] : memref<72x384xbf16, #tpu.memory_space<vmem>>, vector<8x384xbf16>
    tpu.vector_store %arg10[%c24, %c0_20], %20 {strides = array<i32>} : memref<72x384xbf16, #tpu.memory_space<vmem>>, vector<8x384xbf16>,
    %c0_21 = arith.constant 0 : index
    %c0_22 = arith.constant 0 : index
    %c128 = arith.constant 128 : index
    %22 = vector.load %arg1[%c0_21, %c0_22, %c128] : memref<1x8x640xf32, #tpu.memory_space<vmem>>, vector<1x8x384xf32>
    %23 = vector.shape_cast %22 : vector<1x8x384xf32> to vector<8x384xf32>
    %24 = arith.truncf %23 : vector<8x384xf32> to vector<8x384xbf16>
    %c32 = arith.constant 32 : index
    %c0_23 = arith.constant 0 : index
    %25 = vector.load %arg10[%c32, %c0_23] : memref<72x384xbf16, #tpu.memory_space<vmem>>, vector<8x384xbf16>
    tpu.vector_store %arg10[%c32, %c0_23], %24 {strides = array<i32>} : memref<72x384xbf16, #tpu.memory_space<vmem>>, vector<8x384xbf16>,
    %c0_24 = arith.constant 0 : index
    %c0_25 = arith.constant 0 : index
    %c129 = arith.constant 129 : index
    %26 = vector.load %arg1[%c0_24, %c0_25, %c129] : memref<1x8x640xf32, #tpu.memory_space<vmem>>, vector<1x8x384xf32>
    %27 = vector.shape_cast %26 : vector<1x8x384xf32> to vector<8x384xf32>
    %28 = arith.truncf %27 : vector<8x384xf32> to vector<8x384xbf16>
    %c40 = arith.constant 40 : index
    %c0_26 = arith.constant 0 : index
    %29 = vector.load %arg10[%c40, %c0_26] : memref<72x384xbf16, #tpu.memory_space<vmem>>, vector<8x384xbf16>
    tpu.vector_store %arg10[%c40, %c0_26], %28 {strides = array<i32>} : memref<72x384xbf16, #tpu.memory_space<vmem>>, vector<8x384xbf16>,
    %c0_27 = arith.constant 0 : index
    %c0_28 = arith.constant 0 : index
    %c145 = arith.constant 145 : index
    %30 = vector.load %arg1[%c0_27, %c0_28, %c145] : memref<1x8x640xf32, #tpu.memory_space<vmem>>, vector<1x8x384xf32>
    %31 = vector.shape_cast %30 : vector<1x8x384xf32> to vector<8x384xf32>
    %32 = arith.truncf %31 : vector<8x384xf32> to vector<8x384xbf16>
    %c48 = arith.constant 48 : index
    %c0_29 = arith.constant 0 : index
    %33 = vector.load %arg10[%c48, %c0_29] : memref<72x384xbf16, #tpu.memory_space<vmem>>, vector<8x384xbf16>
    tpu.vector_store %arg10[%c48, %c0_29], %32 {strides = array<i32>} : memref<72x384xbf16, #tpu.memory_space<vmem>>, vector<8x384xbf16>,
    %c0_30 = arith.constant 0 : index
    %c0_31 = arith.constant 0 : index
    %c146 = arith.constant 146 : index
    %34 = vector.load %arg1[%c0_30, %c0_31, %c146] : memref<1x8x640xf32, #tpu.memory_space<vmem>>, vector<1x8x384xf32>
    %35 = vector.shape_cast %34 : vector<1x8x384xf32> to vector<8x384xf32>
    %36 = arith.truncf %35 : vector<8x384xf32> to vector<8x384xbf16>
    %c56 = arith.constant 56 : index
    %c0_32 = arith.constant 0 : index
    %37 = vector.load %arg10[%c56, %c0_32] : memref<72x384xbf16, #tpu.memory_space<vmem>>, vector<8x384xbf16>
    tpu.vector_store %arg10[%c56, %c0_32], %36 {strides = array<i32>} : memref<72x384xbf16, #tpu.memory_space<vmem>>, vector<8x384xbf16>,
    %c0_33 = arith.constant 0 : index
    %c0_34 = arith.constant 0 : index
    %c147 = arith.constant 147 : index
    %38 = vector.load %arg1[%c0_33, %c0_34, %c147] : memref<1x8x640xf32, #tpu.memory_space<vmem>>, vector<1x8x384xf32>
    %39 = vector.shape_cast %38 : vector<1x8x384xf32> to vector<8x384xf32>
    %40 = arith.truncf %39 : vector<8x384xf32> to vector<8x384xbf16>
    %c64 = arith.constant 64 : index
    %c0_35 = arith.constant 0 : index
    %41 = vector.load %arg10[%c64, %c0_35] : memref<72x384xbf16, #tpu.memory_space<vmem>>, vector<8x384xbf16>
    tpu.vector_store %arg10[%c64, %c0_35], %40 {strides = array<i32>} : memref<72x384xbf16, #tpu.memory_space<vmem>>, vector<8x384xbf16>,
    %c0_36 = arith.constant 0 : index
    %c0_37 = arith.constant 0 : index
    %42 = vector.load %arg10[%c0_36, %c0_37] : memref<72x384xbf16, #tpu.memory_space<vmem>>, vector<72x384xbf16>
    %cst_38 = arith.constant dense<0.000000e+00> : vector<8x384xf32>
    %43 = tpu.matmul %3, %42, %cst_38 {dimension_numbers = #tpu.dot_dimension_numbers<[1], [0], [0], [1], [0, 0, 1, 1], [], []>} : vector<8x72xbf16>, vector<72x384xbf16>, vector<8x384xf32> -> vector<8x384xf32>
    %44 = vector.broadcast %5 : vector<8x1xf32> to vector<8x384xf32>
    %45 = arith.addf %43, %44 : vector<8x384xf32>
    %46 = vector.broadcast %0 : vector<1x384xf32> to vector<8x384xf32>
    %47 = arith.mulf %45, %46 : vector<8x384xf32>
    %cst_39 = arith.constant 0.000000e+00 : f32
    %48 = vector.broadcast %cst_39 : f32 to vector<8x384xf32>
    %49 = arith.maximumf %47, %48 : vector<8x384xf32>
    %c0_40 = arith.constant 0 : index
    %c128_41 = arith.constant 128 : index
    %50 = vector.load %arg9[%c0_40, %c128_41] : memref<8x640xf32, #tpu.memory_space<vmem>>, vector<8x384xf32>
    tpu.vector_store %arg9[%c0_40, %c128_41], %49 {strides = array<i32>} : memref<8x640xf32, #tpu.memory_space<vmem>>, vector<8x384xf32>,
    %c0_42 = arith.constant 0 : index
    %c0_43 = arith.constant 0 : index
    %c0_44 = arith.constant 0 : index
    %51 = vector.load %arg4[%c0_42, %c0_43, %c0_44] : memref<4x8x72xbf16, #tpu.memory_space<vmem>>, vector<1x8x72xbf16>
    %52 = vector.shape_cast %51 : vector<1x8x72xbf16> to vector<8x72xbf16>
    %c1 = arith.constant 1 : index
    %c0_45 = arith.constant 0 : index
    %c0_46 = arith.constant 0 : index
    %53 = vector.load %arg5[%c1, %c0_45, %c0_46] : memref<5x8x1xf32, #tpu.memory_space<vmem>>, vector<1x8x1xf32>
    %54 = vector.shape_cast %53 : vector<1x8x1xf32> to vector<8x1xf32>
    %c0_47 = arith.constant 0 : index
    %c109_48 = arith.constant 109 : index
    %55 = vector.load %arg9[%c0_47, %c109_48] : memref<8x640xf32, #tpu.memory_space<vmem>>, vector<8x384xf32>
    %56 = arith.truncf %55 : vector<8x384xf32> to vector<8x384xbf16>
    %c0_49 = arith.constant 0 : index
    %c0_50 = arith.constant 0 : index
    %57 = vector.load %arg10[%c0_49, %c0_50] : memref<72x384xbf16, #tpu.memory_space<vmem>>, vector<8x384xbf16>
    tpu.vector_store %arg10[%c0_49, %c0_50], %56 {strides = array<i32>} : memref<72x384xbf16, #tpu.memory_space<vmem>>, vector<8x384xbf16>,
    %c0_51 = arith.constant 0 : index
    %c110_52 = arith.constant 110 : index
    %58 = vector.load %arg9[%c0_51, %c110_52] : memref<8x640xf32, #tpu.memory_space<vmem>>, vector<8x384xf32>
    %59 = arith.truncf %58 : vector<8x384xf32> to vector<8x384xbf16>
    %c8_53 = arith.constant 8 : index
    %c0_54 = arith.constant 0 : index
    %60 = vector.load %arg10[%c8_53, %c0_54] : memref<72x384xbf16, #tpu.memory_space<vmem>>, vector<8x384xbf16>
    tpu.vector_store %arg10[%c8_53, %c0_54], %59 {strides = array<i32>} : memref<72x384xbf16, #tpu.memory_space<vmem>>, vector<8x384xbf16>,
    %c0_55 = arith.constant 0 : index
    %c111_56 = arith.constant 111 : index
    %61 = vector.load %arg9[%c0_55, %c111_56] : memref<8x640xf32, #tpu.memory_space<vmem>>, vector<8x384xf32>
    %62 = arith.truncf %61 : vector<8x384xf32> to vector<8x384xbf16>
    %c16_57 = arith.constant 16 : index
    %c0_58 = arith.constant 0 : index
    %63 = vector.load %arg10[%c16_57, %c0_58] : memref<72x384xbf16, #tpu.memory_space<vmem>>, vector<8x384xbf16>
    tpu.vector_store %arg10[%c16_57, %c0_58], %62 {strides = array<i32>} : memref<72x384xbf16, #tpu.memory_space<vmem>>, vector<8x384xbf16>,
    %c0_59 = arith.constant 0 : index
    %c127_60 = arith.constant 127 : index
    %64 = vector.load %arg9[%c0_59, %c127_60] : memref<8x640xf32, #tpu.memory_space<vmem>>, vector<8x384xf32>
    %65 = arith.truncf %64 : vector<8x384xf32> to vector<8x384xbf16>
    %c24_61 = arith.constant 24 : index
    %c0_62 = arith.constant 0 : index
    %66 = vector.load %arg10[%c24_61, %c0_62] : memref<72x384xbf16, #tpu.memory_space<vmem>>, vector<8x384xbf16>
    tpu.vector_store %arg10[%c24_61, %c0_62], %65 {strides = array<i32>} : memref<72x384xbf16, #tpu.memory_space<vmem>>, vector<8x384xbf16>,
    %c0_63 = arith.constant 0 : index
    %c128_64 = arith.constant 128 : index
    %67 = vector.load %arg9[%c0_63, %c128_64] : memref<8x640xf32, #tpu.memory_space<vmem>>, vector<8x384xf32>
    %68 = arith.truncf %67 : vector<8x384xf32> to vector<8x384xbf16>
    %c32_65 = arith.constant 32 : index
    %c0_66 = arith.constant 0 : index
    %69 = vector.load %arg10[%c32_65, %c0_66] : memref<72x384xbf16, #tpu.memory_space<vmem>>, vector<8x384xbf16>
    tpu.vector_store %arg10[%c32_65, %c0_66], %68 {strides = array<i32>} : memref<72x384xbf16, #tpu.memory_space<vmem>>, vector<8x384xbf16>,
    %c0_67 = arith.constant 0 : index
    %c129_68 = arith.constant 129 : index
    %70 = vector.load %arg9[%c0_67, %c129_68] : memref<8x640xf32, #tpu.memory_space<vmem>>, vector<8x384xf32>
    %71 = arith.truncf %70 : vector<8x384xf32> to vector<8x384xbf16>
    %c40_69 = arith.constant 40 : index
    %c0_70 = arith.constant 0 : index
    %72 = vector.load %arg10[%c40_69, %c0_70] : memref<72x384xbf16, #tpu.memory_space<vmem>>, vector<8x384xbf16>
    tpu.vector_store %arg10[%c40_69, %c0_70], %71 {strides = array<i32>} : memref<72x384xbf16, #tpu.memory_space<vmem>>, vector<8x384xbf16>,
    %c0_71 = arith.constant 0 : index
    %c145_72 = arith.constant 145 : index
    %73 = vector.load %arg9[%c0_71, %c145_72] : memref<8x640xf32, #tpu.memory_space<vmem>>, vector<8x384xf32>
    %74 = arith.truncf %73 : vector<8x384xf32> to vector<8x384xbf16>
    %c48_73 = arith.constant 48 : index
    %c0_74 = arith.constant 0 : index
    %75 = vector.load %arg10[%c48_73, %c0_74] : memref<72x384xbf16, #tpu.memory_space<vmem>>, vector<8x384xbf16>
    tpu.vector_store %arg10[%c48_73, %c0_74], %74 {strides = array<i32>} : memref<72x384xbf16, #tpu.memory_space<vmem>>, vector<8x384xbf16>,
    %c0_75 = arith.constant 0 : index
    %c146_76 = arith.constant 146 : index
    %76 = vector.load %arg9[%c0_75, %c146_76] : memref<8x640xf32, #tpu.memory_space<vmem>>, vector<8x384xf32>
    %77 = arith.truncf %76 : vector<8x384xf32> to vector<8x384xbf16>
    %c56_77 = arith.constant 56 : index
    %c0_78 = arith.constant 0 : index
    %78 = vector.load %arg10[%c56_77, %c0_78] : memref<72x384xbf16, #tpu.memory_space<vmem>>, vector<8x384xbf16>
    tpu.vector_store %arg10[%c56_77, %c0_78], %77 {strides = array<i32>} : memref<72x384xbf16, #tpu.memory_space<vmem>>, vector<8x384xbf16>,
    %c0_79 = arith.constant 0 : index
    %c147_80 = arith.constant 147 : index
    %79 = vector.load %arg9[%c0_79, %c147_80] : memref<8x640xf32, #tpu.memory_space<vmem>>, vector<8x384xf32>
    %80 = arith.truncf %79 : vector<8x384xf32> to vector<8x384xbf16>
    %c64_81 = arith.constant 64 : index
    %c0_82 = arith.constant 0 : index
    %81 = vector.load %arg10[%c64_81, %c0_82] : memref<72x384xbf16, #tpu.memory_space<vmem>>, vector<8x384xbf16>
    tpu.vector_store %arg10[%c64_81, %c0_82], %80 {strides = array<i32>} : memref<72x384xbf16, #tpu.memory_space<vmem>>, vector<8x384xbf16>,
    %c0_83 = arith.constant 0 : index
    %c0_84 = arith.constant 0 : index
    %82 = vector.load %arg10[%c0_83, %c0_84] : memref<72x384xbf16, #tpu.memory_space<vmem>>, vector<72x384xbf16>
    %cst_85 = arith.constant dense<0.000000e+00> : vector<8x384xf32>
    %83 = tpu.matmul %52, %82, %cst_85 {dimension_numbers = #tpu.dot_dimension_numbers<[1], [0], [0], [1], [0, 0, 1, 1], [], []>} : vector<8x72xbf16>, vector<72x384xbf16>, vector<8x384xf32> -> vector<8x384xf32>
    %84 = vector.broadcast %54 : vector<8x1xf32> to vector<8x384xf32>
    %85 = arith.addf %83, %84 : vector<8x384xf32>
    %86 = vector.broadcast %0 : vector<1x384xf32> to vector<8x384xf32>
    %87 = arith.mulf %85, %86 : vector<8x384xf32>
    %cst_86 = arith.constant 0.000000e+00 : f32
    %88 = vector.broadcast %cst_86 : f32 to vector<8x384xf32>
    %89 = arith.maximumf %87, %88 : vector<8x384xf32>
    %c0_87 = arith.constant 0 : index
    %c128_88 = arith.constant 128 : index
    %90 = vector.load %arg9[%c0_87, %c128_88] : memref<8x640xf32, #tpu.memory_space<vmem>>, vector<8x384xf32>
    tpu.vector_store %arg9[%c0_87, %c128_88], %89 {strides = array<i32>} : memref<8x640xf32, #tpu.memory_space<vmem>>, vector<8x384xf32>,
    %c1_89 = arith.constant 1 : index
    %c0_90 = arith.constant 0 : index
    %c0_91 = arith.constant 0 : index
    %91 = vector.load %arg4[%c1_89, %c0_90, %c0_91] : memref<4x8x72xbf16, #tpu.memory_space<vmem>>, vector<1x8x72xbf16>
    %92 = vector.shape_cast %91 : vector<1x8x72xbf16> to vector<8x72xbf16>
    %c2 = arith.constant 2 : index
    %c0_92 = arith.constant 0 : index
    %c0_93 = arith.constant 0 : index
    %93 = vector.load %arg5[%c2, %c0_92, %c0_93] : memref<5x8x1xf32, #tpu.memory_space<vmem>>, vector<1x8x1xf32>
    %94 = vector.shape_cast %93 : vector<1x8x1xf32> to vector<8x1xf32>
    %c0_94 = arith.constant 0 : index
    %c109_95 = arith.constant 109 : index
    %95 = vector.load %arg9[%c0_94, %c109_95] : memref<8x640xf32, #tpu.memory_space<vmem>>, vector<8x384xf32>
    %96 = arith.truncf %95 : vector<8x384xf32> to vector<8x384xbf16>
    %c0_96 = arith.constant 0 : index
    %c0_97 = arith.constant 0 : index
    %97 = vector.load %arg10[%c0_96, %c0_97] : memref<72x384xbf16, #tpu.memory_space<vmem>>, vector<8x384xbf16>
    tpu.vector_store %arg10[%c0_96, %c0_97], %96 {strides = array<i32>} : memref<72x384xbf16, #tpu.memory_space<vmem>>, vector<8x384xbf16>,
    %c0_98 = arith.constant 0 : index
    %c110_99 = arith.constant 110 : index
    %98 = vector.load %arg9[%c0_98, %c110_99] : memref<8x640xf32, #tpu.memory_space<vmem>>, vector<8x384xf32>
    %99 = arith.truncf %98 : vector<8x384xf32> to vector<8x384xbf16>
    %c8_100 = arith.constant 8 : index
    %c0_101 = arith.constant 0 : index
    %100 = vector.load %arg10[%c8_100, %c0_101] : memref<72x384xbf16, #tpu.memory_space<vmem>>, vector<8x384xbf16>
    tpu.vector_store %arg10[%c8_100, %c0_101], %99 {strides = array<i32>} : memref<72x384xbf16, #tpu.memory_space<vmem>>, vector<8x384xbf16>,
    %c0_102 = arith.constant 0 : index
    %c111_103 = arith.constant 111 : index
    %101 = vector.load %arg9[%c0_102, %c111_103] : memref<8x640xf32, #tpu.memory_space<vmem>>, vector<8x384xf32>
    %102 = arith.truncf %101 : vector<8x384xf32> to vector<8x384xbf16>
    %c16_104 = arith.constant 16 : index
    %c0_105 = arith.constant 0 : index
    %103 = vector.load %arg10[%c16_104, %c0_105] : memref<72x384xbf16, #tpu.memory_space<vmem>>, vector<8x384xbf16>
    tpu.vector_store %arg10[%c16_104, %c0_105], %102 {strides = array<i32>} : memref<72x384xbf16, #tpu.memory_space<vmem>>, vector<8x384xbf16>,
    %c0_106 = arith.constant 0 : index
    %c127_107 = arith.constant 127 : index
    %104 = vector.load %arg9[%c0_106, %c127_107] : memref<8x640xf32, #tpu.memory_space<vmem>>, vector<8x384xf32>
    %105 = arith.truncf %104 : vector<8x384xf32> to vector<8x384xbf16>
    %c24_108 = arith.constant 24 : index
    %c0_109 = arith.constant 0 : index
    %106 = vector.load %arg10[%c24_108, %c0_109] : memref<72x384xbf16, #tpu.memory_space<vmem>>, vector<8x384xbf16>
    tpu.vector_store %arg10[%c24_108, %c0_109], %105 {strides = array<i32>} : memref<72x384xbf16, #tpu.memory_space<vmem>>, vector<8x384xbf16>,
    %c0_110 = arith.constant 0 : index
    %c128_111 = arith.constant 128 : index
    %107 = vector.load %arg9[%c0_110, %c128_111] : memref<8x640xf32, #tpu.memory_space<vmem>>, vector<8x384xf32>
    %108 = arith.truncf %107 : vector<8x384xf32> to vector<8x384xbf16>
    %c32_112 = arith.constant 32 : index
    %c0_113 = arith.constant 0 : index
    %109 = vector.load %arg10[%c32_112, %c0_113] : memref<72x384xbf16, #tpu.memory_space<vmem>>, vector<8x384xbf16>
    tpu.vector_store %arg10[%c32_112, %c0_113], %108 {strides = array<i32>} : memref<72x384xbf16, #tpu.memory_space<vmem>>, vector<8x384xbf16>,
    %c0_114 = arith.constant 0 : index
    %c129_115 = arith.constant 129 : index
    %110 = vector.load %arg9[%c0_114, %c129_115] : memref<8x640xf32, #tpu.memory_space<vmem>>, vector<8x384xf32>
    %111 = arith.truncf %110 : vector<8x384xf32> to vector<8x384xbf16>
    %c40_116 = arith.constant 40 : index
    %c0_117 = arith.constant 0 : index
    %112 = vector.load %arg10[%c40_116, %c0_117] : memref<72x384xbf16, #tpu.memory_space<vmem>>, vector<8x384xbf16>
    tpu.vector_store %arg10[%c40_116, %c0_117], %111 {strides = array<i32>} : memref<72x384xbf16, #tpu.memory_space<vmem>>, vector<8x384xbf16>,
    %c0_118 = arith.constant 0 : index
    %c145_119 = arith.constant 145 : index
    %113 = vector.load %arg9[%c0_118, %c145_119] : memref<8x640xf32, #tpu.memory_space<vmem>>, vector<8x384xf32>
    %114 = arith.truncf %113 : vector<8x384xf32> to vector<8x384xbf16>
    %c48_120 = arith.constant 48 : index
    %c0_121 = arith.constant 0 : index
    %115 = vector.load %arg10[%c48_120, %c0_121] : memref<72x384xbf16, #tpu.memory_space<vmem>>, vector<8x384xbf16>
    tpu.vector_store %arg10[%c48_120, %c0_121], %114 {strides = array<i32>} : memref<72x384xbf16, #tpu.memory_space<vmem>>, vector<8x384xbf16>,
    %c0_122 = arith.constant 0 : index
    %c146_123 = arith.constant 146 : index
    %116 = vector.load %arg9[%c0_122, %c146_123] : memref<8x640xf32, #tpu.memory_space<vmem>>, vector<8x384xf32>
    %117 = arith.truncf %116 : vector<8x384xf32> to vector<8x384xbf16>
    %c56_124 = arith.constant 56 : index
    %c0_125 = arith.constant 0 : index
    %118 = vector.load %arg10[%c56_124, %c0_125] : memref<72x384xbf16, #tpu.memory_space<vmem>>, vector<8x384xbf16>
    tpu.vector_store %arg10[%c56_124, %c0_125], %117 {strides = array<i32>} : memref<72x384xbf16, #tpu.memory_space<vmem>>, vector<8x384xbf16>,
    %c0_126 = arith.constant 0 : index
    %c147_127 = arith.constant 147 : index
    %119 = vector.load %arg9[%c0_126, %c147_127] : memref<8x640xf32, #tpu.memory_space<vmem>>, vector<8x384xf32>
    %120 = arith.truncf %119 : vector<8x384xf32> to vector<8x384xbf16>
    %c64_128 = arith.constant 64 : index
    %c0_129 = arith.constant 0 : index
    %121 = vector.load %arg10[%c64_128, %c0_129] : memref<72x384xbf16, #tpu.memory_space<vmem>>, vector<8x384xbf16>
    tpu.vector_store %arg10[%c64_128, %c0_129], %120 {strides = array<i32>} : memref<72x384xbf16, #tpu.memory_space<vmem>>, vector<8x384xbf16>,
    %c0_130 = arith.constant 0 : index
    %c0_131 = arith.constant 0 : index
    %122 = vector.load %arg10[%c0_130, %c0_131] : memref<72x384xbf16, #tpu.memory_space<vmem>>, vector<72x384xbf16>
    %cst_132 = arith.constant dense<0.000000e+00> : vector<8x384xf32>
    %123 = tpu.matmul %92, %122, %cst_132 {dimension_numbers = #tpu.dot_dimension_numbers<[1], [0], [0], [1], [0, 0, 1, 1], [], []>} : vector<8x72xbf16>, vector<72x384xbf16>, vector<8x384xf32> -> vector<8x384xf32>
    %124 = vector.broadcast %94 : vector<8x1xf32> to vector<8x384xf32>
    %125 = arith.addf %123, %124 : vector<8x384xf32>
    %c0_133 = arith.constant 0 : index
    %c0_134 = arith.constant 0 : index
    %c0_135 = arith.constant 0 : index
    %126 = vector.load %arg2[%c0_133, %c0_134, %c0_135] : memref<1x8x64xbf16, #tpu.memory_space<vmem>>, vector<1x8x64xbf16>
    %127 = vector.shape_cast %126 : vector<1x8x64xbf16> to vector<8x64xbf16>
    %c0_136 = arith.constant 0 : index
    %c0_137 = arith.constant 0 : index
    %128 = vector.load %arg6[%c0_136, %c0_137] : memref<64x384xbf16, #tpu.memory_space<vmem>>, vector<64x384xbf16>
    %cst_138 = arith.constant dense<0.000000e+00> : vector<8x384xf32>
    %129 = tpu.matmul %127, %128, %cst_138 {dimension_numbers = #tpu.dot_dimension_numbers<[1], [0], [0], [1], [0, 0, 1, 1], [], []>} : vector<8x64xbf16>, vector<64x384xbf16>, vector<8x384xf32> -> vector<8x384xf32>
    %130 = arith.addf %47, %125 : vector<8x384xf32>
    %131 = arith.addf %130, %129 : vector<8x384xf32>
    %132 = vector.broadcast %0 : vector<1x384xf32> to vector<8x384xf32>
    %133 = arith.mulf %131, %132 : vector<8x384xf32>
    %cst_139 = arith.constant 0.000000e+00 : f32
    %134 = vector.broadcast %cst_139 : f32 to vector<8x384xf32>
    %135 = arith.maximumf %133, %134 : vector<8x384xf32>
    %c0_140 = arith.constant 0 : index
    %c128_141 = arith.constant 128 : index
    %136 = vector.load %arg9[%c0_140, %c128_141] : memref<8x640xf32, #tpu.memory_space<vmem>>, vector<8x384xf32>
    tpu.vector_store %arg9[%c0_140, %c128_141], %135 {strides = array<i32>} : memref<8x640xf32, #tpu.memory_space<vmem>>, vector<8x384xf32>,
    %c2_142 = arith.constant 2 : index
    %c0_143 = arith.constant 0 : index
    %c0_144 = arith.constant 0 : index
    %137 = vector.load %arg4[%c2_142, %c0_143, %c0_144] : memref<4x8x72xbf16, #tpu.memory_space<vmem>>, vector<1x8x72xbf16>
    %138 = vector.shape_cast %137 : vector<1x8x72xbf16> to vector<8x72xbf16>
    %c3 = arith.constant 3 : index
    %c0_145 = arith.constant 0 : index
    %c0_146 = arith.constant 0 : index
    %139 = vector.load %arg5[%c3, %c0_145, %c0_146] : memref<5x8x1xf32, #tpu.memory_space<vmem>>, vector<1x8x1xf32>
    %140 = vector.shape_cast %139 : vector<1x8x1xf32> to vector<8x1xf32>
    %c0_147 = arith.constant 0 : index
    %c109_148 = arith.constant 109 : index
    %141 = vector.load %arg9[%c0_147, %c109_148] : memref<8x640xf32, #tpu.memory_space<vmem>>, vector<8x384xf32>
    %142 = arith.truncf %141 : vector<8x384xf32> to vector<8x384xbf16>
    %c0_149 = arith.constant 0 : index
    %c0_150 = arith.constant 0 : index
    %143 = vector.load %arg10[%c0_149, %c0_150] : memref<72x384xbf16, #tpu.memory_space<vmem>>, vector<8x384xbf16>
    tpu.vector_store %arg10[%c0_149, %c0_150], %142 {strides = array<i32>} : memref<72x384xbf16, #tpu.memory_space<vmem>>, vector<8x384xbf16>,
    %c0_151 = arith.constant 0 : index
    %c110_152 = arith.constant 110 : index
    %144 = vector.load %arg9[%c0_151, %c110_152] : memref<8x640xf32, #tpu.memory_space<vmem>>, vector<8x384xf32>
    %145 = arith.truncf %144 : vector<8x384xf32> to vector<8x384xbf16>
    %c8_153 = arith.constant 8 : index
    %c0_154 = arith.constant 0 : index
    %146 = vector.load %arg10[%c8_153, %c0_154] : memref<72x384xbf16, #tpu.memory_space<vmem>>, vector<8x384xbf16>
    tpu.vector_store %arg10[%c8_153, %c0_154], %145 {strides = array<i32>} : memref<72x384xbf16, #tpu.memory_space<vmem>>, vector<8x384xbf16>,
    %c0_155 = arith.constant 0 : index
    %c111_156 = arith.constant 111 : index
    %147 = vector.load %arg9[%c0_155, %c111_156] : memref<8x640xf32, #tpu.memory_space<vmem>>, vector<8x384xf32>
    %148 = arith.truncf %147 : vector<8x384xf32> to vector<8x384xbf16>
    %c16_157 = arith.constant 16 : index
    %c0_158 = arith.constant 0 : index
    %149 = vector.load %arg10[%c16_157, %c0_158] : memref<72x384xbf16, #tpu.memory_space<vmem>>, vector<8x384xbf16>
    tpu.vector_store %arg10[%c16_157, %c0_158], %148 {strides = array<i32>} : memref<72x384xbf16, #tpu.memory_space<vmem>>, vector<8x384xbf16>,
    %c0_159 = arith.constant 0 : index
    %c127_160 = arith.constant 127 : index
    %150 = vector.load %arg9[%c0_159, %c127_160] : memref<8x640xf32, #tpu.memory_space<vmem>>, vector<8x384xf32>
    %151 = arith.truncf %150 : vector<8x384xf32> to vector<8x384xbf16>
    %c24_161 = arith.constant 24 : index
    %c0_162 = arith.constant 0 : index
    %152 = vector.load %arg10[%c24_161, %c0_162] : memref<72x384xbf16, #tpu.memory_space<vmem>>, vector<8x384xbf16>
    tpu.vector_store %arg10[%c24_161, %c0_162], %151 {strides = array<i32>} : memref<72x384xbf16, #tpu.memory_space<vmem>>, vector<8x384xbf16>,
    %c0_163 = arith.constant 0 : index
    %c128_164 = arith.constant 128 : index
    %153 = vector.load %arg9[%c0_163, %c128_164] : memref<8x640xf32, #tpu.memory_space<vmem>>, vector<8x384xf32>
    %154 = arith.truncf %153 : vector<8x384xf32> to vector<8x384xbf16>
    %c32_165 = arith.constant 32 : index
    %c0_166 = arith.constant 0 : index
    %155 = vector.load %arg10[%c32_165, %c0_166] : memref<72x384xbf16, #tpu.memory_space<vmem>>, vector<8x384xbf16>
    tpu.vector_store %arg10[%c32_165, %c0_166], %154 {strides = array<i32>} : memref<72x384xbf16, #tpu.memory_space<vmem>>, vector<8x384xbf16>,
    %c0_167 = arith.constant 0 : index
    %c129_168 = arith.constant 129 : index
    %156 = vector.load %arg9[%c0_167, %c129_168] : memref<8x640xf32, #tpu.memory_space<vmem>>, vector<8x384xf32>
    %157 = arith.truncf %156 : vector<8x384xf32> to vector<8x384xbf16>
    %c40_169 = arith.constant 40 : index
    %c0_170 = arith.constant 0 : index
    %158 = vector.load %arg10[%c40_169, %c0_170] : memref<72x384xbf16, #tpu.memory_space<vmem>>, vector<8x384xbf16>
    tpu.vector_store %arg10[%c40_169, %c0_170], %157 {strides = array<i32>} : memref<72x384xbf16, #tpu.memory_space<vmem>>, vector<8x384xbf16>,
    %c0_171 = arith.constant 0 : index
    %c145_172 = arith.constant 145 : index
    %159 = vector.load %arg9[%c0_171, %c145_172] : memref<8x640xf32, #tpu.memory_space<vmem>>, vector<8x384xf32>
    %160 = arith.truncf %159 : vector<8x384xf32> to vector<8x384xbf16>
    %c48_173 = arith.constant 48 : index
    %c0_174 = arith.constant 0 : index
    %161 = vector.load %arg10[%c48_173, %c0_174] : memref<72x384xbf16, #tpu.memory_space<vmem>>, vector<8x384xbf16>
    tpu.vector_store %arg10[%c48_173, %c0_174], %160 {strides = array<i32>} : memref<72x384xbf16, #tpu.memory_space<vmem>>, vector<8x384xbf16>,
    %c0_175 = arith.constant 0 : index
    %c146_176 = arith.constant 146 : index
    %162 = vector.load %arg9[%c0_175, %c146_176] : memref<8x640xf32, #tpu.memory_space<vmem>>, vector<8x384xf32>
    %163 = arith.truncf %162 : vector<8x384xf32> to vector<8x384xbf16>
    %c56_177 = arith.constant 56 : index
    %c0_178 = arith.constant 0 : index
    %164 = vector.load %arg10[%c56_177, %c0_178] : memref<72x384xbf16, #tpu.memory_space<vmem>>, vector<8x384xbf16>
    tpu.vector_store %arg10[%c56_177, %c0_178], %163 {strides = array<i32>} : memref<72x384xbf16, #tpu.memory_space<vmem>>, vector<8x384xbf16>,
    %c0_179 = arith.constant 0 : index
    %c147_180 = arith.constant 147 : index
    %165 = vector.load %arg9[%c0_179, %c147_180] : memref<8x640xf32, #tpu.memory_space<vmem>>, vector<8x384xf32>
    %166 = arith.truncf %165 : vector<8x384xf32> to vector<8x384xbf16>
    %c64_181 = arith.constant 64 : index
    %c0_182 = arith.constant 0 : index
    %167 = vector.load %arg10[%c64_181, %c0_182] : memref<72x384xbf16, #tpu.memory_space<vmem>>, vector<8x384xbf16>
    tpu.vector_store %arg10[%c64_181, %c0_182], %166 {strides = array<i32>} : memref<72x384xbf16, #tpu.memory_space<vmem>>, vector<8x384xbf16>,
    %c0_183 = arith.constant 0 : index
    %c0_184 = arith.constant 0 : index
    %168 = vector.load %arg10[%c0_183, %c0_184] : memref<72x384xbf16, #tpu.memory_space<vmem>>, vector<72x384xbf16>
    %cst_185 = arith.constant dense<0.000000e+00> : vector<8x384xf32>
    %169 = tpu.matmul %138, %168, %cst_185 {dimension_numbers = #tpu.dot_dimension_numbers<[1], [0], [0], [1], [0, 0, 1, 1], [], []>} : vector<8x72xbf16>, vector<72x384xbf16>, vector<8x384xf32> -> vector<8x384xf32>
    %170 = vector.broadcast %140 : vector<8x1xf32> to vector<8x384xf32>
    %171 = arith.addf %169, %170 : vector<8x384xf32>
    %172 = vector.broadcast %0 : vector<1x384xf32> to vector<8x384xf32>
    %173 = arith.mulf %171, %172 : vector<8x384xf32>
    %cst_186 = arith.constant 0.000000e+00 : f32
    %174 = vector.broadcast %cst_186 : f32 to vector<8x384xf32>
    %175 = arith.maximumf %173, %174 : vector<8x384xf32>
    %c0_187 = arith.constant 0 : index
    %c128_188 = arith.constant 128 : index
    %176 = vector.load %arg9[%c0_187, %c128_188] : memref<8x640xf32, #tpu.memory_space<vmem>>, vector<8x384xf32>
    tpu.vector_store %arg9[%c0_187, %c128_188], %175 {strides = array<i32>} : memref<8x640xf32, #tpu.memory_space<vmem>>, vector<8x384xf32>,
    %c3_189 = arith.constant 3 : index
    %c0_190 = arith.constant 0 : index
    %c0_191 = arith.constant 0 : index
    %177 = vector.load %arg4[%c3_189, %c0_190, %c0_191] : memref<4x8x72xbf16, #tpu.memory_space<vmem>>, vector<1x8x72xbf16>
    %178 = vector.shape_cast %177 : vector<1x8x72xbf16> to vector<8x72xbf16>
    %c4 = arith.constant 4 : index
    %c0_192 = arith.constant 0 : index
    %c0_193 = arith.constant 0 : index
    %179 = vector.load %arg5[%c4, %c0_192, %c0_193] : memref<5x8x1xf32, #tpu.memory_space<vmem>>, vector<1x8x1xf32>
    %180 = vector.shape_cast %179 : vector<1x8x1xf32> to vector<8x1xf32>
    %c0_194 = arith.constant 0 : index
    %c109_195 = arith.constant 109 : index
    %181 = vector.load %arg9[%c0_194, %c109_195] : memref<8x640xf32, #tpu.memory_space<vmem>>, vector<8x384xf32>
    %182 = arith.truncf %181 : vector<8x384xf32> to vector<8x384xbf16>
    %c0_196 = arith.constant 0 : index
    %c0_197 = arith.constant 0 : index
    %183 = vector.load %arg10[%c0_196, %c0_197] : memref<72x384xbf16, #tpu.memory_space<vmem>>, vector<8x384xbf16>
    tpu.vector_store %arg10[%c0_196, %c0_197], %182 {strides = array<i32>} : memref<72x384xbf16, #tpu.memory_space<vmem>>, vector<8x384xbf16>,
    %c0_198 = arith.constant 0 : index
    %c110_199 = arith.constant 110 : index
    %184 = vector.load %arg9[%c0_198, %c110_199] : memref<8x640xf32, #tpu.memory_space<vmem>>, vector<8x384xf32>
    %185 = arith.truncf %184 : vector<8x384xf32> to vector<8x384xbf16>
    %c8_200 = arith.constant 8 : index
    %c0_201 = arith.constant 0 : index
    %186 = vector.load %arg10[%c8_200, %c0_201] : memref<72x384xbf16, #tpu.memory_space<vmem>>, vector<8x384xbf16>
    tpu.vector_store %arg10[%c8_200, %c0_201], %185 {strides = array<i32>} : memref<72x384xbf16, #tpu.memory_space<vmem>>, vector<8x384xbf16>,
    %c0_202 = arith.constant 0 : index
    %c111_203 = arith.constant 111 : index
    %187 = vector.load %arg9[%c0_202, %c111_203] : memref<8x640xf32, #tpu.memory_space<vmem>>, vector<8x384xf32>
    %188 = arith.truncf %187 : vector<8x384xf32> to vector<8x384xbf16>
    %c16_204 = arith.constant 16 : index
    %c0_205 = arith.constant 0 : index
    %189 = vector.load %arg10[%c16_204, %c0_205] : memref<72x384xbf16, #tpu.memory_space<vmem>>, vector<8x384xbf16>
    tpu.vector_store %arg10[%c16_204, %c0_205], %188 {strides = array<i32>} : memref<72x384xbf16, #tpu.memory_space<vmem>>, vector<8x384xbf16>,
    %c0_206 = arith.constant 0 : index
    %c127_207 = arith.constant 127 : index
    %190 = vector.load %arg9[%c0_206, %c127_207] : memref<8x640xf32, #tpu.memory_space<vmem>>, vector<8x384xf32>
    %191 = arith.truncf %190 : vector<8x384xf32> to vector<8x384xbf16>
    %c24_208 = arith.constant 24 : index
    %c0_209 = arith.constant 0 : index
    %192 = vector.load %arg10[%c24_208, %c0_209] : memref<72x384xbf16, #tpu.memory_space<vmem>>, vector<8x384xbf16>
    tpu.vector_store %arg10[%c24_208, %c0_209], %191 {strides = array<i32>} : memref<72x384xbf16, #tpu.memory_space<vmem>>, vector<8x384xbf16>,
    %c0_210 = arith.constant 0 : index
    %c128_211 = arith.constant 128 : index
    %193 = vector.load %arg9[%c0_210, %c128_211] : memref<8x640xf32, #tpu.memory_space<vmem>>, vector<8x384xf32>
    %194 = arith.truncf %193 : vector<8x384xf32> to vector<8x384xbf16>
    %c32_212 = arith.constant 32 : index
    %c0_213 = arith.constant 0 : index
    %195 = vector.load %arg10[%c32_212, %c0_213] : memref<72x384xbf16, #tpu.memory_space<vmem>>, vector<8x384xbf16>
    tpu.vector_store %arg10[%c32_212, %c0_213], %194 {strides = array<i32>} : memref<72x384xbf16, #tpu.memory_space<vmem>>, vector<8x384xbf16>,
    %c0_214 = arith.constant 0 : index
    %c129_215 = arith.constant 129 : index
    %196 = vector.load %arg9[%c0_214, %c129_215] : memref<8x640xf32, #tpu.memory_space<vmem>>, vector<8x384xf32>
    %197 = arith.truncf %196 : vector<8x384xf32> to vector<8x384xbf16>
    %c40_216 = arith.constant 40 : index
    %c0_217 = arith.constant 0 : index
    %198 = vector.load %arg10[%c40_216, %c0_217] : memref<72x384xbf16, #tpu.memory_space<vmem>>, vector<8x384xbf16>
    tpu.vector_store %arg10[%c40_216, %c0_217], %197 {strides = array<i32>} : memref<72x384xbf16, #tpu.memory_space<vmem>>, vector<8x384xbf16>,
    %c0_218 = arith.constant 0 : index
    %c145_219 = arith.constant 145 : index
    %199 = vector.load %arg9[%c0_218, %c145_219] : memref<8x640xf32, #tpu.memory_space<vmem>>, vector<8x384xf32>
    %200 = arith.truncf %199 : vector<8x384xf32> to vector<8x384xbf16>
    %c48_220 = arith.constant 48 : index
    %c0_221 = arith.constant 0 : index
    %201 = vector.load %arg10[%c48_220, %c0_221] : memref<72x384xbf16, #tpu.memory_space<vmem>>, vector<8x384xbf16>
    tpu.vector_store %arg10[%c48_220, %c0_221], %200 {strides = array<i32>} : memref<72x384xbf16, #tpu.memory_space<vmem>>, vector<8x384xbf16>,
    %c0_222 = arith.constant 0 : index
    %c146_223 = arith.constant 146 : index
    %202 = vector.load %arg9[%c0_222, %c146_223] : memref<8x640xf32, #tpu.memory_space<vmem>>, vector<8x384xf32>
    %203 = arith.truncf %202 : vector<8x384xf32> to vector<8x384xbf16>
    %c56_224 = arith.constant 56 : index
    %c0_225 = arith.constant 0 : index
    %204 = vector.load %arg10[%c56_224, %c0_225] : memref<72x384xbf16, #tpu.memory_space<vmem>>, vector<8x384xbf16>
    tpu.vector_store %arg10[%c56_224, %c0_225], %203 {strides = array<i32>} : memref<72x384xbf16, #tpu.memory_space<vmem>>, vector<8x384xbf16>,
    %c0_226 = arith.constant 0 : index
    %c147_227 = arith.constant 147 : index
    %205 = vector.load %arg9[%c0_226, %c147_227] : memref<8x640xf32, #tpu.memory_space<vmem>>, vector<8x384xf32>
    %206 = arith.truncf %205 : vector<8x384xf32> to vector<8x384xbf16>
    %c64_228 = arith.constant 64 : index
    %c0_229 = arith.constant 0 : index
    %207 = vector.load %arg10[%c64_228, %c0_229] : memref<72x384xbf16, #tpu.memory_space<vmem>>, vector<8x384xbf16>
    tpu.vector_store %arg10[%c64_228, %c0_229], %206 {strides = array<i32>} : memref<72x384xbf16, #tpu.memory_space<vmem>>, vector<8x384xbf16>,
    %c0_230 = arith.constant 0 : index
    %c0_231 = arith.constant 0 : index
    %208 = vector.load %arg10[%c0_230, %c0_231] : memref<72x384xbf16, #tpu.memory_space<vmem>>, vector<72x384xbf16>
    %cst_232 = arith.constant dense<0.000000e+00> : vector<8x384xf32>
    %209 = tpu.matmul %178, %208, %cst_232 {dimension_numbers = #tpu.dot_dimension_numbers<[1], [0], [0], [1], [0, 0, 1, 1], [], []>} : vector<8x72xbf16>, vector<72x384xbf16>, vector<8x384xf32> -> vector<8x384xf32>
    %210 = vector.broadcast %180 : vector<8x1xf32> to vector<8x384xf32>
    %211 = arith.addf %209, %210 : vector<8x384xf32>
    %212 = arith.addf %133, %211 : vector<8x384xf32>
    %c0_233 = arith.constant 0 : index
    %c0_234 = arith.constant 0 : index
    %c0_235 = arith.constant 0 : index
    %213 = vector.load %arg8[%c0_233, %c0_234, %c0_235] : memref<1x8x384xf32, #tpu.memory_space<vmem>>, vector<1x8x384xf32>
    %214 = vector.shape_cast %213 : vector<1x8x384xf32> to vector<8x384xf32>
    %215 = vector.shape_cast %212 : vector<8x384xf32> to vector<1x8x384xf32>
    tpu.vector_store %arg8[%c0_233, %c0_234, %c0_235], %215 {strides = array<i32>} : memref<1x8x384xf32, #tpu.memory_space<vmem>>, vector<1x8x384xf32>,
    return
  }
  func.func @transform_0(%arg0: i32) -> (i32, i32, i32) {
    %c0_i32 = arith.constant 0 : i32
    %c0_i32_0 = arith.constant 0 : i32
    %c0_i32_1 = arith.constant 0 : i32
    return %arg0, %c0_i32, %c0_i32_0 : i32, i32, i32
  }
  func.func @transform_1(%arg0: i32) -> (i32, i32, i32) {
    %c0_i32 = arith.constant 0 : i32
    %c0_i32_0 = arith.constant 0 : i32
    %c0_i32_1 = arith.constant 0 : i32
    return %arg0, %c0_i32, %c0_i32_0 : i32, i32, i32
  }
  func.func @transform_2(%arg0: i32) -> (i32, i32) {
    %c0_i32 = arith.constant 0 : i32
    %c0_i32_0 = arith.constant 0 : i32
    %c0_i32_1 = arith.constant 0 : i32
    return %c0_i32, %c0_i32_0 : i32, i32
  }
  func.func @transform_3(%arg0: i32) -> (i32, i32, i32) {
    %c0_i32 = arith.constant 0 : i32
    %c0_i32_0 = arith.constant 0 : i32
    %c0_i32_1 = arith.constant 0 : i32
    %c0_i32_2 = arith.constant 0 : i32
    return %c0_i32, %c0_i32_0, %c0_i32_1 : i32, i32, i32
  }
  func.func @transform_4(%arg0: i32) -> (i32, i32, i32) {
    %c0_i32 = arith.constant 0 : i32
    %c0_i32_0 = arith.constant 0 : i32
    %c0_i32_1 = arith.constant 0 : i32
    %c0_i32_2 = arith.constant 0 : i32
    return %c0_i32, %c0_i32_0, %c0_i32_1 : i32, i32, i32
  }
  func.func @transform_5(%arg0: i32) -> (i32, i32) {
    %c0_i32 = arith.constant 0 : i32
    %c0_i32_0 = arith.constant 0 : i32
    %c0_i32_1 = arith.constant 0 : i32
    return %c0_i32, %c0_i32_0 : i32, i32
  }
  func.func @transform_6(%arg0: i32) -> (i32, i32) {
    %c0_i32 = arith.constant 0 : i32
    %c0_i32_0 = arith.constant 0 : i32
    %c0_i32_1 = arith.constant 0 : i32
    return %c0_i32, %c0_i32_0 : i32, i32
  }
  func.func @transform_7(%arg0: i32) -> (i32, i32, i32) {
    %c0_i32 = arith.constant 0 : i32
    %c0_i32_0 = arith.constant 0 : i32
    %c0_i32_1 = arith.constant 0 : i32
    return %arg0, %c0_i32, %c0_i32_0 : i32, i32, i32
  }
}

</mosaic_0001>

<llo_original>
// kernel: tpu_custom_call.1
$region0: #{tpu_custom_call.1}
  #allocation0 [shape = 'u32[]', space=smem, size = 0x4, offset = 0x4, fixed_abs, tag = 'smem constant byte address 0x4 - core index']
  #allocation1 [shape = 'u32[144,128]{1,0:T(1,128)}', space=vmem, size = 0x12000, scoped, tag = 'internal scratch']
  #allocation2 [shape = 'f32[8,640]{1,0:T(8,128)}', space=vmem, size = 0x5000, scoped, tag = 'scratch operand']
  #allocation3 [shape = 'bf16[72,384]{1,0:T(8,128)(2,1)}', space=vmem, size = 0xd800, scoped, tag = 'scratch operand']
  %s0 = inlined_call_operand.hbm [shape: f32[2,8,640], index: 0, kind: input, shape index: {}]
  %s1 = inlined_call_operand.vmem [shape: bf16[2,8,64], index: 1, kind: input, shape index: {}]
  %s2 = inlined_call_operand.vmem [shape: bf16[8,72], index: 2, kind: input, shape index: {}]
  %s3 = inlined_call_operand.vmem [shape: bf16[4,8,72], index: 3, kind: input, shape index: {}]
  %s4 = inlined_call_operand.vmem [shape: f32[5,8,1], index: 4, kind: input, shape index: {}]
  %s5 = inlined_call_operand.hbm [shape: bf16[64,384], index: 5, kind: input, shape index: {}]
  %s6 = inlined_call_operand.vmem [shape: f32[1,384], index: 6, kind: input, shape index: {}]
  %s7 = inlined_call_operand.hbm [shape: f32[2,8,384], index: 7, kind: output, shape index: {}]
  %s8 = sld [smem:[#allocation0]]
  $region69: #{tpu_custom_call.1} parent=0
    _
  %s10 = ssub.s32 1, %s8
  %s11 = scalar_select 0, %s10, %s8
  $region1: #{tpu_custom_call.1} parent=0
    #allocation4 [shape = 'u8[40960]{0}', space=vmem, size = 0xa000, scoped, tag = 'input window, operand 0']
    #allocation5 [shape = 's32[2]{0}', space=sflag, size = 0x8, scoped, tag = 'scoped memory for tpu_custom_call.1']
    #allocation6 [shape = 's32[2]{0}', space=sflag, size = 0x8, scoped, tag = 'scoped memory for tpu_custom_call.1']
    #allocation7 [shape = 'u8[49152]{0}', space=vmem, size = 0xc000, scoped, tag = 'input window, operand 5, single buffered']
    #allocation8 [shape = 's32[1]{0}', space=sflag, size = 0x4, scoped, tag = 'scoped memory for tpu_custom_call.1']
    #allocation9 [shape = 'u8[24576]{0}', space=vmem, size = 0x6000, scoped, tag = 'output window, operand 0']
    %12 = vsyncpa [#allocation5], 0
    %s13 = scalar_lea.sflag [#allocation5], 1
    %14 = vsyncpa %s13, 0
    %15 = vsyncpa [#allocation8], 0
    %16 = vsyncpa [#allocation6], 0
    %s17 = scalar_lea.sflag [#allocation6], 1
    %18 = vsyncpa %s17, 0
    loop: start=0, step=1, limit=4
    $region2: #{tpu_custom_call.1} parent=1 // loop_pre_header
      _
    $region3: #{tpu_custom_call.1} parent=1 // loop_header
      %s20 = sphi 0, %s24
      %p21 = scmp.ge.s32.totalorder %s20, 4
      %s30 = sphi 0, %s32
      %s33 = sphi 0, %s30
      %s34 = sphi 0, %s33
      %s50 = sphi 0, %s34
      %s56 = sphi 0, %s58
      %s59 = sphi 0, %s56
      %s60 = sphi 0, %s59
      %s76 = sphi 0, %s60
      %s80 = sphi 0, %s80
      %s82 = sphi 0, %s80
      %s83 = sphi 0, %s82
      %s97 = sphi 0, %s83
      %s101 = sphi 0, %s101
      %s103 = sphi 0, %s101
      %s104 = sphi 0, %s103
      %s118 = sphi 0, %s104
      %s122 = sphi 0, %s122
      %s124 = sphi 0, %s122
      %s125 = sphi 0, %s124
      %s139 = sphi 0, %s125
      %s143 = sphi 0, %s143
      %s145 = sphi 0, %s143
      %s146 = sphi 0, %s145
      %s160 = sphi 0, %s146
      %s164 = sphi 0, %s164
      %s166 = sphi 0, %s164
      %s167 = sphi 0, %s166
      %s181 = sphi 0, %s167
      %s187 = sphi 0, %s189
      %s190 = sphi 0, %s187
      %s191 = sphi 0, %s190
      %s207 = sphi 0, %s191
    $region4: #{tpu_custom_call.1} parent=1 // loop_header_branch
      %23 = sbr.rel (%p21) target = $region8
    $region5: #{tpu_custom_call.1} parent=1 // loop_body
      %s25 = ssub.s32 %s20, 1
      %s26 = ssub.s32 %s20, 2
      %s27 = sadd.s32 %s20, 1
      %s28 = ssub.s32 %s20, %s27
      %p29 = scmp.eq.s32.totalorder %s28, 0
      %s31 = sadd.s32 %s30, 1
      %s32 = scalar_select %p29, %s30, %s31
      %p35 = pneg %p29
      %p36 = scmp.eq.s32.totalorder %s20, 1
      %p37 = por %p35, %p36
      %p38 = scmp.ne.s32.totalorder %s30, %s33
      %p39 = scmp.eq.s32.totalorder %s20, 0
      %p40 = por %p38, %p39
      %p41 = scmp.ne.s32.totalorder %s30, %s33
      %p42 = scmp.eq.s32.totalorder %s25, 1
      %p43 = por %p41, %p42
      %p44 = scmp.ne.s32.totalorder %s33, %s34
      %p45 = scmp.eq.s32.totalorder %s25, 0
      %p46 = por %p44, %p45
      %p47 = scmp.ne.s32.totalorder %s33, %s34
      %p48 = scmp.eq.s32.totalorder %s26, 1
      %p49 = por %p47, %p48
      %p51 = scmp.ne.s32.totalorder %s34, %s50
      %p52 = scmp.eq.s32.totalorder %s26, 0
      %p53 = por %p51, %p52
      %s54 = ssub.s32 %s20, %s27
      %p55 = scmp.eq.s32.totalorder %s54, 0
      %s57 = sadd.s32 %s56, 1
      %s58 = scalar_select %p55, %s56, %s57
      %p61 = pneg %p55
      %p62 = scmp.eq.s32.totalorder %s20, 1
      %p63 = por %p61, %p62
      %p64 = scmp.ne.s32.totalorder %s56, %s59
      %p65 = scmp.eq.s32.totalorder %s20, 0
      %p66 = por %p64, %p65
      %p67 = scmp.ne.s32.totalorder %s56, %s59
      %p68 = scmp.eq.s32.totalorder %s25, 1
      %p69 = por %p67, %p68
      %p70 = scmp.ne.s32.totalorder %s59, %s60
      %p71 = scmp.eq.s32.totalorder %s25, 0
      %p72 = por %p70, %p71
      %p73 = scmp.ne.s32.totalorder %s59, %s60
      %p74 = scmp.eq.s32.totalorder %s26, 1
      %p75 = por %p73, %p74
      %p77 = scmp.ne.s32.totalorder %s60, %s76
      %p78 = scmp.eq.s32.totalorder %s26, 0
      %p79 = por %p77, %p78
      %s81 = sadd.s32 %s80, 1
      %p84 = scmp.eq.s32.totalorder %s20, 1
      %p85 = scmp.ne.s32.totalorder %s80, %s82
      %p86 = scmp.eq.s32.totalorder %s20, 0
      %p87 = por %p85, %p86
      %p88 = scmp.ne.s32.totalorder %s80, %s82
      %p89 = scmp.eq.s32.totalorder %s25, 1
      %p90 = por %p88, %p89
      %p91 = scmp.ne.s32.totalorder %s82, %s83
      %p92 = scmp.eq.s32.totalorder %s25, 0
      %p93 = por %p91, %p92
      %p94 = scmp.ne.s32.totalorder %s82, %s83
      %p95 = scmp.eq.s32.totalorder %s26, 1
      %p96 = por %p94, %p95
      %p98 = scmp.ne.s32.totalorder %s83, %s97
      %p99 = scmp.eq.s32.totalorder %s26, 0
      %p100 = por %p98, %p99
      %s102 = sadd.s32 %s101, 1
      %p105 = scmp.eq.s32.totalorder %s20, 1
      %p106 = scmp.ne.s32.totalorder %s101, %s103
      %p107 = scmp.eq.s32.totalorder %s20, 0
      %p108 = por %p106, %p107
      %p109 = scmp.ne.s32.totalorder %s101, %s103
      %p110 = scmp.eq.s32.totalorder %s25, 1
      %p111 = por %p109, %p110
      %p112 = scmp.ne.s32.totalorder %s103, %s104
      %p113 = scmp.eq.s32.totalorder %s25, 0
      %p114 = por %p112, %p113
      %p115 = scmp.ne.s32.totalorder %s103, %s104
      %p116 = scmp.eq.s32.totalorder %s26, 1
      %p117 = por %p115, %p116
      %p119 = scmp.ne.s32.totalorder %s104, %s118
      %p120 = scmp.eq.s32.totalorder %s26, 0
      %p121 = por %p119, %p120
      %s123 = sadd.s32 %s122, 1
      %p126 = scmp.eq.s32.totalorder %s20, 1
      %p127 = scmp.ne.s32.totalorder %s122, %s124
      %p128 = scmp.eq.s32.totalorder %s20, 0
      %p129 = por %p127, %p128
      %p130 = scmp.ne.s32.totalorder %s122, %s124
      %p131 = scmp.eq.s32.totalorder %s25, 1
      %p132 = por %p130, %p131
      %p133 = scmp.ne.s32.totalorder %s124, %s125
      %p134 = scmp.eq.s32.totalorder %s25, 0
      %p135 = por %p133, %p134
      %p136 = scmp.ne.s32.totalorder %s124, %s125
      %p137 = scmp.eq.s32.totalorder %s26, 1
      %p138 = por %p136, %p137
      %p140 = scmp.ne.s32.totalorder %s125, %s139
      %p141 = scmp.eq.s32.totalorder %s26, 0
      %p142 = por %p140, %p141
      %s144 = sadd.s32 %s143, 1
      %p147 = scmp.eq.s32.totalorder %s20, 1
      %p148 = scmp.ne.s32.totalorder %s143, %s145
      %p149 = scmp.eq.s32.totalorder %s20, 0
      %p150 = por %p148, %p149
      %p151 = scmp.ne.s32.totalorder %s143, %s145
      %p152 = scmp.eq.s32.totalorder %s25, 1
      %p153 = por %p151, %p152
      %p154 = scmp.ne.s32.totalorder %s145, %s146
      %p155 = scmp.eq.s32.totalorder %s25, 0
      %p156 = por %p154, %p155
      %p157 = scmp.ne.s32.totalorder %s145, %s146
      %p158 = scmp.eq.s32.totalorder %s26, 1
      %p159 = por %p157, %p158
      %p161 = scmp.ne.s32.totalorder %s146, %s160
      %p162 = scmp.eq.s32.totalorder %s26, 0
      %p163 = por %p161, %p162
      %s165 = sadd.s32 %s164, 1
      %p168 = scmp.eq.s32.totalorder %s20, 1
      %p169 = scmp.ne.s32.totalorder %s164, %s166
      %p170 = scmp.eq.s32.totalorder %s20, 0
      %p171 = por %p169, %p170
      %p172 = scmp.ne.s32.totalorder %s164, %s166
      %p173 = scmp.eq.s32.totalorder %s25, 1
      %p174 = por %p172, %p173
      %p175 = scmp.ne.s32.totalorder %s166, %s167
      %p176 = scmp.eq.s32.totalorder %s25, 0
      %p177 = por %p175, %p176
      %p178 = scmp.ne.s32.totalorder %s166, %s167
      %p179 = scmp.eq.s32.totalorder %s26, 1
      %p180 = por %p178, %p179
      %p182 = scmp.ne.s32.totalorder %s167, %s181
      %p183 = scmp.eq.s32.totalorder %s26, 0
      %p184 = por %p182, %p183
      %s185 = ssub.s32 %s20, %s27
      %p186 = scmp.eq.s32.totalorder %s185, 0
      %s188 = sadd.s32 %s187, 1
      %s189 = scalar_select %p186, %s187, %s188
      %p192 = pneg %p186
      %p193 = scmp.eq.s32.totalorder %s20, 1
      %p194 = por %p192, %p193
      %p195 = scmp.ne.s32.totalorder %s187, %s190
      %p196 = scmp.eq.s32.totalorder %s20, 0
      %p197 = por %p195, %p196
      %p198 = scmp.ne.s32.totalorder %s187, %s190
      %p199 = scmp.eq.s32.totalorder %s25, 1
      %p200 = por %p198, %p199
      %p201 = scmp.ne.s32.totalorder %s190, %s191
      %p202 = scmp.eq.s32.totalorder %s25, 0
      %p203 = por %p201, %p202
      %p204 = scmp.ne.s32.totalorder %s190, %s191
      %p205 = scmp.eq.s32.totalorder %s26, 1
      %p206 = por %p204, %p205
      %p208 = scmp.ne.s32.totalorder %s191, %s207
      %p209 = scmp.eq.s32.totalorder %s26, 0
      %p210 = por %p208, %p209
      %p211 = scmp.le.s32.totalorder 1, %s20
      %p212 = scmp.lt.s32.totalorder %s20, 3
      %p213 = pnand %p211, %p212
      %p214 = pneg %p213
      // Predicated region
      $region9: #{tpu_custom_call.1} parent=5 // pred_check
        _
      $region10: #{tpu_custom_call.1} parent=5 // pred_check_branch
        %216 = sbr.rel (%p213) target = $region12
      $region11: #{tpu_custom_call.1} parent=5 // pred_region
        %s217 = ssub.s32 %s20, 1
        // Predicated region
        $region13: #{tpu_custom_call.1} parent=11 // pred_check
          %p218 = pneg %p93
        $region14: #{tpu_custom_call.1} parent=11 // pred_check_branch
          %220 = sbr.rel (%p218) target = $region16
        $region15: #{tpu_custom_call.1} parent=11 // pred_region
          _
        $region16: #{tpu_custom_call.1} parent=11 // pred_fallthru
          _
        // Predicated region
        $region17: #{tpu_custom_call.1} parent=11 // pred_check
          %p221 = pneg %p114
        $region18: #{tpu_custom_call.1} parent=11 // pred_check_branch
          %223 = sbr.rel (%p221) target = $region20
        $region19: #{tpu_custom_call.1} parent=11 // pred_region
          _
        $region20: #{tpu_custom_call.1} parent=11 // pred_fallthru
          _
        // Predicated region
        $region21: #{tpu_custom_call.1} parent=11 // pred_check
          %p224 = pneg %p135
        $region22: #{tpu_custom_call.1} parent=11 // pred_check_branch
          %226 = sbr.rel (%p224) target = $region24
        $region23: #{tpu_custom_call.1} parent=11 // pred_region
          _
        $region24: #{tpu_custom_call.1} parent=11 // pred_fallthru
          _
        // Predicated region
        $region25: #{tpu_custom_call.1} parent=11 // pred_check
          %p227 = pneg %p156
        $region26: #{tpu_custom_call.1} parent=11 // pred_check_branch
          %229 = sbr.rel (%p227) target = $region28
        $region27: #{tpu_custom_call.1} parent=11 // pred_region
          %s231 = ssub.s32 1536, 1536
          %232 = vsyncadd [#allocation8], %s231
          %s233 = sshll.u32 [#allocation7], 4
          %s234 = int_to_ptr.vmem [resolvable:$true] %s233
          %239 = dma.hbm_to_vmem [thread:$0]  %s5, 1536, %s234, [#allocation8], 192, 192, 12
        $region28: #{tpu_custom_call.1} parent=11 // pred_fallthru
          _
        // Predicated region
        $region29: #{tpu_custom_call.1} parent=11 // pred_check
          %p240 = pneg %p177
        $region30: #{tpu_custom_call.1} parent=11 // pred_check_branch
          %242 = sbr.rel (%p240) target = $region32
        $region31: #{tpu_custom_call.1} parent=11 // pred_region
          _
        $region32: #{tpu_custom_call.1} parent=11 // pred_fallthru
          _
      $region12: #{tpu_custom_call.1} parent=5 // pred_fallthru
        _
      %p243 = scmp.lt.s32.totalorder %s20, 2
      // Predicated region
      $region33: #{tpu_custom_call.1} parent=5 // pred_check
        %p244 = pneg %p243
      $region34: #{tpu_custom_call.1} parent=5 // pred_check_branch
        %246 = sbr.rel (%p244) target = $region36
      $region35: #{tpu_custom_call.1} parent=5 // pred_region
        // Predicated region
        $region37: #{tpu_custom_call.1} parent=35 // pred_check
          %p247 = pneg %p40
        $region38: #{tpu_custom_call.1} parent=35 // pred_check_branch
          %249 = sbr.rel (%p247) target = $region40
        $region39: #{tpu_custom_call.1} parent=35 // pred_region
          %s250 = sand.u32 %s30, 1
          %s251 = scalar_lea.sflag [#allocation5], %s250
          %s252 = sand.u32 %s30, 1
          %s253 = smul.addr %s252, 40
          %s254 = scalar_lea.vmem [#allocation4], %s253
          %s256 = ssub.s32 640, 640
          %257 = vsyncadd %s251, %s256
          %s258 = smul.addr %s20, 5
          %s259 = smul.addr %s258, 128
          %s260 = scalar_lea.hbm %s0, %s259
          %s262 = sshll.u32 %s254, 4
          %s263 = int_to_ptr.vmem [resolvable:$true] %s262
          %265 = dma.hbm_to_vmem [thread:$0]  %s260, 640, %s263, %s251
        $region40: #{tpu_custom_call.1} parent=35 // pred_fallthru
          _
        // Predicated region
        $region41: #{tpu_custom_call.1} parent=35 // pred_check
          %p266 = pneg %p66
        $region42: #{tpu_custom_call.1} parent=35 // pred_check_branch
          %268 = sbr.rel (%p266) target = $region44
        $region43: #{tpu_custom_call.1} parent=35 // pred_region
          %p269 = scmp.lt.s32.totalorder %s20, 1
          %s270 = scalar_select %p269, %s20, 1
          %s271 = smul.addr %s270, 4
          %s272 = scalar_lea.vmem %s1, %s271
        $region44: #{tpu_custom_call.1} parent=35 // pred_fallthru
          _
      $region36: #{tpu_custom_call.1} parent=5 // pred_fallthru
        _
      %p273 = scmp.le.s32.totalorder 1, %s20
      %p274 = scmp.lt.s32.totalorder %s20, 3
      %p275 = pnand %p273, %p274
      %p276 = pneg %p275
      // Predicated region
      $region45: #{tpu_custom_call.1} parent=5 // pred_check
        _
      $region46: #{tpu_custom_call.1} parent=5 // pred_check_branch
        %278 = sbr.rel (%p275) target = $region48
      $region47: #{tpu_custom_call.1} parent=5 // pred_region
        %s279 = ssub.s32 %s20, 1
        %s280 = sand.u32 %s33, 1
        %s281 = scalar_lea.sflag [#allocation5], %s280
        %s282 = sand.u32 %s33, 1
        %s283 = smul.addr %s282, 40
        %s284 = scalar_lea.vmem [#allocation4], %s283
        // Predicated region
        $region49: #{tpu_custom_call.1} parent=47 // pred_check
          %p285 = pneg %p46
        $region50: #{tpu_custom_call.1} parent=47 // pred_check_branch
          %287 = sbr.rel (%p285) target = $region52
        $region51: #{tpu_custom_call.1} parent=47 // pred_region
          %288 = dma.done %s281, 640
        $region52: #{tpu_custom_call.1} parent=47 // pred_fallthru
          _
        // Predicated region
        $region53: #{tpu_custom_call.1} parent=47 // pred_check
          %p289 = pneg %p156
        $region54: #{tpu_custom_call.1} parent=47 // pred_check_branch
          %291 = sbr.rel (%p289) target = $region56
        $region55: #{tpu_custom_call.1} parent=47 // pred_region
          %292 = dma.done [#allocation8], 1536
        $region56: #{tpu_custom_call.1} parent=47 // pred_fallthru
          _
        %s293 = sand.u32 %s33, 1
        %s294 = scalar_lea.sflag [#allocation5], %s293
        %s295 = sand.u32 %s33, 1
        %s296 = smul.addr %s295, 40
        %s297 = scalar_lea.vmem [#allocation4], %s296
        %p298 = pneg %p46
        %p299 = pneg %p43
        %p300 = scmp.lt.s32.totalorder %s25, 1
        %s301 = scalar_select %p300, %s25, 1
        %s302 = smul.addr %s301, 4
        %s303 = scalar_lea.vmem %s1, %s302
        %p304 = pneg %p72
        %p305 = pneg %p69
        %p306 = pneg %p93
        %p307 = pneg %p90
        %p308 = pneg %p114
        %p309 = pneg %p111
        %p310 = pneg %p135
        %p311 = pneg %p132
        %p312 = pneg %p156
        %p313 = pneg %p153
        %p314 = pneg %p177
        %p315 = pneg %p174
        %p316 = pneg %p203
        %p317 = pneg %p200
        %s318 = sand.u32 %s190, 1
        %s319 = scalar_lea.sflag [#allocation6], %s318
        %s320 = sand.u32 %s190, 1
        %s321 = smul.addr %s320, 24
        %s322 = scalar_lea.vmem [#allocation9], %s321
        %p323 = scmp.lt.s32.totalorder %s25, 1
        %s324 = scalar_select %p323, %s25, 1
        %s325 = smul.addr %s324, 4
        %s326 = scalar_lea.vmem %s1, %s325
        %v328 = vld [vmem:[%s6] sm:$0x7]
        %329 = vst [vmem:[#allocation2] sm:$0xff] 0.0
        %330 = vst [vmem:[#allocation2 + $0x8] sm:$0xff] 0.0
        %331 = vst [vmem:[#allocation2 + $0x10] sm:$0xff] 0.0
        %332 = vst [vmem:[#allocation2 + $0x18] sm:$0xff] 0.0
        %333 = vst [vmem:[#allocation2 + $0x20] sm:$0xff] 0.0
        %v334 = vld [vmem:[%s2] sm:$0xf]
        %v335 = vld [vmem:[%s4] sm:$0xff]
        %v336 = vld [vmem:[%s284] sm:$0xff]
        %v337 = vld [vmem:[%s284 + $0x8] sm:$0xff]
        %v338 = vld [vmem:[%s284 + $0x10] sm:$0xff]
        %v339 = vld [vmem:[%s284 + $0x18] sm:$0xff]
        %v340 = vpack.c.bf16 %v336, %v336
        %v341 = vpack.c.bf16 %v337, %v337
        %v342 = vpack.c.bf16 %v338, %v338
        %v343 = vpack.c.bf16 %v339, %v339
        %v348 = vunpack.c.l.b16 %v340
        %v349 = vunpack.c.l.b16 %v341
        %v350 = vunpack.c.l.b16 %v342
        %v351 = vunpack.c.l.b16 %v343
        %v352 = vpack.c.b16 %v349, %v348
        %v353 = vpack.c.b16 %v351, %v350
        %354 = vrot.lane.b32.xlu0 %v352, 19
        %v355 = vpop.permute.xlu0 %354
        %356 = vrot.lane.b32.xlu0 %v353, 19
        %v357 = vpop.permute.xlu0 %356
        %v358 = vrot.slane %v355, 4
        %v359 = vrot.slane %v357, 4
        %vm360 = vcmask 1043456
        %v361 = vsel %vm360, %v358, %v359
        %vm362 = vcmask 154624
        %v363 = vsel %vm362, %v355, %v361
        %v364 = vsel %vm362, %v357, %v359
        %367 = vst [vmem:[#allocation3] sm:$0xff] %v363
        %368 = vst [vmem:[#allocation3 + $0x8] sm:$0xf] %v364
        %v369 = vld [vmem:[%s284] sm:$0xff]
        %v370 = vld [vmem:[%s284 + $0x8] sm:$0xff]
        %v371 = vld [vmem:[%s284 + $0x10] sm:$0xff]
        %v372 = vld [vmem:[%s284 + $0x18] sm:$0xff]
        %v373 = vpack.c.bf16 %v369, %v369
        %v374 = vpack.c.bf16 %v370, %v370
        %v375 = vpack.c.bf16 %v371, %v371
        %v376 = vpack.c.bf16 %v372, %v372
        %v381 = vunpack.c.l.b16 %v373
        %v382 = vunpack.c.l.b16 %v374
        %v383 = vunpack.c.l.b16 %v375
        %v384 = vunpack.c.l.b16 %v376
        %v385 = vpack.c.b16 %v382, %v381
        %v386 = vpack.c.b16 %v384, %v383
        %387 = vrot.lane.b32.xlu0 %v385, 18
        %v388 = vpop.permute.xlu0 %387
        %389 = vrot.lane.b32.xlu0 %v386, 18
        %v390 = vpop.permute.xlu0 %389
        %v391 = vrot.slane %v388, 4
        %v392 = vrot.slane %v390, 4
        %v393 = vsel %vm360, %v391, %v392
        %vm394 = vcmask 146432
        %v395 = vsel %vm394, %v388, %v393
        %v396 = vsel %vm394, %v390, %v392
        %399 = vst [vmem:[#allocation3 + $0xc] sm:$0xff] %v395
        %400 = vst [vmem:[#allocation3 + $0x14] sm:$0xf] %v396
        %v401 = vld [vmem:[%s284] sm:$0xff]
        %v402 = vld [vmem:[%s284 + $0x8] sm:$0xff]
        %v403 = vld [vmem:[%s284 + $0x10] sm:$0xff]
        %v404 = vld [vmem:[%s284 + $0x18] sm:$0xff]
        %v405 = vpack.c.bf16 %v401, %v401
        %v406 = vpack.c.bf16 %v402, %v402
        %v407 = vpack.c.bf16 %v403, %v403
        %v408 = vpack.c.bf16 %v404, %v404
        %v413 = vunpack.c.l.b16 %v405
        %v414 = vunpack.c.l.b16 %v406
        %v415 = vunpack.c.l.b16 %v407
        %v416 = vunpack.c.l.b16 %v408
        %v417 = vpack.c.b16 %v414, %v413
        %v418 = vpack.c.b16 %v416, %v415
        %419 = vrot.lane.b32.xlu0 %v417, 17
        %v420 = vpop.permute.xlu0 %419
        %421 = vrot.lane.b32.xlu0 %v418, 17
        %v422 = vpop.permute.xlu0 %421
        %v423 = vrot.slane %v420, 4
        %v424 = vrot.slane %v422, 4
        %v425 = vsel %vm360, %v423, %v424
        %vm426 = vcmask 138240
        %v427 = vsel %vm426, %v420, %v425
        %v428 = vsel %vm426, %v422, %v424
        %431 = vst [vmem:[#allocation3 + $0x18] sm:$0xff] %v427
        %432 = vst [vmem:[#allocation3 + $0x20] sm:$0xf] %v428
        %v433 = vld [vmem:[%s284] sm:$0xff]
        %v434 = vld [vmem:[%s284 + $0x8] sm:$0xff]
        %v435 = vld [vmem:[%s284 + $0x10] sm:$0xff]
        %v436 = vld [vmem:[%s284 + $0x18] sm:$0xff]
        %v437 = vpack.c.bf16 %v433, %v433
        %v438 = vpack.c.bf16 %v434, %v434
        %v439 = vpack.c.bf16 %v435, %v435
        %v440 = vpack.c.bf16 %v436, %v436
        %v445 = vunpack.c.l.b16 %v437
        %v446 = vunpack.c.l.b16 %v438
        %v447 = vunpack.c.l.b16 %v439
        %v448 = vunpack.c.l.b16 %v440
        %v449 = vpack.c.b16 %v446, %v445
        %v450 = vpack.c.b16 %v448, %v447
        %451 = vrot.lane.b32.xlu0 %v449, 1
        %v452 = vpop.permute.xlu0 %451
        %453 = vrot.lane.b32.xlu0 %v450, 1
        %v454 = vpop.permute.xlu0 %453
        %v455 = vrot.slane %v452, 4
        %v456 = vrot.slane %v454, 4
        %v457 = vsel %vm360, %v455, %v456
        %vm458 = vcmask 7168
        %v459 = vsel %vm458, %v452, %v457
        %v460 = vsel %vm458, %v454, %v456
        %463 = vst [vmem:[#allocation3 + $0x24] sm:$0xff] %v459
        %464 = vst [vmem:[#allocation3 + $0x2c] sm:$0xf] %v460
        %v465 = vld [vmem:[%s284 + $0x8] sm:$0xff]
        %v466 = vld [vmem:[%s284 + $0x10] sm:$0xff]
        %v467 = vld [vmem:[%s284 + $0x18] sm:$0xff]
        %v468 = vpack.c.bf16 %v465, %v465
        %v469 = vpack.c.bf16 %v466, %v466
        %v470 = vpack.c.bf16 %v467, %v467
        %v474 = vunpack.c.l.b16 %v468
        %v475 = vunpack.c.l.b16 %v469
        %v476 = vunpack.c.l.b16 %v470
        %v477 = vpack.c.b16 %v475, %v474
        %v478 = vpack.c.b16 %v476, %v476
        %481 = vst [vmem:[#allocation3 + $0x30] sm:$0xff] %v477
        %482 = vst [vmem:[#allocation3 + $0x38] sm:$0xf] %v478
        %v483 = vld [vmem:[%s284 + $0x8] sm:$0xff]
        %v484 = vld [vmem:[%s284 + $0x10] sm:$0xff]
        %v485 = vld [vmem:[%s284 + $0x18] sm:$0xff]
        %v486 = vld [vmem:[%s284 + $0x20] sm:$0xff]
        %v487 = vpack.c.bf16 %v483, %v483
        %v488 = vpack.c.bf16 %v484, %v484
        %v489 = vpack.c.bf16 %v485, %v485
        %v490 = vpack.c.bf16 %v486, %v486
        %v495 = vunpack.c.l.b16 %v487
        %v496 = vunpack.c.l.b16 %v488
        %v497 = vunpack.c.l.b16 %v489
        %v498 = vunpack.c.l.b16 %v490
        %v499 = vpack.c.b16 %v496, %v495
        %v500 = vpack.c.b16 %v498, %v497
        %501 = vrot.lane.b32.xlu0 %v499, 127
        %v502 = vpop.permute.xlu0 %501
        %503 = vrot.lane.b32.xlu0 %v500, 127
        %v504 = vpop.permute.xlu0 %503
        %v505 = vrot.slane %v502, 4
        %v506 = vrot.slane %v504, 4
        %v507 = vsel %vm360, %v505, %v506
        %vm508 = vcmask 1039360
        %v509 = vsel %vm508, %v502, %v507
        %v510 = vsel %vm508, %v504, %v506
        %513 = vst [vmem:[#allocation3 + $0x3c] sm:$0xff] %v509
        %514 = vst [vmem:[#allocation3 + $0x44] sm:$0xf] %v510
        %v515 = vld [vmem:[%s284 + $0x8] sm:$0xff]
        %v516 = vld [vmem:[%s284 + $0x10] sm:$0xff]
        %v517 = vld [vmem:[%s284 + $0x18] sm:$0xff]
        %v518 = vld [vmem:[%s284 + $0x20] sm:$0xff]
        %v519 = vpack.c.bf16 %v515, %v515
        %v520 = vpack.c.bf16 %v516, %v516
        %v521 = vpack.c.bf16 %v517, %v517
        %v522 = vpack.c.bf16 %v518, %v518
        %v527 = vunpack.c.l.b16 %v519
        %v528 = vunpack.c.l.b16 %v520
        %v529 = vunpack.c.l.b16 %v521
        %v530 = vunpack.c.l.b16 %v522
        %v531 = vpack.c.b16 %v528, %v527
        %v532 = vpack.c.b16 %v530, %v529
        %533 = vrot.lane.b32.xlu0 %v531, 111
        %v534 = vpop.permute.xlu0 %533
        %535 = vrot.lane.b32.xlu0 %v532, 111
        %v536 = vpop.permute.xlu0 %535
        %v537 = vrot.slane %v534, 4
        %v538 = vrot.slane %v536, 4
        %v539 = vsel %vm360, %v537, %v538
        %vm540 = vcmask 908288
        %v541 = vsel %vm540, %v534, %v539
        %v542 = vsel %vm540, %v536, %v538
        %545 = vst [vmem:[#allocation3 + $0x48] sm:$0xff] %v541
        %546 = vst [vmem:[#allocation3 + $0x50] sm:$0xf] %v542
        %v547 = vld [vmem:[%s284 + $0x8] sm:$0xff]
        %v548 = vld [vmem:[%s284 + $0x10] sm:$0xff]
        %v549 = vld [vmem:[%s284 + $0x18] sm:$0xff]
        %v550 = vld [vmem:[%s284 + $0x20] sm:$0xff]
        %v551 = vpack.c.bf16 %v547, %v547
        %v552 = vpack.c.bf16 %v548, %v548
        %v553 = vpack.c.bf16 %v549, %v549
        %v554 = vpack.c.bf16 %v550, %v550
        %v559 = vunpack.c.l.b16 %v551
        %v560 = vunpack.c.l.b16 %v552
        %v561 = vunpack.c.l.b16 %v553
        %v562 = vunpack.c.l.b16 %v554
        %v563 = vpack.c.b16 %v560, %v559
        %v564 = vpack.c.b16 %v562, %v561
        %565 = vrot.lane.b32.xlu0 %v563, 110
        %v566 = vpop.permute.xlu0 %565
        %567 = vrot.lane.b32.xlu0 %v564, 110
        %v568 = vpop.permute.xlu0 %567
        %v569 = vrot.slane %v566, 4
        %v570 = vrot.slane %v568, 4
        %v571 = vsel %vm360, %v569, %v570
        %vm572 = vcmask 900096
        %v573 = vsel %vm572, %v566, %v571
        %v574 = vsel %vm572, %v568, %v570
        %577 = vst [vmem:[#allocation3 + $0x54] sm:$0xff] %v573
        %578 = vst [vmem:[#allocation3 + $0x5c] sm:$0xf] %v574
        %v579 = vld [vmem:[%s284 + $0x8] sm:$0xff]
        %v580 = vld [vmem:[%s284 + $0x10] sm:$0xff]
        %v581 = vld [vmem:[%s284 + $0x18] sm:$0xff]
        %v582 = vld [vmem:[%s284 + $0x20] sm:$0xff]
        %v583 = vpack.c.bf16 %v579, %v579
        %v584 = vpack.c.bf16 %v580, %v580
        %v585 = vpack.c.bf16 %v581, %v581
        %v586 = vpack.c.bf16 %v582, %v582
        %v591 = vunpack.c.l.b16 %v583
        %v592 = vunpack.c.l.b16 %v584
        %v593 = vunpack.c.l.b16 %v585
        %v594 = vunpack.c.l.b16 %v586
        %v595 = vpack.c.b16 %v592, %v591
        %v596 = vpack.c.b16 %v594, %v593
        %597 = vrot.lane.b32.xlu0 %v595, 109
        %v598 = vpop.permute.xlu0 %597
        %599 = vrot.lane.b32.xlu0 %v596, 109
        %v600 = vpop.permute.xlu0 %599
        %v601 = vrot.slane %v598, 4
        %v602 = vrot.slane %v600, 4
        %v603 = vsel %vm360, %v601, %v602
        %vm604 = vcmask 891904
        %v605 = vsel %vm604, %v598, %v603
        %v606 = vsel %vm604, %v600, %v602
        %609 = vst [vmem:[#allocation3 + $0x60] sm:$0xff] %v605
        %610 = vst [vmem:[#allocation3 + $0x68] sm:$0xf] %v606
        %v611 = vld [vmem:[#allocation3] sm:$0xff]
        %v612 = vld [vmem:[#allocation3 + $0x8] sm:$0xf]
        %v613 = vld [vmem:[#allocation3 + $0xc] sm:$0xff]
        %v614 = vld [vmem:[#allocation3 + $0x14] sm:$0xf]
        %v615 = vld [vmem:[#allocation3 + $0x18] sm:$0xff]
        %v616 = vld [vmem:[#allocation3 + $0x20] sm:$0xf]
        %v617 = vld [vmem:[#allocation3 + $0x24] sm:$0xff]
        %v618 = vld [vmem:[#allocation3 + $0x2c] sm:$0xf]
        %v619 = vld [vmem:[#allocation3 + $0x30] sm:$0xff]
        %v620 = vld [vmem:[#allocation3 + $0x38] sm:$0xf]
        %v621 = vld [vmem:[#allocation3 + $0x3c] sm:$0xff]
        %v622 = vld [vmem:[#allocation3 + $0x44] sm:$0xf]
        %v623 = vld [vmem:[#allocation3 + $0x48] sm:$0xff]
        %v624 = vld [vmem:[#allocation3 + $0x50] sm:$0xf]
        %v625 = vld [vmem:[#allocation3 + $0x54] sm:$0xff]
        %v626 = vld [vmem:[#allocation3 + $0x5c] sm:$0xf]
        %v627 = vld [vmem:[#allocation3 + $0x60] sm:$0xff]
        %v628 = vld [vmem:[#allocation3 + $0x68] sm:$0xf]
        %630 = vset.pattern.permute.xlu0 0
        %631 = vperm.xlu0 %630, %v335
        %v632 = vpop.permute.xlu0 %631
        %v652 = vunpack.c.l.b16 %v611
        %v653 = vunpack.c.h.b16 %v611
        %v654 = vunpack.c.l.b16 %v612
        %v655 = vunpack.c.l.b16 %v613
        %v656 = vunpack.c.h.b16 %v613
        %v657 = vunpack.c.l.b16 %v614
        %v658 = vunpack.c.l.b16 %v615
        %v659 = vunpack.c.h.b16 %v615
        %v660 = vunpack.c.l.b16 %v616
        %v661 = vunpack.c.l.b16 %v617
        %v662 = vunpack.c.h.b16 %v617
        %v663 = vunpack.c.l.b16 %v618
        %v664 = vunpack.c.l.b16 %v619
        %v665 = vunpack.c.h.b16 %v619
        %v666 = vunpack.c.l.b16 %v620
        %v667 = vunpack.c.l.b16 %v621
        %v668 = vunpack.c.h.b16 %v621
        %v669 = vunpack.c.l.b16 %v622
        %v670 = vunpack.c.l.b16 %v623
        %v671 = vunpack.c.h.b16 %v623
        %v672 = vunpack.c.l.b16 %v624
        %v673 = vunpack.c.l.b16 %v625
        %v674 = vunpack.c.h.b16 %v625
        %v675 = vunpack.c.l.b16 %v626
        %v676 = vunpack.c.l.b16 %v627
        %v677 = vunpack.c.h.b16 %v627
        %v678 = vunpack.c.l.b16 %v628
        %v679 = vpack.c.b16 %v655, %v652
        %v680 = vpack.c.b16 %v656, %v653
        %v681 = vpack.c.b16 %v657, %v654
        %v682 = vpack.c.b16 %v661, %v658
        %v683 = vpack.c.b16 %v662, %v659
        %v684 = vpack.c.b16 %v663, %v660
        %v685 = vpack.c.b16 %v667, %v664
        %v686 = vpack.c.b16 %v668, %v665
        %v687 = vpack.c.b16 %v669, %v666
        %v688 = vpack.c.b16 %v673, %v670
        %v689 = vpack.c.b16 %v674, %v671
        %v690 = vpack.c.b16 %v675, %v672
        %v691 = vpack.c.b16 %v676, %v676
        %v692 = vpack.c.b16 %v677, %v677
        %v693 = vpack.c.b16 %v678, %v678
        %vm706 = vcmask 588800
        %v708 = vsel %vm706, %v334, 0
        %vm710 = vcmask 1043456
        %v712 = vsel %vm710, %v691, 0
        %v715 = vsel %vm710, %v692, 0
        %v718 = vsel %vm710, %v693, 0
        %720 = vmatprep.subr.bf16.mxu0 %v680
        %721 = vmatpush1.bf16.msra.mxu0 %v679
        %722 = vmatprep.subr.bf16.mxu0 %v683
        %723 = vmatpush1.bf16.msra.mxu0 %v682
        %724 = vmatprep.subr.bf16.mxu0 %v686
        %725 = vmatpush1.bf16.msra.mxu0 %v685
        %726 = vmatprep.subr.bf16.mxu0 %v689
        %727 = vmatpush1.bf16.msra.mxu0 %v688
        %728 = vmatprep.subr.bf16.mxu0 %v715
        %729 = vmatpush1.bf16.msra.mxu0 %v712
        %730 = vmatprep.subr.bf16.mxu0 0
        %731 = vmatpush1.bf16.msra.mxu0 0
        %732 = vmatprep.subr.bf16.mxu0 0
        %733 = vmatpush1.bf16.msra.mxu0 0
        %734 = vmatprep.subr.bf16.mxu0 0
        %735 = vmatpush1.bf16.msra.mxu0 0
        %736 = vmatprep.subr.bf16.mxu0 0
        %737 = vmatpush1.bf16.msra.mxu0 0
        %738 = vmatprep.subr.bf16.mxu0 0
        %739 = vmatpush1.bf16.msra.mxu0 0
        %740 = vmatprep.subr.bf16.mxu0 0
        %741 = vmatpush1.bf16.msra.mxu0 0
        %742 = vmatprep.subr.bf16.mxu0 0
        %743 = vmatpush1.bf16.msra.mxu0 0
        %744 = vmatprep.subr.bf16.mxu0 0
        %745 = vmatpush1.bf16.msra.mxu0 0
        %746 = vmatprep.subr.bf16.mxu0 0
        %747 = vmatpush1.bf16.msra.mxu0 0
        %748 = vmatprep.subr.bf16.mxu0 0
        %749 = vmatpush1.bf16.msra.mxu0 0
        %750 = vmatprep.subr.bf16.mxu0 0
        %751 = vmatpush1.bf16.msra.mxu0 0
        %752 = vmatprep.mubr.bf16.mxu0 0
        %753 = vmatmul.mubr.bf16.gmra.mrb[0].mxu0 %v708
        %v754 = vpop.f32.mrb[0].mxu0
        %v755 = vadd.f32 %v632, %v754
        %v756 = vpop.f32.mrb[0].mxu0
        %v757 = vadd.f32 %v632, %v756
        %v758 = vpop.f32.mrb[0].mxu0
        %v759 = vpop.f32.mrb[0].mxu0
        %760 = vdwg.mxu0
        %761 = vmatprep.subr.bf16.mxu0 0
        %762 = vmatpush1.bf16.msra.mxu0 %v681
        %763 = vmatprep.subr.bf16.mxu0 0
        %764 = vmatpush1.bf16.msra.mxu0 %v684
        %765 = vmatprep.subr.bf16.mxu0 0
        %766 = vmatpush1.bf16.msra.mxu0 %v687
        %767 = vmatprep.subr.bf16.mxu0 0
        %768 = vmatpush1.bf16.msra.mxu0 %v690
        %769 = vmatprep.subr.bf16.mxu0 0
        %770 = vmatpush1.bf16.msra.mxu0 %v718
        %771 = vmatprep.subr.bf16.mxu0 0
        %772 = vmatpush1.bf16.msra.mxu0 0
        %773 = vmatprep.subr.bf16.mxu0 0
        %774 = vmatpush1.bf16.msra.mxu0 0
        %775 = vmatprep.subr.bf16.mxu0 0
        %776 = vmatpush1.bf16.msra.mxu0 0
        %777 = vmatprep.subr.bf16.mxu0 0
        %778 = vmatpush1.bf16.msra.mxu0 0
        %779 = vmatprep.subr.bf16.mxu0 0
        %780 = vmatpush1.bf16.msra.mxu0 0
        %781 = vmatprep.subr.bf16.mxu0 0
        %782 = vmatpush1.bf16.msra.mxu0 0
        %783 = vmatprep.subr.bf16.mxu0 0
        %784 = vmatpush1.bf16.msra.mxu0 0
        %785 = vmatprep.subr.bf16.mxu0 0
        %786 = vmatpush1.bf16.msra.mxu0 0
        %787 = vmatprep.subr.bf16.mxu0 0
        %788 = vmatpush1.bf16.msra.mxu0 0
        %789 = vmatprep.subr.bf16.mxu0 0
        %790 = vmatpush1.bf16.msra.mxu0 0
        %791 = vmatprep.subr.bf16.mxu0 0
        %792 = vmatpush1.bf16.msra.mxu0 0
        %793 = vmatprep.mubr.bf16.mxu0 0
        %794 = vmatmul.mubr.bf16.gmra.mrb[0].mxu0 %v708
        %v795 = vpop.f32.mrb[0].mxu0
        %v796 = vadd.f32 %v632, %v795
        %v797 = vpop.f32.mrb[0].mxu0
        %v798 = vpop.f32.mrb[0].mxu0
        %v799 = vpop.f32.mrb[0].mxu0
        %800 = vdwg.mxu0
        %v802 = vlaneseq
        %v803 = vshrl.u32 %v802, 7
        %v804 = vsub.s32 0, %v803
        %v805 = vrot.slane %v328, %v804
        %v806 = vlaneseq
        %v807 = vshrl.u32 %v806, 7
        %v808 = vsub.s32 1, %v807
        %v809 = vrot.slane %v328, %v808
        %v810 = vlaneseq
        %v811 = vshrl.u32 %v810, 7
        %v812 = vsub.s32 2, %v811
        %v813 = vrot.slane %v328, %v812
        %v817 = vmul.f32 %v755, %v805
        %v818 = vmul.f32 %v757, %v809
        %v819 = vmul.f32 %v796, %v813
        %v820 = vmax.f32 %v817, 0.0
        %v821 = vmax.f32 %v818, 0.0
        %v822 = vmax.f32 %v819, 0.0
        %823 = vst [vmem:[#allocation2 + $0x8] sm:$0xff] %v820
        %824 = vst [vmem:[#allocation2 + $0x10] sm:$0xff] %v821
        %825 = vst [vmem:[#allocation2 + $0x18] sm:$0xff] %v822
        %v826 = vld [vmem:[%s3] sm:$0xf]
        %s827 = scalar_lea.vmem %s4, 8
        %v828 = vld [vmem:[%s827] sm:$0xff]
        %v829 = vld [vmem:[#allocation2] sm:$0xff]
        %v830 = vld [vmem:[#allocation2 + $0x8] sm:$0xff]
        %v831 = vld [vmem:[#allocation2 + $0x10] sm:$0xff]
        %v832 = vld [vmem:[#allocation2 + $0x18] sm:$0xff]
        %v833 = vpack.c.bf16 %v829, %v829
        %v834 = vpack.c.bf16 %v830, %v830
        %v835 = vpack.c.bf16 %v831, %v831
        %v836 = vpack.c.bf16 %v832, %v832
        %v841 = vunpack.c.l.b16 %v833
        %v842 = vunpack.c.l.b16 %v834
        %v843 = vunpack.c.l.b16 %v835
        %v844 = vunpack.c.l.b16 %v836
        %v845 = vpack.c.b16 %v842, %v841
        %v846 = vpack.c.b16 %v844, %v843
        %847 = vrot.lane.b32.xlu0 %v845, 19
        %v848 = vpop.permute.xlu0 %847
        %849 = vrot.lane.b32.xlu0 %v846, 19
        %v850 = vpop.permute.xlu0 %849
        %v851 = vrot.slane %v848, 4
        %v852 = vrot.slane %v850, 4
        %v853 = vsel %vm360, %v851, %v852
        %v854 = vsel %vm362, %v848, %v853
        %v855 = vsel %vm362, %v850, %v852
        %858 = vst [vmem:[#allocation3] sm:$0xff] %v854
        %859 = vst [vmem:[#allocation3 + $0x8] sm:$0xf] %v855
        %v860 = vld [vmem:[#allocation2] sm:$0xff]
        %v861 = vld [vmem:[#allocation2 + $0x8] sm:$0xff]
        %v862 = vld [vmem:[#allocation2 + $0x10] sm:$0xff]
        %v863 = vld [vmem:[#allocation2 + $0x18] sm:$0xff]
        %v864 = vpack.c.bf16 %v860, %v860
        %v865 = vpack.c.bf16 %v861, %v861
        %v866 = vpack.c.bf16 %v862, %v862
        %v867 = vpack.c.bf16 %v863, %v863
        %v872 = vunpack.c.l.b16 %v864
        %v873 = vunpack.c.l.b16 %v865
        %v874 = vunpack.c.l.b16 %v866
        %v875 = vunpack.c.l.b16 %v867
        %v876 = vpack.c.b16 %v873, %v872
        %v877 = vpack.c.b16 %v875, %v874
        %878 = vrot.lane.b32.xlu0 %v876, 18
        %v879 = vpop.permute.xlu0 %878
        %880 = vrot.lane.b32.xlu0 %v877, 18
        %v881 = vpop.permute.xlu0 %880
        %v882 = vrot.slane %v879, 4
        %v883 = vrot.slane %v881, 4
        %v884 = vsel %vm360, %v882, %v883
        %v885 = vsel %vm394, %v879, %v884
        %v886 = vsel %vm394, %v881, %v883
        %889 = vst [vmem:[#allocation3 + $0xc] sm:$0xff] %v885
        %890 = vst [vmem:[#allocation3 + $0x14] sm:$0xf] %v886
        %v891 = vld [vmem:[#allocation2] sm:$0xff]
        %v892 = vld [vmem:[#allocation2 + $0x8] sm:$0xff]
        %v893 = vld [vmem:[#allocation2 + $0x10] sm:$0xff]
        %v894 = vld [vmem:[#allocation2 + $0x18] sm:$0xff]
        %v895 = vpack.c.bf16 %v891, %v891
        %v896 = vpack.c.bf16 %v892, %v892
        %v897 = vpack.c.bf16 %v893, %v893
        %v898 = vpack.c.bf16 %v894, %v894
        %v903 = vunpack.c.l.b16 %v895
        %v904 = vunpack.c.l.b16 %v896
        %v905 = vunpack.c.l.b16 %v897
        %v906 = vunpack.c.l.b16 %v898
        %v907 = vpack.c.b16 %v904, %v903
        %v908 = vpack.c.b16 %v906, %v905
        %909 = vrot.lane.b32.xlu0 %v907, 17
        %v910 = vpop.permute.xlu0 %909
        %911 = vrot.lane.b32.xlu0 %v908, 17
        %v912 = vpop.permute.xlu0 %911
        %v913 = vrot.slane %v910, 4
        %v914 = vrot.slane %v912, 4
        %v915 = vsel %vm360, %v913, %v914
        %v916 = vsel %vm426, %v910, %v915
        %v917 = vsel %vm426, %v912, %v914
        %920 = vst [vmem:[#allocation3 + $0x18] sm:$0xff] %v916
        %921 = vst [vmem:[#allocation3 + $0x20] sm:$0xf] %v917
        %v922 = vld [vmem:[#allocation2] sm:$0xff]
        %v923 = vld [vmem:[#allocation2 + $0x8] sm:$0xff]
        %v924 = vld [vmem:[#allocation2 + $0x10] sm:$0xff]
        %v925 = vld [vmem:[#allocation2 + $0x18] sm:$0xff]
        %v926 = vpack.c.bf16 %v922, %v922
        %v927 = vpack.c.bf16 %v923, %v923
        %v928 = vpack.c.bf16 %v924, %v924
        %v929 = vpack.c.bf16 %v925, %v925
        %v934 = vunpack.c.l.b16 %v926
        %v935 = vunpack.c.l.b16 %v927
        %v936 = vunpack.c.l.b16 %v928
        %v937 = vunpack.c.l.b16 %v929
        %v938 = vpack.c.b16 %v935, %v934
        %v939 = vpack.c.b16 %v937, %v936
        %940 = vrot.lane.b32.xlu0 %v938, 1
        %v941 = vpop.permute.xlu0 %940
        %942 = vrot.lane.b32.xlu0 %v939, 1
        %v943 = vpop.permute.xlu0 %942
        %v944 = vrot.slane %v941, 4
        %v945 = vrot.slane %v943, 4
        %v946 = vsel %vm360, %v944, %v945
        %v947 = vsel %vm458, %v941, %v946
        %v948 = vsel %vm458, %v943, %v945
        %951 = vst [vmem:[#allocation3 + $0x24] sm:$0xff] %v947
        %952 = vst [vmem:[#allocation3 + $0x2c] sm:$0xf] %v948
        %v953 = vld [vmem:[#allocation2 + $0x8] sm:$0xff]
        %v954 = vld [vmem:[#allocation2 + $0x10] sm:$0xff]
        %v955 = vld [vmem:[#allocation2 + $0x18] sm:$0xff]
        %v956 = vpack.c.bf16 %v953, %v953
        %v957 = vpack.c.bf16 %v954, %v954
        %v958 = vpack.c.bf16 %v955, %v955
        %v962 = vunpack.c.l.b16 %v956
        %v963 = vunpack.c.l.b16 %v957
        %v964 = vunpack.c.l.b16 %v958
        %v965 = vpack.c.b16 %v963, %v962
        %v966 = vpack.c.b16 %v964, %v964
        %969 = vst [vmem:[#allocation3 + $0x30] sm:$0xff] %v965
        %970 = vst [vmem:[#allocation3 + $0x38] sm:$0xf] %v966
        %v971 = vld [vmem:[#allocation2 + $0x8] sm:$0xff]
        %v972 = vld [vmem:[#allocation2 + $0x10] sm:$0xff]
        %v973 = vld [vmem:[#allocation2 + $0x18] sm:$0xff]
        %v974 = vld [vmem:[#allocation2 + $0x20] sm:$0xff]
        %v975 = vpack.c.bf16 %v971, %v971
        %v976 = vpack.c.bf16 %v972, %v972
        %v977 = vpack.c.bf16 %v973, %v973
        %v978 = vpack.c.bf16 %v974, %v974
        %v983 = vunpack.c.l.b16 %v975
        %v984 = vunpack.c.l.b16 %v976
        %v985 = vunpack.c.l.b16 %v977
        %v986 = vunpack.c.l.b16 %v978
        %v987 = vpack.c.b16 %v984, %v983
        %v988 = vpack.c.b16 %v986, %v985
        %989 = vrot.lane.b32.xlu0 %v987, 127
        %v990 = vpop.permute.xlu0 %989
        %991 = vrot.lane.b32.xlu0 %v988, 127
        %v992 = vpop.permute.xlu0 %991
        %v993 = vrot.slane %v990, 4
        %v994 = vrot.slane %v992, 4
        %v995 = vsel %vm360, %v993, %v994
        %v996 = vsel %vm508, %v990, %v995
        %v997 = vsel %vm508, %v992, %v994
        %1000 = vst [vmem:[#allocation3 + $0x3c] sm:$0xff] %v996
        %1001 = vst [vmem:[#allocation3 + $0x44] sm:$0xf] %v997
        %v1002 = vld [vmem:[#allocation2 + $0x8] sm:$0xff]
        %v1003 = vld [vmem:[#allocation2 + $0x10] sm:$0xff]
        %v1004 = vld [vmem:[#allocation2 + $0x18] sm:$0xff]
        %v1005 = vld [vmem:[#allocation2 + $0x20] sm:$0xff]
        %v1006 = vpack.c.bf16 %v1002, %v1002
        %v1007 = vpack.c.bf16 %v1003, %v1003
        %v1008 = vpack.c.bf16 %v1004, %v1004
        %v1009 = vpack.c.bf16 %v1005, %v1005
        %v1014 = vunpack.c.l.b16 %v1006
        %v1015 = vunpack.c.l.b16 %v1007
        %v1016 = vunpack.c.l.b16 %v1008
        %v1017 = vunpack.c.l.b16 %v1009
        %v1018 = vpack.c.b16 %v1015, %v1014
        %v1019 = vpack.c.b16 %v1017, %v1016
        %1020 = vrot.lane.b32.xlu0 %v1018, 111
        %v1021 = vpop.permute.xlu0 %1020
        %1022 = vrot.lane.b32.xlu0 %v1019, 111
        %v1023 = vpop.permute.xlu0 %1022
        %v1024 = vrot.slane %v1021, 4
        %v1025 = vrot.slane %v1023, 4
        %v1026 = vsel %vm360, %v1024, %v1025
        %v1027 = vsel %vm540, %v1021, %v1026
        %v1028 = vsel %vm540, %v1023, %v1025
        %1031 = vst [vmem:[#allocation3 + $0x48] sm:$0xff] %v1027
        %1032 = vst [vmem:[#allocation3 + $0x50] sm:$0xf] %v1028
        %v1033 = vld [vmem:[#allocation2 + $0x8] sm:$0xff]
        %v1034 = vld [vmem:[#allocation2 + $0x10] sm:$0xff]
        %v1035 = vld [vmem:[#allocation2 + $0x18] sm:$0xff]
        %v1036 = vld [vmem:[#allocation2 + $0x20] sm:$0xff]
        %v1037 = vpack.c.bf16 %v1033, %v1033
        %v1038 = vpack.c.bf16 %v1034, %v1034
        %v1039 = vpack.c.bf16 %v1035, %v1035
        %v1040 = vpack.c.bf16 %v1036, %v1036
        %v1045 = vunpack.c.l.b16 %v1037
        %v1046 = vunpack.c.l.b16 %v1038
        %v1047 = vunpack.c.l.b16 %v1039
        %v1048 = vunpack.c.l.b16 %v1040
        %v1049 = vpack.c.b16 %v1046, %v1045
        %v1050 = vpack.c.b16 %v1048, %v1047
        %1051 = vrot.lane.b32.xlu0 %v1049, 110
        %v1052 = vpop.permute.xlu0 %1051
        %1053 = vrot.lane.b32.xlu0 %v1050, 110
        %v1054 = vpop.permute.xlu0 %1053
        %v1055 = vrot.slane %v1052, 4
        %v1056 = vrot.slane %v1054, 4
        %v1057 = vsel %vm360, %v1055, %v1056
        %v1058 = vsel %vm572, %v1052, %v1057
        %v1059 = vsel %vm572, %v1054, %v1056
        %1062 = vst [vmem:[#allocation3 + $0x54] sm:$0xff] %v1058
        %1063 = vst [vmem:[#allocation3 + $0x5c] sm:$0xf] %v1059
        %v1064 = vld [vmem:[#allocation2 + $0x8] sm:$0xff]
        %v1065 = vld [vmem:[#allocation2 + $0x10] sm:$0xff]
        %v1066 = vld [vmem:[#allocation2 + $0x18] sm:$0xff]
        %v1067 = vld [vmem:[#allocation2 + $0x20] sm:$0xff]
        %v1068 = vpack.c.bf16 %v1064, %v1064
        %v1069 = vpack.c.bf16 %v1065, %v1065
        %v1070 = vpack.c.bf16 %v1066, %v1066
        %v1071 = vpack.c.bf16 %v1067, %v1067
        %v1076 = vunpack.c.l.b16 %v1068
        %v1077 = vunpack.c.l.b16 %v1069
        %v1078 = vunpack.c.l.b16 %v1070
        %v1079 = vunpack.c.l.b16 %v1071
        %v1080 = vpack.c.b16 %v1077, %v1076
        %v1081 = vpack.c.b16 %v1079, %v1078
        %1082 = vrot.lane.b32.xlu0 %v1080, 109
        %v1083 = vpop.permute.xlu0 %1082
        %1084 = vrot.lane.b32.xlu0 %v1081, 109
        %v1085 = vpop.permute.xlu0 %1084
        %v1086 = vrot.slane %v1083, 4
        %v1087 = vrot.slane %v1085, 4
        %v1088 = vsel %vm360, %v1086, %v1087
        %v1089 = vsel %vm604, %v1083, %v1088
        %v1090 = vsel %vm604, %v1085, %v1087
        %1093 = vst [vmem:[#allocation3 + $0x60] sm:$0xff] %v1089
        %1094 = vst [vmem:[#allocation3 + $0x68] sm:$0xf] %v1090
        %v1095 = vld [vmem:[#allocation3] sm:$0xff]
        %v1096 = vld [vmem:[#allocation3 + $0x8] sm:$0xf]
        %v1097 = vld [vmem:[#allocation3 + $0xc] sm:$0xff]
        %v1098 = vld [vmem:[#allocation3 + $0x14] sm:$0xf]
        %v1099 = vld [vmem:[#allocation3 + $0x18] sm:$0xff]
        %v1100 = vld [vmem:[#allocation3 + $0x20] sm:$0xf]
        %v1101 = vld [vmem:[#allocation3 + $0x24] sm:$0xff]
        %v1102 = vld [vmem:[#allocation3 + $0x2c] sm:$0xf]
        %v1103 = vld [vmem:[#allocation3 + $0x30] sm:$0xff]
        %v1104 = vld [vmem:[#allocation3 + $0x38] sm:$0xf]
        %v1105 = vld [vmem:[#allocation3 + $0x3c] sm:$0xff]
        %v1106 = vld [vmem:[#allocation3 + $0x44] sm:$0xf]
        %v1107 = vld [vmem:[#allocation3 + $0x48] sm:$0xff]
        %v1108 = vld [vmem:[#allocation3 + $0x50] sm:$0xf]
        %v1109 = vld [vmem:[#allocation3 + $0x54] sm:$0xff]
        %v1110 = vld [vmem:[#allocation3 + $0x5c] sm:$0xf]
        %v1111 = vld [vmem:[#allocation3 + $0x60] sm:$0xff]
        %v1112 = vld [vmem:[#allocation3 + $0x68] sm:$0xf]
        %1114 = vset.pattern.permute.xlu0 0
        %1115 = vperm.xlu0 %1114, %v828
        %v1116 = vpop.permute.xlu0 %1115
        %v1136 = vunpack.c.l.b16 %v1095
        %v1137 = vunpack.c.h.b16 %v1095
        %v1138 = vunpack.c.l.b16 %v1096
        %v1139 = vunpack.c.l.b16 %v1097
        %v1140 = vunpack.c.h.b16 %v1097
        %v1141 = vunpack.c.l.b16 %v1098
        %v1142 = vunpack.c.l.b16 %v1099
        %v1143 = vunpack.c.h.b16 %v1099
        %v1144 = vunpack.c.l.b16 %v1100
        %v1145 = vunpack.c.l.b16 %v1101
        %v1146 = vunpack.c.h.b16 %v1101
        %v1147 = vunpack.c.l.b16 %v1102
        %v1148 = vunpack.c.l.b16 %v1103
        %v1149 = vunpack.c.h.b16 %v1103
        %v1150 = vunpack.c.l.b16 %v1104
        %v1151 = vunpack.c.l.b16 %v1105
        %v1152 = vunpack.c.h.b16 %v1105
        %v1153 = vunpack.c.l.b16 %v1106
        %v1154 = vunpack.c.l.b16 %v1107
        %v1155 = vunpack.c.h.b16 %v1107
        %v1156 = vunpack.c.l.b16 %v1108
        %v1157 = vunpack.c.l.b16 %v1109
        %v1158 = vunpack.c.h.b16 %v1109
        %v1159 = vunpack.c.l.b16 %v1110
        %v1160 = vunpack.c.l.b16 %v1111
        %v1161 = vunpack.c.h.b16 %v1111
        %v1162 = vunpack.c.l.b16 %v1112
        %v1163 = vpack.c.b16 %v1139, %v1136
        %v1164 = vpack.c.b16 %v1140, %v1137
        %v1165 = vpack.c.b16 %v1141, %v1138
        %v1166 = vpack.c.b16 %v1145, %v1142
        %v1167 = vpack.c.b16 %v1146, %v1143
        %v1168 = vpack.c.b16 %v1147, %v1144
        %v1169 = vpack.c.b16 %v1151, %v1148
        %v1170 = vpack.c.b16 %v1152, %v1149
        %v1171 = vpack.c.b16 %v1153, %v1150
        %v1172 = vpack.c.b16 %v1157, %v1154
        %v1173 = vpack.c.b16 %v1158, %v1155
        %v1174 = vpack.c.b16 %v1159, %v1156
        %v1175 = vpack.c.b16 %v1160, %v1160
        %v1176 = vpack.c.b16 %v1161, %v1161
        %v1177 = vpack.c.b16 %v1162, %v1162
        %v1191 = vsel %vm706, %v826, 0
        %v1194 = vsel %vm710, %v1175, 0
        %v1197 = vsel %vm710, %v1176, 0
        %v1200 = vsel %vm710, %v1177, 0
        %1202 = vmatprep.subr.bf16.mxu0 %v1164
        %1203 = vmatpush1.bf16.msra.mxu0 %v1163
        %1204 = vmatprep.subr.bf16.mxu0 %v1167
        %1205 = vmatpush1.bf16.msra.mxu0 %v1166
        %1206 = vmatprep.subr.bf16.mxu0 %v1170
        %1207 = vmatpush1.bf16.msra.mxu0 %v1169
        %1208 = vmatprep.subr.bf16.mxu0 %v1173
        %1209 = vmatpush1.bf16.msra.mxu0 %v1172
        %1210 = vmatprep.subr.bf16.mxu0 %v1197
        %1211 = vmatpush1.bf16.msra.mxu0 %v1194
        %1212 = vmatprep.subr.bf16.mxu0 0
        %1213 = vmatpush1.bf16.msra.mxu0 0
        %1214 = vmatprep.subr.bf16.mxu0 0
        %1215 = vmatpush1.bf16.msra.mxu0 0
        %1216 = vmatprep.subr.bf16.mxu0 0
        %1217 = vmatpush1.bf16.msra.mxu0 0
        %1218 = vmatprep.subr.bf16.mxu0 0
        %1219 = vmatpush1.bf16.msra.mxu0 0
        %1220 = vmatprep.subr.bf16.mxu0 0
        %1221 = vmatpush1.bf16.msra.mxu0 0
        %1222 = vmatprep.subr.bf16.mxu0 0
        %1223 = vmatpush1.bf16.msra.mxu0 0
        %1224 = vmatprep.subr.bf16.mxu0 0
        %1225 = vmatpush1.bf16.msra.mxu0 0
        %1226 = vmatprep.subr.bf16.mxu0 0
        %1227 = vmatpush1.bf16.msra.mxu0 0
        %1228 = vmatprep.subr.bf16.mxu0 0
        %1229 = vmatpush1.bf16.msra.mxu0 0
        %1230 = vmatprep.subr.bf16.mxu0 0
        %1231 = vmatpush1.bf16.msra.mxu0 0
        %1232 = vmatprep.subr.bf16.mxu0 0
        %1233 = vmatpush1.bf16.msra.mxu0 0
        %1234 = vmatprep.mubr.bf16.mxu0 0
        %1235 = vmatmul.mubr.bf16.gmra.mrb[0].mxu0 %v1191
        %v1236 = vpop.f32.mrb[0].mxu0
        %v1237 = vadd.f32 %v1116, %v1236
        %v1238 = vpop.f32.mrb[0].mxu0
        %v1239 = vadd.f32 %v1116, %v1238
        %v1240 = vpop.f32.mrb[0].mxu0
        %v1241 = vpop.f32.mrb[0].mxu0
        %1242 = vdwg.mxu0
        %1243 = vmatprep.subr.bf16.mxu0 0
        %1244 = vmatpush1.bf16.msra.mxu0 %v1165
        %1245 = vmatprep.subr.bf16.mxu0 0
        %1246 = vmatpush1.bf16.msra.mxu0 %v1168
        %1247 = vmatprep.subr.bf16.mxu0 0
        %1248 = vmatpush1.bf16.msra.mxu0 %v1171
        %1249 = vmatprep.subr.bf16.mxu0 0
        %1250 = vmatpush1.bf16.msra.mxu0 %v1174
        %1251 = vmatprep.subr.bf16.mxu0 0
        %1252 = vmatpush1.bf16.msra.mxu0 %v1200
        %1253 = vmatprep.subr.bf16.mxu0 0
        %1254 = vmatpush1.bf16.msra.mxu0 0
        %1255 = vmatprep.subr.bf16.mxu0 0
        %1256 = vmatpush1.bf16.msra.mxu0 0
        %1257 = vmatprep.subr.bf16.mxu0 0
        %1258 = vmatpush1.bf16.msra.mxu0 0
        %1259 = vmatprep.subr.bf16.mxu0 0
        %1260 = vmatpush1.bf16.msra.mxu0 0
        %1261 = vmatprep.subr.bf16.mxu0 0
        %1262 = vmatpush1.bf16.msra.mxu0 0
        %1263 = vmatprep.subr.bf16.mxu0 0
        %1264 = vmatpush1.bf16.msra.mxu0 0
        %1265 = vmatprep.subr.bf16.mxu0 0
        %1266 = vmatpush1.bf16.msra.mxu0 0
        %1267 = vmatprep.subr.bf16.mxu0 0
        %1268 = vmatpush1.bf16.msra.mxu0 0
        %1269 = vmatprep.subr.bf16.mxu0 0
        %1270 = vmatpush1.bf16.msra.mxu0 0
        %1271 = vmatprep.subr.bf16.mxu0 0
        %1272 = vmatpush1.bf16.msra.mxu0 0
        %1273 = vmatprep.subr.bf16.mxu0 0
        %1274 = vmatpush1.bf16.msra.mxu0 0
        %1275 = vmatprep.mubr.bf16.mxu0 0
        %1276 = vmatmul.mubr.bf16.gmra.mrb[0].mxu0 %v1191
        %v1277 = vpop.f32.mrb[0].mxu0
        %v1278 = vadd.f32 %v1116, %v1277
        %v1279 = vpop.f32.mrb[0].mxu0
        %v1280 = vpop.f32.mrb[0].mxu0
        %v1281 = vpop.f32.mrb[0].mxu0
        %1282 = vdwg.mxu0
        %v1283 = vmul.f32 %v1237, %v805
        %v1284 = vmul.f32 %v1239, %v809
        %v1285 = vmul.f32 %v1278, %v813
        %v1286 = vmax.f32 %v1283, 0.0
        %v1287 = vmax.f32 %v1284, 0.0
        %v1288 = vmax.f32 %v1285, 0.0
        %1289 = vst [vmem:[#allocation2 + $0x8] sm:$0xff] %v1286
        %1290 = vst [vmem:[#allocation2 + $0x10] sm:$0xff] %v1287
        %1291 = vst [vmem:[#allocation2 + $0x18] sm:$0xff] %v1288
        %s1292 = scalar_lea.vmem %s3, 4
        %v1293 = vld [vmem:[%s1292] sm:$0xf]
        %s1294 = scalar_lea.vmem %s4, 16
        %v1295 = vld [vmem:[%s1294] sm:$0xff]
        %v1296 = vld [vmem:[#allocation2] sm:$0xff]
        %v1297 = vld [vmem:[#allocation2 + $0x8] sm:$0xff]
        %v1298 = vld [vmem:[#allocation2 + $0x10] sm:$0xff]
        %v1299 = vld [vmem:[#allocation2 + $0x18] sm:$0xff]
        %v1300 = vpack.c.bf16 %v1296, %v1296
        %v1301 = vpack.c.bf16 %v1297, %v1297
        %v1302 = vpack.c.bf16 %v1298, %v1298
        %v1303 = vpack.c.bf16 %v1299, %v1299
        %v1308 = vunpack.c.l.b16 %v1300
        %v1309 = vunpack.c.l.b16 %v1301
        %v1310 = vunpack.c.l.b16 %v1302
        %v1311 = vunpack.c.l.b16 %v1303
        %v1312 = vpack.c.b16 %v1309, %v1308
        %v1313 = vpack.c.b16 %v1311, %v1310
        %1314 = vrot.lane.b32.xlu0 %v1312, 19
        %v1315 = vpop.permute.xlu0 %1314
        %1316 = vrot.lane.b32.xlu0 %v1313, 19
        %v1317 = vpop.permute.xlu0 %1316
        %v1318 = vrot.slane %v1315, 4
        %v1319 = vrot.slane %v1317, 4
        %v1320 = vsel %vm360, %v1318, %v1319
        %v1321 = vsel %vm362, %v1315, %v1320
        %v1322 = vsel %vm362, %v1317, %v1319
        %1325 = vst [vmem:[#allocation3] sm:$0xff] %v1321
        %1326 = vst [vmem:[#allocation3 + $0x8] sm:$0xf] %v1322
        %v1327 = vld [vmem:[#allocation2] sm:$0xff]
        %v1328 = vld [vmem:[#allocation2 + $0x8] sm:$0xff]
        %v1329 = vld [vmem:[#allocation2 + $0x10] sm:$0xff]
        %v1330 = vld [vmem:[#allocation2 + $0x18] sm:$0xff]
        %v1331 = vpack.c.bf16 %v1327, %v1327
        %v1332 = vpack.c.bf16 %v1328, %v1328
        %v1333 = vpack.c.bf16 %v1329, %v1329
        %v1334 = vpack.c.bf16 %v1330, %v1330
        %v1339 = vunpack.c.l.b16 %v1331
        %v1340 = vunpack.c.l.b16 %v1332
        %v1341 = vunpack.c.l.b16 %v1333
        %v1342 = vunpack.c.l.b16 %v1334
        %v1343 = vpack.c.b16 %v1340, %v1339
        %v1344 = vpack.c.b16 %v1342, %v1341
        %1345 = vrot.lane.b32.xlu0 %v1343, 18
        %v1346 = vpop.permute.xlu0 %1345
        %1347 = vrot.lane.b32.xlu0 %v1344, 18
        %v1348 = vpop.permute.xlu0 %1347
        %v1349 = vrot.slane %v1346, 4
        %v1350 = vrot.slane %v1348, 4
        %v1351 = vsel %vm360, %v1349, %v1350
        %v1352 = vsel %vm394, %v1346, %v1351
        %v1353 = vsel %vm394, %v1348, %v1350
        %1356 = vst [vmem:[#allocation3 + $0xc] sm:$0xff] %v1352
        %1357 = vst [vmem:[#allocation3 + $0x14] sm:$0xf] %v1353
        %v1358 = vld [vmem:[#allocation2] sm:$0xff]
        %v1359 = vld [vmem:[#allocation2 + $0x8] sm:$0xff]
        %v1360 = vld [vmem:[#allocation2 + $0x10] sm:$0xff]
        %v1361 = vld [vmem:[#allocation2 + $0x18] sm:$0xff]
        %v1362 = vpack.c.bf16 %v1358, %v1358
        %v1363 = vpack.c.bf16 %v1359, %v1359
        %v1364 = vpack.c.bf16 %v1360, %v1360
        %v1365 = vpack.c.bf16 %v1361, %v1361
        %v1370 = vunpack.c.l.b16 %v1362
        %v1371 = vunpack.c.l.b16 %v1363
        %v1372 = vunpack.c.l.b16 %v1364
        %v1373 = vunpack.c.l.b16 %v1365
        %v1374 = vpack.c.b16 %v1371, %v1370
        %v1375 = vpack.c.b16 %v1373, %v1372
        %1376 = vrot.lane.b32.xlu0 %v1374, 17
        %v1377 = vpop.permute.xlu0 %1376
        %1378 = vrot.lane.b32.xlu0 %v1375, 17
        %v1379 = vpop.permute.xlu0 %1378
        %v1380 = vrot.slane %v1377, 4
        %v1381 = vrot.slane %v1379, 4
        %v1382 = vsel %vm360, %v1380, %v1381
        %v1383 = vsel %vm426, %v1377, %v1382
        %v1384 = vsel %vm426, %v1379, %v1381
        %1387 = vst [vmem:[#allocation3 + $0x18] sm:$0xff] %v1383
        %1388 = vst [vmem:[#allocation3 + $0x20] sm:$0xf] %v1384
        %v1389 = vld [vmem:[#allocation2] sm:$0xff]
        %v1390 = vld [vmem:[#allocation2 + $0x8] sm:$0xff]
        %v1391 = vld [vmem:[#allocation2 + $0x10] sm:$0xff]
        %v1392 = vld [vmem:[#allocation2 + $0x18] sm:$0xff]
        %v1393 = vpack.c.bf16 %v1389, %v1389
        %v1394 = vpack.c.bf16 %v1390, %v1390
        %v1395 = vpack.c.bf16 %v1391, %v1391
        %v1396 = vpack.c.bf16 %v1392, %v1392
        %v1401 = vunpack.c.l.b16 %v1393
        %v1402 = vunpack.c.l.b16 %v1394
        %v1403 = vunpack.c.l.b16 %v1395
        %v1404 = vunpack.c.l.b16 %v1396
        %v1405 = vpack.c.b16 %v1402, %v1401
        %v1406 = vpack.c.b16 %v1404, %v1403
        %1407 = vrot.lane.b32.xlu0 %v1405, 1
        %v1408 = vpop.permute.xlu0 %1407
        %1409 = vrot.lane.b32.xlu0 %v1406, 1
        %v1410 = vpop.permute.xlu0 %1409
        %v1411 = vrot.slane %v1408, 4
        %v1412 = vrot.slane %v1410, 4
        %v1413 = vsel %vm360, %v1411, %v1412
        %v1414 = vsel %vm458, %v1408, %v1413
        %v1415 = vsel %vm458, %v1410, %v1412
        %1418 = vst [vmem:[#allocation3 + $0x24] sm:$0xff] %v1414
        %1419 = vst [vmem:[#allocation3 + $0x2c] sm:$0xf] %v1415
        %v1420 = vld [vmem:[#allocation2 + $0x8] sm:$0xff]
        %v1421 = vld [vmem:[#allocation2 + $0x10] sm:$0xff]
        %v1422 = vld [vmem:[#allocation2 + $0x18] sm:$0xff]
        %v1423 = vpack.c.bf16 %v1420, %v1420
        %v1424 = vpack.c.bf16 %v1421, %v1421
        %v1425 = vpack.c.bf16 %v1422, %v1422
        %v1429 = vunpack.c.l.b16 %v1423
        %v1430 = vunpack.c.l.b16 %v1424
        %v1431 = vunpack.c.l.b16 %v1425
        %v1432 = vpack.c.b16 %v1430, %v1429
        %v1433 = vpack.c.b16 %v1431, %v1431
        %1436 = vst [vmem:[#allocation3 + $0x30] sm:$0xff] %v1432
        %1437 = vst [vmem:[#allocation3 + $0x38] sm:$0xf] %v1433
        %v1438 = vld [vmem:[#allocation2 + $0x8] sm:$0xff]
        %v1439 = vld [vmem:[#allocation2 + $0x10] sm:$0xff]
        %v1440 = vld [vmem:[#allocation2 + $0x18] sm:$0xff]
        %v1441 = vld [vmem:[#allocation2 + $0x20] sm:$0xff]
        %v1442 = vpack.c.bf16 %v1438, %v1438
        %v1443 = vpack.c.bf16 %v1439, %v1439
        %v1444 = vpack.c.bf16 %v1440, %v1440
        %v1445 = vpack.c.bf16 %v1441, %v1441
        %v1450 = vunpack.c.l.b16 %v1442
        %v1451 = vunpack.c.l.b16 %v1443
        %v1452 = vunpack.c.l.b16 %v1444
        %v1453 = vunpack.c.l.b16 %v1445
        %v1454 = vpack.c.b16 %v1451, %v1450
        %v1455 = vpack.c.b16 %v1453, %v1452
        %1456 = vrot.lane.b32.xlu0 %v1454, 127
        %v1457 = vpop.permute.xlu0 %1456
        %1458 = vrot.lane.b32.xlu0 %v1455, 127
        %v1459 = vpop.permute.xlu0 %1458
        %v1460 = vrot.slane %v1457, 4
        %v1461 = vrot.slane %v1459, 4
        %v1462 = vsel %vm360, %v1460, %v1461
        %v1463 = vsel %vm508, %v1457, %v1462
        %v1464 = vsel %vm508, %v1459, %v1461
        %1467 = vst [vmem:[#allocation3 + $0x3c] sm:$0xff] %v1463
        %1468 = vst [vmem:[#allocation3 + $0x44] sm:$0xf] %v1464
        %v1469 = vld [vmem:[#allocation2 + $0x8] sm:$0xff]
        %v1470 = vld [vmem:[#allocation2 + $0x10] sm:$0xff]
        %v1471 = vld [vmem:[#allocation2 + $0x18] sm:$0xff]
        %v1472 = vld [vmem:[#allocation2 + $0x20] sm:$0xff]
        %v1473 = vpack.c.bf16 %v1469, %v1469
        %v1474 = vpack.c.bf16 %v1470, %v1470
        %v1475 = vpack.c.bf16 %v1471, %v1471
        %v1476 = vpack.c.bf16 %v1472, %v1472
        %v1481 = vunpack.c.l.b16 %v1473
        %v1482 = vunpack.c.l.b16 %v1474
        %v1483 = vunpack.c.l.b16 %v1475
        %v1484 = vunpack.c.l.b16 %v1476
        %v1485 = vpack.c.b16 %v1482, %v1481
        %v1486 = vpack.c.b16 %v1484, %v1483
        %1487 = vrot.lane.b32.xlu0 %v1485, 111
        %v1488 = vpop.permute.xlu0 %1487
        %1489 = vrot.lane.b32.xlu0 %v1486, 111
        %v1490 = vpop.permute.xlu0 %1489
        %v1491 = vrot.slane %v1488, 4
        %v1492 = vrot.slane %v1490, 4
        %v1493 = vsel %vm360, %v1491, %v1492
        %v1494 = vsel %vm540, %v1488, %v1493
        %v1495 = vsel %vm540, %v1490, %v1492
        %1498 = vst [vmem:[#allocation3 + $0x48] sm:$0xff] %v1494
        %1499 = vst [vmem:[#allocation3 + $0x50] sm:$0xf] %v1495
        %v1500 = vld [vmem:[#allocation2 + $0x8] sm:$0xff]
        %v1501 = vld [vmem:[#allocation2 + $0x10] sm:$0xff]
        %v1502 = vld [vmem:[#allocation2 + $0x18] sm:$0xff]
        %v1503 = vld [vmem:[#allocation2 + $0x20] sm:$0xff]
        %v1504 = vpack.c.bf16 %v1500, %v1500
        %v1505 = vpack.c.bf16 %v1501, %v1501
        %v1506 = vpack.c.bf16 %v1502, %v1502
        %v1507 = vpack.c.bf16 %v1503, %v1503
        %v1512 = vunpack.c.l.b16 %v1504
        %v1513 = vunpack.c.l.b16 %v1505
        %v1514 = vunpack.c.l.b16 %v1506
        %v1515 = vunpack.c.l.b16 %v1507
        %v1516 = vpack.c.b16 %v1513, %v1512
        %v1517 = vpack.c.b16 %v1515, %v1514
        %1518 = vrot.lane.b32.xlu0 %v1516, 110
        %v1519 = vpop.permute.xlu0 %1518
        %1520 = vrot.lane.b32.xlu0 %v1517, 110
        %v1521 = vpop.permute.xlu0 %1520
        %v1522 = vrot.slane %v1519, 4
        %v1523 = vrot.slane %v1521, 4
        %v1524 = vsel %vm360, %v1522, %v1523
        %v1525 = vsel %vm572, %v1519, %v1524
        %v1526 = vsel %vm572, %v1521, %v1523
        %1529 = vst [vmem:[#allocation3 + $0x54] sm:$0xff] %v1525
        %1530 = vst [vmem:[#allocation3 + $0x5c] sm:$0xf] %v1526
        %v1531 = vld [vmem:[#allocation2 + $0x8] sm:$0xff]
        %v1532 = vld [vmem:[#allocation2 + $0x10] sm:$0xff]
        %v1533 = vld [vmem:[#allocation2 + $0x18] sm:$0xff]
        %v1534 = vld [vmem:[#allocation2 + $0x20] sm:$0xff]
        %v1535 = vpack.c.bf16 %v1531, %v1531
        %v1536 = vpack.c.bf16 %v1532, %v1532
        %v1537 = vpack.c.bf16 %v1533, %v1533
        %v1538 = vpack.c.bf16 %v1534, %v1534
        %v1543 = vunpack.c.l.b16 %v1535
        %v1544 = vunpack.c.l.b16 %v1536
        %v1545 = vunpack.c.l.b16 %v1537
        %v1546 = vunpack.c.l.b16 %v1538
        %v1547 = vpack.c.b16 %v1544, %v1543
        %v1548 = vpack.c.b16 %v1546, %v1545
        %1549 = vrot.lane.b32.xlu0 %v1547, 109
        %v1550 = vpop.permute.xlu0 %1549
        %1551 = vrot.lane.b32.xlu0 %v1548, 109
        %v1552 = vpop.permute.xlu0 %1551
        %v1553 = vrot.slane %v1550, 4
        %v1554 = vrot.slane %v1552, 4
        %v1555 = vsel %vm360, %v1553, %v1554
        %v1556 = vsel %vm604, %v1550, %v1555
        %v1557 = vsel %vm604, %v1552, %v1554
        %1560 = vst [vmem:[#allocation3 + $0x60] sm:$0xff] %v1556
        %1561 = vst [vmem:[#allocation3 + $0x68] sm:$0xf] %v1557
        %v1562 = vld [vmem:[#allocation3] sm:$0xff]
        %v1563 = vld [vmem:[#allocation3 + $0x8] sm:$0xf]
        %v1564 = vld [vmem:[#allocation3 + $0xc] sm:$0xff]
        %v1565 = vld [vmem:[#allocation3 + $0x14] sm:$0xf]
        %v1566 = vld [vmem:[#allocation3 + $0x18] sm:$0xff]
        %v1567 = vld [vmem:[#allocation3 + $0x20] sm:$0xf]
        %v1568 = vld [vmem:[#allocation3 + $0x24] sm:$0xff]
        %v1569 = vld [vmem:[#allocation3 + $0x2c] sm:$0xf]
        %v1570 = vld [vmem:[#allocation3 + $0x30] sm:$0xff]
        %v1571 = vld [vmem:[#allocation3 + $0x38] sm:$0xf]
        %v1572 = vld [vmem:[#allocation3 + $0x3c] sm:$0xff]
        %v1573 = vld [vmem:[#allocation3 + $0x44] sm:$0xf]
        %v1574 = vld [vmem:[#allocation3 + $0x48] sm:$0xff]
        %v1575 = vld [vmem:[#allocation3 + $0x50] sm:$0xf]
        %v1576 = vld [vmem:[#allocation3 + $0x54] sm:$0xff]
        %v1577 = vld [vmem:[#allocation3 + $0x5c] sm:$0xf]
        %v1578 = vld [vmem:[#allocation3 + $0x60] sm:$0xff]
        %v1579 = vld [vmem:[#allocation3 + $0x68] sm:$0xf]
        %1581 = vset.pattern.permute.xlu0 0
        %1582 = vperm.xlu0 %1581, %v1295
        %v1583 = vpop.permute.xlu0 %1582
        %v1603 = vunpack.c.l.b16 %v1562
        %v1604 = vunpack.c.h.b16 %v1562
        %v1605 = vunpack.c.l.b16 %v1563
        %v1606 = vunpack.c.l.b16 %v1564
        %v1607 = vunpack.c.h.b16 %v1564
        %v1608 = vunpack.c.l.b16 %v1565
        %v1609 = vunpack.c.l.b16 %v1566
        %v1610 = vunpack.c.h.b16 %v1566
        %v1611 = vunpack.c.l.b16 %v1567
        %v1612 = vunpack.c.l.b16 %v1568
        %v1613 = vunpack.c.h.b16 %v1568
        %v1614 = vunpack.c.l.b16 %v1569
        %v1615 = vunpack.c.l.b16 %v1570
        %v1616 = vunpack.c.h.b16 %v1570
        %v1617 = vunpack.c.l.b16 %v1571
        %v1618 = vunpack.c.l.b16 %v1572
        %v1619 = vunpack.c.h.b16 %v1572
        %v1620 = vunpack.c.l.b16 %v1573
        %v1621 = vunpack.c.l.b16 %v1574
        %v1622 = vunpack.c.h.b16 %v1574
        %v1623 = vunpack.c.l.b16 %v1575
        %v1624 = vunpack.c.l.b16 %v1576
        %v1625 = vunpack.c.h.b16 %v1576
        %v1626 = vunpack.c.l.b16 %v1577
        %v1627 = vunpack.c.l.b16 %v1578
        %v1628 = vunpack.c.h.b16 %v1578
        %v1629 = vunpack.c.l.b16 %v1579
        %v1630 = vpack.c.b16 %v1606, %v1603
        %v1631 = vpack.c.b16 %v1607, %v1604
        %v1632 = vpack.c.b16 %v1608, %v1605
        %v1633 = vpack.c.b16 %v1612, %v1609
        %v1634 = vpack.c.b16 %v1613, %v1610
        %v1635 = vpack.c.b16 %v1614, %v1611
        %v1636 = vpack.c.b16 %v1618, %v1615
        %v1637 = vpack.c.b16 %v1619, %v1616
        %v1638 = vpack.c.b16 %v1620, %v1617
        %v1639 = vpack.c.b16 %v1624, %v1621
        %v1640 = vpack.c.b16 %v1625, %v1622
        %v1641 = vpack.c.b16 %v1626, %v1623
        %v1642 = vpack.c.b16 %v1627, %v1627
        %v1643 = vpack.c.b16 %v1628, %v1628
        %v1644 = vpack.c.b16 %v1629, %v1629
        %v1658 = vsel %vm706, %v1293, 0
        %v1661 = vsel %vm710, %v1642, 0
        %v1664 = vsel %vm710, %v1643, 0
        %v1667 = vsel %vm710, %v1644, 0
        %1669 = vmatprep.subr.bf16.mxu0 %v1631
        %1670 = vmatpush1.bf16.msra.mxu0 %v1630
        %1671 = vmatprep.subr.bf16.mxu0 %v1634
        %1672 = vmatpush1.bf16.msra.mxu0 %v1633
        %1673 = vmatprep.subr.bf16.mxu0 %v1637
        %1674 = vmatpush1.bf16.msra.mxu0 %v1636
        %1675 = vmatprep.subr.bf16.mxu0 %v1640
        %1676 = vmatpush1.bf16.msra.mxu0 %v1639
        %1677 = vmatprep.subr.bf16.mxu0 %v1664
        %1678 = vmatpush1.bf16.msra.mxu0 %v1661
        %1679 = vmatprep.subr.bf16.mxu0 0
        %1680 = vmatpush1.bf16.msra.mxu0 0
        %1681 = vmatprep.subr.bf16.mxu0 0
        %1682 = vmatpush1.bf16.msra.mxu0 0
        %1683 = vmatprep.subr.bf16.mxu0 0
        %1684 = vmatpush1.bf16.msra.mxu0 0
        %1685 = vmatprep.subr.bf16.mxu0 0
        %1686 = vmatpush1.bf16.msra.mxu0 0
        %1687 = vmatprep.subr.bf16.mxu0 0
        %1688 = vmatpush1.bf16.msra.mxu0 0
        %1689 = vmatprep.subr.bf16.mxu0 0
        %1690 = vmatpush1.bf16.msra.mxu0 0
        %1691 = vmatprep.subr.bf16.mxu0 0
        %1692 = vmatpush1.bf16.msra.mxu0 0
        %1693 = vmatprep.subr.bf16.mxu0 0
        %1694 = vmatpush1.bf16.msra.mxu0 0
        %1695 = vmatprep.subr.bf16.mxu0 0
        %1696 = vmatpush1.bf16.msra.mxu0 0
        %1697 = vmatprep.subr.bf16.mxu0 0
        %1698 = vmatpush1.bf16.msra.mxu0 0
        %1699 = vmatprep.subr.bf16.mxu0 0
        %1700 = vmatpush1.bf16.msra.mxu0 0
        %1701 = vmatprep.mubr.bf16.mxu0 0
        %1702 = vmatmul.mubr.bf16.gmra.mrb[0].mxu0 %v1658
        %v1703 = vpop.f32.mrb[0].mxu0
        %v1704 = vadd.f32 %v1583, %v1703
        %v1705 = vpop.f32.mrb[0].mxu0
        %v1706 = vadd.f32 %v1583, %v1705
        %v1707 = vpop.f32.mrb[0].mxu0
        %v1708 = vpop.f32.mrb[0].mxu0
        %1709 = vdwg.mxu0
        %1710 = vmatprep.subr.bf16.mxu0 0
        %1711 = vmatpush1.bf16.msra.mxu0 %v1632
        %1712 = vmatprep.subr.bf16.mxu0 0
        %1713 = vmatpush1.bf16.msra.mxu0 %v1635
        %1714 = vmatprep.subr.bf16.mxu0 0
        %1715 = vmatpush1.bf16.msra.mxu0 %v1638
        %1716 = vmatprep.subr.bf16.mxu0 0
        %1717 = vmatpush1.bf16.msra.mxu0 %v1641
        %1718 = vmatprep.subr.bf16.mxu0 0
        %1719 = vmatpush1.bf16.msra.mxu0 %v1667
        %1720 = vmatprep.subr.bf16.mxu0 0
        %1721 = vmatpush1.bf16.msra.mxu0 0
        %1722 = vmatprep.subr.bf16.mxu0 0
        %1723 = vmatpush1.bf16.msra.mxu0 0
        %1724 = vmatprep.subr.bf16.mxu0 0
        %1725 = vmatpush1.bf16.msra.mxu0 0
        %1726 = vmatprep.subr.bf16.mxu0 0
        %1727 = vmatpush1.bf16.msra.mxu0 0
        %1728 = vmatprep.subr.bf16.mxu0 0
        %1729 = vmatpush1.bf16.msra.mxu0 0
        %1730 = vmatprep.subr.bf16.mxu0 0
        %1731 = vmatpush1.bf16.msra.mxu0 0
        %1732 = vmatprep.subr.bf16.mxu0 0
        %1733 = vmatpush1.bf16.msra.mxu0 0
        %1734 = vmatprep.subr.bf16.mxu0 0
        %1735 = vmatpush1.bf16.msra.mxu0 0
        %1736 = vmatprep.subr.bf16.mxu0 0
        %1737 = vmatpush1.bf16.msra.mxu0 0
        %1738 = vmatprep.subr.bf16.mxu0 0
        %1739 = vmatpush1.bf16.msra.mxu0 0
        %1740 = vmatprep.subr.bf16.mxu0 0
        %1741 = vmatpush1.bf16.msra.mxu0 0
        %1742 = vmatprep.mubr.bf16.mxu0 0
        %1743 = vmatmul.mubr.bf16.gmra.mrb[0].mxu0 %v1658
        %v1744 = vpop.f32.mrb[0].mxu0
        %v1745 = vadd.f32 %v1583, %v1744
        %v1746 = vpop.f32.mrb[0].mxu0
        %v1747 = vpop.f32.mrb[0].mxu0
        %v1748 = vpop.f32.mrb[0].mxu0
        %1749 = vdwg.mxu0
        %v1750 = vld [vmem:[%s326] sm:$0xf]
        %v1751 = vld [vmem:[#allocation7] sm:$0xff]
        %v1752 = vld [vmem:[#allocation7 + $0x8] sm:$0xf]
        %v1753 = vld [vmem:[#allocation7 + $0xc] sm:$0xff]
        %v1754 = vld [vmem:[#allocation7 + $0x14] sm:$0xf]
        %v1755 = vld [vmem:[#allocation7 + $0x18] sm:$0xff]
        %v1756 = vld [vmem:[#allocation7 + $0x20] sm:$0xf]
        %v1757 = vld [vmem:[#allocation7 + $0x24] sm:$0xff]
        %v1758 = vld [vmem:[#allocation7 + $0x2c] sm:$0xf]
        %v1759 = vld [vmem:[#allocation7 + $0x30] sm:$0xff]
        %v1760 = vld [vmem:[#allocation7 + $0x38] sm:$0xf]
        %v1761 = vld [vmem:[#allocation7 + $0x3c] sm:$0xff]
        %v1762 = vld [vmem:[#allocation7 + $0x44] sm:$0xf]
        %v1763 = vld [vmem:[#allocation7 + $0x48] sm:$0xff]
        %v1764 = vld [vmem:[#allocation7 + $0x50] sm:$0xf]
        %v1765 = vld [vmem:[#allocation7 + $0x54] sm:$0xff]
        %v1766 = vld [vmem:[#allocation7 + $0x5c] sm:$0xf]
        %v1783 = vunpack.c.l.b16 %v1751
        %v1784 = vunpack.c.h.b16 %v1751
        %v1785 = vunpack.c.l.b16 %v1752
        %v1786 = vunpack.c.l.b16 %v1753
        %v1787 = vunpack.c.h.b16 %v1753
        %v1788 = vunpack.c.l.b16 %v1754
        %v1789 = vunpack.c.l.b16 %v1755
        %v1790 = vunpack.c.h.b16 %v1755
        %v1791 = vunpack.c.l.b16 %v1756
        %v1792 = vunpack.c.l.b16 %v1757
        %v1793 = vunpack.c.h.b16 %v1757
        %v1794 = vunpack.c.l.b16 %v1758
        %v1795 = vunpack.c.l.b16 %v1759
        %v1796 = vunpack.c.h.b16 %v1759
        %v1797 = vunpack.c.l.b16 %v1760
        %v1798 = vunpack.c.l.b16 %v1761
        %v1799 = vunpack.c.h.b16 %v1761
        %v1800 = vunpack.c.l.b16 %v1762
        %v1801 = vunpack.c.l.b16 %v1763
        %v1802 = vunpack.c.h.b16 %v1763
        %v1803 = vunpack.c.l.b16 %v1764
        %v1804 = vunpack.c.l.b16 %v1765
        %v1805 = vunpack.c.h.b16 %v1765
        %v1806 = vunpack.c.l.b16 %v1766
        %v1807 = vpack.c.b16 %v1786, %v1783
        %v1808 = vpack.c.b16 %v1787, %v1784
        %v1809 = vpack.c.b16 %v1788, %v1785
        %v1810 = vpack.c.b16 %v1792, %v1789
        %v1811 = vpack.c.b16 %v1793, %v1790
        %v1812 = vpack.c.b16 %v1794, %v1791
        %v1813 = vpack.c.b16 %v1798, %v1795
        %v1814 = vpack.c.b16 %v1799, %v1796
        %v1815 = vpack.c.b16 %v1800, %v1797
        %v1816 = vpack.c.b16 %v1804, %v1801
        %v1817 = vpack.c.b16 %v1805, %v1802
        %v1818 = vpack.c.b16 %v1806, %v1803
        %vm1831 = vcmask 523264
        %v1833 = vsel %vm1831, %v1750, 0
        %1835 = vmatprep.subr.bf16.mxu0 %v1808
        %1836 = vmatpush1.bf16.msra.mxu0 %v1807
        %1837 = vmatprep.subr.bf16.mxu0 %v1811
        %1838 = vmatpush1.bf16.msra.mxu0 %v1810
        %1839 = vmatprep.subr.bf16.mxu0 %v1814
        %1840 = vmatpush1.bf16.msra.mxu0 %v1813
        %1841 = vmatprep.subr.bf16.mxu0 %v1817
        %1842 = vmatpush1.bf16.msra.mxu0 %v1816
        %1843 = vmatprep.subr.bf16.mxu0 0
        %1844 = vmatpush1.bf16.msra.mxu0 0
        %1845 = vmatprep.subr.bf16.mxu0 0
        %1846 = vmatpush1.bf16.msra.mxu0 0
        %1847 = vmatprep.subr.bf16.mxu0 0
        %1848 = vmatpush1.bf16.msra.mxu0 0
        %1849 = vmatprep.subr.bf16.mxu0 0
        %1850 = vmatpush1.bf16.msra.mxu0 0
        %1851 = vmatprep.subr.bf16.mxu0 0
        %1852 = vmatpush1.bf16.msra.mxu0 0
        %1853 = vmatprep.subr.bf16.mxu0 0
        %1854 = vmatpush1.bf16.msra.mxu0 0
        %1855 = vmatprep.subr.bf16.mxu0 0
        %1856 = vmatpush1.bf16.msra.mxu0 0
        %1857 = vmatprep.subr.bf16.mxu0 0
        %1858 = vmatpush1.bf16.msra.mxu0 0
        %1859 = vmatprep.subr.bf16.mxu0 0
        %1860 = vmatpush1.bf16.msra.mxu0 0
        %1861 = vmatprep.subr.bf16.mxu0 0
        %1862 = vmatpush1.bf16.msra.mxu0 0
        %1863 = vmatprep.subr.bf16.mxu0 0
        %1864 = vmatpush1.bf16.msra.mxu0 0
        %1865 = vmatprep.subr.bf16.mxu0 0
        %1866 = vmatpush1.bf16.msra.mxu0 0
        %1867 = vmatprep.mubr.bf16.mxu0 0
        %1868 = vmatmul.mubr.bf16.gmra.mrb[0].mxu0 %v1833
        %v1869 = vpop.f32.mrb[0].mxu0
        %v1870 = vadd.f32 0.0, %v1869
        %v1871 = vpop.f32.mrb[0].mxu0
        %v1872 = vadd.f32 0.0, %v1871
        %v1873 = vpop.f32.mrb[0].mxu0
        %v1874 = vpop.f32.mrb[0].mxu0
        %1875 = vdwg.mxu0
        %1876 = vmatprep.subr.bf16.mxu0 0
        %1877 = vmatpush1.bf16.msra.mxu0 %v1809
        %1878 = vmatprep.subr.bf16.mxu0 0
        %1879 = vmatpush1.bf16.msra.mxu0 %v1812
        %1880 = vmatprep.subr.bf16.mxu0 0
        %1881 = vmatpush1.bf16.msra.mxu0 %v1815
        %1882 = vmatprep.subr.bf16.mxu0 0
        %1883 = vmatpush1.bf16.msra.mxu0 %v1818
        %1884 = vmatprep.subr.bf16.mxu0 0
        %1885 = vmatpush1.bf16.msra.mxu0 0
        %1886 = vmatprep.subr.bf16.mxu0 0
        %1887 = vmatpush1.bf16.msra.mxu0 0
        %1888 = vmatprep.subr.bf16.mxu0 0
        %1889 = vmatpush1.bf16.msra.mxu0 0
        %1890 = vmatprep.subr.bf16.mxu0 0
        %1891 = vmatpush1.bf16.msra.mxu0 0
        %1892 = vmatprep.subr.bf16.mxu0 0
        %1893 = vmatpush1.bf16.msra.mxu0 0
        %1894 = vmatprep.subr.bf16.mxu0 0
        %1895 = vmatpush1.bf16.msra.mxu0 0
        %1896 = vmatprep.subr.bf16.mxu0 0
        %1897 = vmatpush1.bf16.msra.mxu0 0
        %1898 = vmatprep.subr.bf16.mxu0 0
        %1899 = vmatpush1.bf16.msra.mxu0 0
        %1900 = vmatprep.subr.bf16.mxu0 0
        %1901 = vmatpush1.bf16.msra.mxu0 0
        %1902 = vmatprep.subr.bf16.mxu0 0
        %1903 = vmatpush1.bf16.msra.mxu0 0
        %1904 = vmatprep.subr.bf16.mxu0 0
        %1905 = vmatpush1.bf16.msra.mxu0 0
        %1906 = vmatprep.subr.bf16.mxu0 0
        %1907 = vmatpush1.bf16.msra.mxu0 0
        %1908 = vmatprep.mubr.bf16.mxu0 0
        %1909 = vmatmul.mubr.bf16.gmra.mrb[0].mxu0 %v1833
        %v1910 = vpop.f32.mrb[0].mxu0
        %v1911 = vadd.f32 0.0, %v1910
        %v1912 = vpop.f32.mrb[0].mxu0
        %v1913 = vpop.f32.mrb[0].mxu0
        %v1914 = vpop.f32.mrb[0].mxu0
        %1915 = vdwg.mxu0
        %v1916 = vadd.f32 %v817, %v1704
        %v1917 = vadd.f32 %v818, %v1706
        %v1918 = vadd.f32 %v819, %v1745
        %v1919 = vadd.f32 %v1916, %v1870
        %v1920 = vadd.f32 %v1917, %v1872
        %v1921 = vadd.f32 %v1918, %v1911
        %v1922 = vmul.f32 %v1919, %v805
        %v1923 = vmul.f32 %v1920, %v809
        %v1924 = vmul.f32 %v1921, %v813
        %v1925 = vmax.f32 %v1922, 0.0
        %v1926 = vmax.f32 %v1923, 0.0
        %v1927 = vmax.f32 %v1924, 0.0
        %1928 = vst [vmem:[#allocation2 + $0x8] sm:$0xff] %v1925
        %1929 = vst [vmem:[#allocation2 + $0x10] sm:$0xff] %v1926
        %1930 = vst [vmem:[#allocation2 + $0x18] sm:$0xff] %v1927
        %s1931 = scalar_lea.vmem %s3, 8
        %v1932 = vld [vmem:[%s1931] sm:$0xf]
        %s1933 = scalar_lea.vmem %s4, 24
        %v1934 = vld [vmem:[%s1933] sm:$0xff]
        %v1935 = vld [vmem:[#allocation2] sm:$0xff]
        %v1936 = vld [vmem:[#allocation2 + $0x8] sm:$0xff]
        %v1937 = vld [vmem:[#allocation2 + $0x10] sm:$0xff]
        %v1938 = vld [vmem:[#allocation2 + $0x18] sm:$0xff]
        %v1939 = vpack.c.bf16 %v1935, %v1935
        %v1940 = vpack.c.bf16 %v1936, %v1936
        %v1941 = vpack.c.bf16 %v1937, %v1937
        %v1942 = vpack.c.bf16 %v1938, %v1938
        %v1947 = vunpack.c.l.b16 %v1939
        %v1948 = vunpack.c.l.b16 %v1940
        %v1949 = vunpack.c.l.b16 %v1941
        %v1950 = vunpack.c.l.b16 %v1942
        %v1951 = vpack.c.b16 %v1948, %v1947
        %v1952 = vpack.c.b16 %v1950, %v1949
        %1953 = vrot.lane.b32.xlu0 %v1951, 19
        %v1954 = vpop.permute.xlu0 %1953
        %1955 = vrot.lane.b32.xlu0 %v1952, 19
        %v1956 = vpop.permute.xlu0 %1955
        %v1957 = vrot.slane %v1954, 4
        %v1958 = vrot.slane %v1956, 4
        %v1959 = vsel %vm360, %v1957, %v1958
        %v1960 = vsel %vm362, %v1954, %v1959
        %v1961 = vsel %vm362, %v1956, %v1958
        %1964 = vst [vmem:[#allocation3] sm:$0xff] %v1960
        %1965 = vst [vmem:[#allocation3 + $0x8] sm:$0xf] %v1961
        %v1966 = vld [vmem:[#allocation2] sm:$0xff]
        %v1967 = vld [vmem:[#allocation2 + $0x8] sm:$0xff]
        %v1968 = vld [vmem:[#allocation2 + $0x10] sm:$0xff]
        %v1969 = vld [vmem:[#allocation2 + $0x18] sm:$0xff]
        %v1970 = vpack.c.bf16 %v1966, %v1966
        %v1971 = vpack.c.bf16 %v1967, %v1967
        %v1972 = vpack.c.bf16 %v1968, %v1968
        %v1973 = vpack.c.bf16 %v1969, %v1969
        %v1978 = vunpack.c.l.b16 %v1970
        %v1979 = vunpack.c.l.b16 %v1971
        %v1980 = vunpack.c.l.b16 %v1972
        %v1981 = vunpack.c.l.b16 %v1973
        %v1982 = vpack.c.b16 %v1979, %v1978
        %v1983 = vpack.c.b16 %v1981, %v1980
        %1984 = vrot.lane.b32.xlu0 %v1982, 18
        %v1985 = vpop.permute.xlu0 %1984
        %1986 = vrot.lane.b32.xlu0 %v1983, 18
        %v1987 = vpop.permute.xlu0 %1986
        %v1988 = vrot.slane %v1985, 4
        %v1989 = vrot.slane %v1987, 4
        %v1990 = vsel %vm360, %v1988, %v1989
        %v1991 = vsel %vm394, %v1985, %v1990
        %v1992 = vsel %vm394, %v1987, %v1989
        %1995 = vst [vmem:[#allocation3 + $0xc] sm:$0xff] %v1991
        %1996 = vst [vmem:[#allocation3 + $0x14] sm:$0xf] %v1992
        %v1997 = vld [vmem:[#allocation2] sm:$0xff]
        %v1998 = vld [vmem:[#allocation2 + $0x8] sm:$0xff]
        %v1999 = vld [vmem:[#allocation2 + $0x10] sm:$0xff]
        %v2000 = vld [vmem:[#allocation2 + $0x18] sm:$0xff]
        %v2001 = vpack.c.bf16 %v1997, %v1997
        %v2002 = vpack.c.bf16 %v1998, %v1998
        %v2003 = vpack.c.bf16 %v1999, %v1999
        %v2004 = vpack.c.bf16 %v2000, %v2000
        %v2009 = vunpack.c.l.b16 %v2001
        %v2010 = vunpack.c.l.b16 %v2002
        %v2011 = vunpack.c.l.b16 %v2003
        %v2012 = vunpack.c.l.b16 %v2004
        %v2013 = vpack.c.b16 %v2010, %v2009
        %v2014 = vpack.c.b16 %v2012, %v2011
        %2015 = vrot.lane.b32.xlu0 %v2013, 17
        %v2016 = vpop.permute.xlu0 %2015
        %2017 = vrot.lane.b32.xlu0 %v2014, 17
        %v2018 = vpop.permute.xlu0 %2017
        %v2019 = vrot.slane %v2016, 4
        %v2020 = vrot.slane %v2018, 4
        %v2021 = vsel %vm360, %v2019, %v2020
        %v2022 = vsel %vm426, %v2016, %v2021
        %v2023 = vsel %vm426, %v2018, %v2020
        %2026 = vst [vmem:[#allocation3 + $0x18] sm:$0xff] %v2022
        %2027 = vst [vmem:[#allocation3 + $0x20] sm:$0xf] %v2023
        %v2028 = vld [vmem:[#allocation2] sm:$0xff]
        %v2029 = vld [vmem:[#allocation2 + $0x8] sm:$0xff]
        %v2030 = vld [vmem:[#allocation2 + $0x10] sm:$0xff]
        %v2031 = vld [vmem:[#allocation2 + $0x18] sm:$0xff]
        %v2032 = vpack.c.bf16 %v2028, %v2028
        %v2033 = vpack.c.bf16 %v2029, %v2029
        %v2034 = vpack.c.bf16 %v2030, %v2030
        %v2035 = vpack.c.bf16 %v2031, %v2031
        %v2040 = vunpack.c.l.b16 %v2032
        %v2041 = vunpack.c.l.b16 %v2033
        %v2042 = vunpack.c.l.b16 %v2034
        %v2043 = vunpack.c.l.b16 %v2035
        %v2044 = vpack.c.b16 %v2041, %v2040
        %v2045 = vpack.c.b16 %v2043, %v2042
        %2046 = vrot.lane.b32.xlu0 %v2044, 1
        %v2047 = vpop.permute.xlu0 %2046
        %2048 = vrot.lane.b32.xlu0 %v2045, 1
        %v2049 = vpop.permute.xlu0 %2048
        %v2050 = vrot.slane %v2047, 4
        %v2051 = vrot.slane %v2049, 4
        %v2052 = vsel %vm360, %v2050, %v2051
        %v2053 = vsel %vm458, %v2047, %v2052
        %v2054 = vsel %vm458, %v2049, %v2051
        %2057 = vst [vmem:[#allocation3 + $0x24] sm:$0xff] %v2053
        %2058 = vst [vmem:[#allocation3 + $0x2c] sm:$0xf] %v2054
        %v2059 = vld [vmem:[#allocation2 + $0x8] sm:$0xff]
        %v2060 = vld [vmem:[#allocation2 + $0x10] sm:$0xff]
        %v2061 = vld [vmem:[#allocation2 + $0x18] sm:$0xff]
        %v2062 = vpack.c.bf16 %v2059, %v2059
        %v2063 = vpack.c.bf16 %v2060, %v2060
        %v2064 = vpack.c.bf16 %v2061, %v2061
        %v2068 = vunpack.c.l.b16 %v2062
        %v2069 = vunpack.c.l.b16 %v2063
        %v2070 = vunpack.c.l.b16 %v2064
        %v2071 = vpack.c.b16 %v2069, %v2068
        %v2072 = vpack.c.b16 %v2070, %v2070
        %2075 = vst [vmem:[#allocation3 + $0x30] sm:$0xff] %v2071
        %2076 = vst [vmem:[#allocation3 + $0x38] sm:$0xf] %v2072
        %v2077 = vld [vmem:[#allocation2 + $0x8] sm:$0xff]
        %v2078 = vld [vmem:[#allocation2 + $0x10] sm:$0xff]
        %v2079 = vld [vmem:[#allocation2 + $0x18] sm:$0xff]
        %v2080 = vld [vmem:[#allocation2 + $0x20] sm:$0xff]
        %v2081 = vpack.c.bf16 %v2077, %v2077
        %v2082 = vpack.c.bf16 %v2078, %v2078
        %v2083 = vpack.c.bf16 %v2079, %v2079
        %v2084 = vpack.c.bf16 %v2080, %v2080
        %v2089 = vunpack.c.l.b16 %v2081
        %v2090 = vunpack.c.l.b16 %v2082
        %v2091 = vunpack.c.l.b16 %v2083
        %v2092 = vunpack.c.l.b16 %v2084
        %v2093 = vpack.c.b16 %v2090, %v2089
        %v2094 = vpack.c.b16 %v2092, %v2091
        %2095 = vrot.lane.b32.xlu0 %v2093, 127
        %v2096 = vpop.permute.xlu0 %2095
        %2097 = vrot.lane.b32.xlu0 %v2094, 127
        %v2098 = vpop.permute.xlu0 %2097
        %v2099 = vrot.slane %v2096, 4
        %v2100 = vrot.slane %v2098, 4
        %v2101 = vsel %vm360, %v2099, %v2100
        %v2102 = vsel %vm508, %v2096, %v2101
        %v2103 = vsel %vm508, %v2098, %v2100
        %2106 = vst [vmem:[#allocation3 + $0x3c] sm:$0xff] %v2102
        %2107 = vst [vmem:[#allocation3 + $0x44] sm:$0xf] %v2103
        %v2108 = vld [vmem:[#allocation2 + $0x8] sm:$0xff]
        %v2109 = vld [vmem:[#allocation2 + $0x10] sm:$0xff]
        %v2110 = vld [vmem:[#allocation2 + $0x18] sm:$0xff]
        %v2111 = vld [vmem:[#allocation2 + $0x20] sm:$0xff]
        %v2112 = vpack.c.bf16 %v2108, %v2108
        %v2113 = vpack.c.bf16 %v2109, %v2109
        %v2114 = vpack.c.bf16 %v2110, %v2110
        %v2115 = vpack.c.bf16 %v2111, %v2111
        %v2120 = vunpack.c.l.b16 %v2112
        %v2121 = vunpack.c.l.b16 %v2113
        %v2122 = vunpack.c.l.b16 %v2114
        %v2123 = vunpack.c.l.b16 %v2115
        %v2124 = vpack.c.b16 %v2121, %v2120
        %v2125 = vpack.c.b16 %v2123, %v2122
        %2126 = vrot.lane.b32.xlu0 %v2124, 111
        %v2127 = vpop.permute.xlu0 %2126
        %2128 = vrot.lane.b32.xlu0 %v2125, 111
        %v2129 = vpop.permute.xlu0 %2128
        %v2130 = vrot.slane %v2127, 4
        %v2131 = vrot.slane %v2129, 4
        %v2132 = vsel %vm360, %v2130, %v2131
        %v2133 = vsel %vm540, %v2127, %v2132
        %v2134 = vsel %vm540, %v2129, %v2131
        %2137 = vst [vmem:[#allocation3 + $0x48] sm:$0xff] %v2133
        %2138 = vst [vmem:[#allocation3 + $0x50] sm:$0xf] %v2134
        %v2139 = vld [vmem:[#allocation2 + $0x8] sm:$0xff]
        %v2140 = vld [vmem:[#allocation2 + $0x10] sm:$0xff]
        %v2141 = vld [vmem:[#allocation2 + $0x18] sm:$0xff]
        %v2142 = vld [vmem:[#allocation2 + $0x20] sm:$0xff]
        %v2143 = vpack.c.bf16 %v2139, %v2139
        %v2144 = vpack.c.bf16 %v2140, %v2140
        %v2145 = vpack.c.bf16 %v2141, %v2141
        %v2146 = vpack.c.bf16 %v2142, %v2142
        %v2151 = vunpack.c.l.b16 %v2143
        %v2152 = vunpack.c.l.b16 %v2144
        %v2153 = vunpack.c.l.b16 %v2145
        %v2154 = vunpack.c.l.b16 %v2146
        %v2155 = vpack.c.b16 %v2152, %v2151
        %v2156 = vpack.c.b16 %v2154, %v2153
        %2157 = vrot.lane.b32.xlu0 %v2155, 110
        %v2158 = vpop.permute.xlu0 %2157
        %2159 = vrot.lane.b32.xlu0 %v2156, 110
        %v2160 = vpop.permute.xlu0 %2159
        %v2161 = vrot.slane %v2158, 4
        %v2162 = vrot.slane %v2160, 4
        %v2163 = vsel %vm360, %v2161, %v2162
        %v2164 = vsel %vm572, %v2158, %v2163
        %v2165 = vsel %vm572, %v2160, %v2162
        %2168 = vst [vmem:[#allocation3 + $0x54] sm:$0xff] %v2164
        %2169 = vst [vmem:[#allocation3 + $0x5c] sm:$0xf] %v2165
        %v2170 = vld [vmem:[#allocation2 + $0x8] sm:$0xff]
        %v2171 = vld [vmem:[#allocation2 + $0x10] sm:$0xff]
        %v2172 = vld [vmem:[#allocation2 + $0x18] sm:$0xff]
        %v2173 = vld [vmem:[#allocation2 + $0x20] sm:$0xff]
        %v2174 = vpack.c.bf16 %v2170, %v2170
        %v2175 = vpack.c.bf16 %v2171, %v2171
        %v2176 = vpack.c.bf16 %v2172, %v2172
        %v2177 = vpack.c.bf16 %v2173, %v2173
        %v2182 = vunpack.c.l.b16 %v2174
        %v2183 = vunpack.c.l.b16 %v2175
        %v2184 = vunpack.c.l.b16 %v2176
        %v2185 = vunpack.c.l.b16 %v2177
        %v2186 = vpack.c.b16 %v2183, %v2182
        %v2187 = vpack.c.b16 %v2185, %v2184
        %2188 = vrot.lane.b32.xlu0 %v2186, 109
        %v2189 = vpop.permute.xlu0 %2188
        %2190 = vrot.lane.b32.xlu0 %v2187, 109
        %v2191 = vpop.permute.xlu0 %2190
        %v2192 = vrot.slane %v2189, 4
        %v2193 = vrot.slane %v2191, 4
        %v2194 = vsel %vm360, %v2192, %v2193
        %v2195 = vsel %vm604, %v2189, %v2194
        %v2196 = vsel %vm604, %v2191, %v2193
        %2199 = vst [vmem:[#allocation3 + $0x60] sm:$0xff] %v2195
        %2200 = vst [vmem:[#allocation3 + $0x68] sm:$0xf] %v2196
        %v2201 = vld [vmem:[#allocation3] sm:$0xff]
        %v2202 = vld [vmem:[#allocation3 + $0x8] sm:$0xf]
        %v2203 = vld [vmem:[#allocation3 + $0xc] sm:$0xff]
        %v2204 = vld [vmem:[#allocation3 + $0x14] sm:$0xf]
        %v2205 = vld [vmem:[#allocation3 + $0x18] sm:$0xff]
        %v2206 = vld [vmem:[#allocation3 + $0x20] sm:$0xf]
        %v2207 = vld [vmem:[#allocation3 + $0x24] sm:$0xff]
        %v2208 = vld [vmem:[#allocation3 + $0x2c] sm:$0xf]
        %v2209 = vld [vmem:[#allocation3 + $0x30] sm:$0xff]
        %v2210 = vld [vmem:[#allocation3 + $0x38] sm:$0xf]
        %v2211 = vld [vmem:[#allocation3 + $0x3c] sm:$0xff]
        %v2212 = vld [vmem:[#allocation3 + $0x44] sm:$0xf]
        %v2213 = vld [vmem:[#allocation3 + $0x48] sm:$0xff]
        %v2214 = vld [vmem:[#allocation3 + $0x50] sm:$0xf]
        %v2215 = vld [vmem:[#allocation3 + $0x54] sm:$0xff]
        %v2216 = vld [vmem:[#allocation3 + $0x5c] sm:$0xf]
        %v2217 = vld [vmem:[#allocation3 + $0x60] sm:$0xff]
        %v2218 = vld [vmem:[#allocation3 + $0x68] sm:$0xf]
        %2220 = vset.pattern.permute.xlu0 0
        %2221 = vperm.xlu0 %2220, %v1934
        %v2222 = vpop.permute.xlu0 %2221
        %v2242 = vunpack.c.l.b16 %v2201
        %v2243 = vunpack.c.h.b16 %v2201
        %v2244 = vunpack.c.l.b16 %v2202
        %v2245 = vunpack.c.l.b16 %v2203
        %v2246 = vunpack.c.h.b16 %v2203
        %v2247 = vunpack.c.l.b16 %v2204
        %v2248 = vunpack.c.l.b16 %v2205
        %v2249 = vunpack.c.h.b16 %v2205
        %v2250 = vunpack.c.l.b16 %v2206
        %v2251 = vunpack.c.l.b16 %v2207
        %v2252 = vunpack.c.h.b16 %v2207
        %v2253 = vunpack.c.l.b16 %v2208
        %v2254 = vunpack.c.l.b16 %v2209
        %v2255 = vunpack.c.h.b16 %v2209
        %v2256 = vunpack.c.l.b16 %v2210
        %v2257 = vunpack.c.l.b16 %v2211
        %v2258 = vunpack.c.h.b16 %v2211
        %v2259 = vunpack.c.l.b16 %v2212
        %v2260 = vunpack.c.l.b16 %v2213
        %v2261 = vunpack.c.h.b16 %v2213
        %v2262 = vunpack.c.l.b16 %v2214
        %v2263 = vunpack.c.l.b16 %v2215
        %v2264 = vunpack.c.h.b16 %v2215
        %v2265 = vunpack.c.l.b16 %v2216
        %v2266 = vunpack.c.l.b16 %v2217
        %v2267 = vunpack.c.h.b16 %v2217
        %v2268 = vunpack.c.l.b16 %v2218
        %v2269 = vpack.c.b16 %v2245, %v2242
        %v2270 = vpack.c.b16 %v2246, %v2243
        %v2271 = vpack.c.b16 %v2247, %v2244
        %v2272 = vpack.c.b16 %v2251, %v2248
        %v2273 = vpack.c.b16 %v2252, %v2249
        %v2274 = vpack.c.b16 %v2253, %v2250
        %v2275 = vpack.c.b16 %v2257, %v2254
        %v2276 = vpack.c.b16 %v2258, %v2255
        %v2277 = vpack.c.b16 %v2259, %v2256
        %v2278 = vpack.c.b16 %v2263, %v2260
        %v2279 = vpack.c.b16 %v2264, %v2261
        %v2280 = vpack.c.b16 %v2265, %v2262
        %v2281 = vpack.c.b16 %v2266, %v2266
        %v2282 = vpack.c.b16 %v2267, %v2267
        %v2283 = vpack.c.b16 %v2268, %v2268
        %v2297 = vsel %vm706, %v1932, 0
        %v2300 = vsel %vm710, %v2281, 0
        %v2303 = vsel %vm710, %v2282, 0
        %v2306 = vsel %vm710, %v2283, 0
        %2308 = vmatprep.subr.bf16.mxu0 %v2270
        %2309 = vmatpush1.bf16.msra.mxu0 %v2269
        %2310 = vmatprep.subr.bf16.mxu0 %v2273
        %2311 = vmatpush1.bf16.msra.mxu0 %v2272
        %2312 = vmatprep.subr.bf16.mxu0 %v2276
        %2313 = vmatpush1.bf16.msra.mxu0 %v2275
        %2314 = vmatprep.subr.bf16.mxu0 %v2279
        %2315 = vmatpush1.bf16.msra.mxu0 %v2278
        %2316 = vmatprep.subr.bf16.mxu0 %v2303
        %2317 = vmatpush1.bf16.msra.mxu0 %v2300
        %2318 = vmatprep.subr.bf16.mxu0 0
        %2319 = vmatpush1.bf16.msra.mxu0 0
        %2320 = vmatprep.subr.bf16.mxu0 0
        %2321 = vmatpush1.bf16.msra.mxu0 0
        %2322 = vmatprep.subr.bf16.mxu0 0
        %2323 = vmatpush1.bf16.msra.mxu0 0
        %2324 = vmatprep.subr.bf16.mxu0 0
        %2325 = vmatpush1.bf16.msra.mxu0 0
        %2326 = vmatprep.subr.bf16.mxu0 0
        %2327 = vmatpush1.bf16.msra.mxu0 0
        %2328 = vmatprep.subr.bf16.mxu0 0
        %2329 = vmatpush1.bf16.msra.mxu0 0
        %2330 = vmatprep.subr.bf16.mxu0 0
        %2331 = vmatpush1.bf16.msra.mxu0 0
        %2332 = vmatprep.subr.bf16.mxu0 0
        %2333 = vmatpush1.bf16.msra.mxu0 0
        %2334 = vmatprep.subr.bf16.mxu0 0
        %2335 = vmatpush1.bf16.msra.mxu0 0
        %2336 = vmatprep.subr.bf16.mxu0 0
        %2337 = vmatpush1.bf16.msra.mxu0 0
        %2338 = vmatprep.subr.bf16.mxu0 0
        %2339 = vmatpush1.bf16.msra.mxu0 0
        %2340 = vmatprep.mubr.bf16.mxu0 0
        %2341 = vmatmul.mubr.bf16.gmra.mrb[0].mxu0 %v2297
        %v2342 = vpop.f32.mrb[0].mxu0
        %v2343 = vadd.f32 %v2222, %v2342
        %v2344 = vpop.f32.mrb[0].mxu0
        %v2345 = vadd.f32 %v2222, %v2344
        %v2346 = vpop.f32.mrb[0].mxu0
        %v2347 = vpop.f32.mrb[0].mxu0
        %2348 = vdwg.mxu0
        %2349 = vmatprep.subr.bf16.mxu0 0
        %2350 = vmatpush1.bf16.msra.mxu0 %v2271
        %2351 = vmatprep.subr.bf16.mxu0 0
        %2352 = vmatpush1.bf16.msra.mxu0 %v2274
        %2353 = vmatprep.subr.bf16.mxu0 0
        %2354 = vmatpush1.bf16.msra.mxu0 %v2277
        %2355 = vmatprep.subr.bf16.mxu0 0
        %2356 = vmatpush1.bf16.msra.mxu0 %v2280
        %2357 = vmatprep.subr.bf16.mxu0 0
        %2358 = vmatpush1.bf16.msra.mxu0 %v2306
        %2359 = vmatprep.subr.bf16.mxu0 0
        %2360 = vmatpush1.bf16.msra.mxu0 0
        %2361 = vmatprep.subr.bf16.mxu0 0
        %2362 = vmatpush1.bf16.msra.mxu0 0
        %2363 = vmatprep.subr.bf16.mxu0 0
        %2364 = vmatpush1.bf16.msra.mxu0 0
        %2365 = vmatprep.subr.bf16.mxu0 0
        %2366 = vmatpush1.bf16.msra.mxu0 0
        %2367 = vmatprep.subr.bf16.mxu0 0
        %2368 = vmatpush1.bf16.msra.mxu0 0
        %2369 = vmatprep.subr.bf16.mxu0 0
        %2370 = vmatpush1.bf16.msra.mxu0 0
        %2371 = vmatprep.subr.bf16.mxu0 0
        %2372 = vmatpush1.bf16.msra.mxu0 0
        %2373 = vmatprep.subr.bf16.mxu0 0
        %2374 = vmatpush1.bf16.msra.mxu0 0
        %2375 = vmatprep.subr.bf16.mxu0 0
        %2376 = vmatpush1.bf16.msra.mxu0 0
        %2377 = vmatprep.subr.bf16.mxu0 0
        %2378 = vmatpush1.bf16.msra.mxu0 0
        %2379 = vmatprep.subr.bf16.mxu0 0
        %2380 = vmatpush1.bf16.msra.mxu0 0
        %2381 = vmatprep.mubr.bf16.mxu0 0
        %2382 = vmatmul.mubr.bf16.gmra.mrb[0].mxu0 %v2297
        %v2383 = vpop.f32.mrb[0].mxu0
        %v2384 = vadd.f32 %v2222, %v2383
        %v2385 = vpop.f32.mrb[0].mxu0
        %v2386 = vpop.f32.mrb[0].mxu0
        %v2387 = vpop.f32.mrb[0].mxu0
        %2388 = vdwg.mxu0
        %v2389 = vmul.f32 %v2343, %v805
        %v2390 = vmul.f32 %v2345, %v809
        %v2391 = vmul.f32 %v2384, %v813
        %v2392 = vmax.f32 %v2389, 0.0
        %v2393 = vmax.f32 %v2390, 0.0
        %v2394 = vmax.f32 %v2391, 0.0
        %2395 = vst [vmem:[#allocation2 + $0x8] sm:$0xff] %v2392
        %2396 = vst [vmem:[#allocation2 + $0x10] sm:$0xff] %v2393
        %2397 = vst [vmem:[#allocation2 + $0x18] sm:$0xff] %v2394
        %s2398 = scalar_lea.vmem %s3, 12
        %v2399 = vld [vmem:[%s2398] sm:$0xf]
        %s2400 = scalar_lea.vmem %s4, 32
        %v2401 = vld [vmem:[%s2400] sm:$0xff]
        %v2402 = vld [vmem:[#allocation2] sm:$0xff]
        %v2403 = vld [vmem:[#allocation2 + $0x8] sm:$0xff]
        %v2404 = vld [vmem:[#allocation2 + $0x10] sm:$0xff]
        %v2405 = vld [vmem:[#allocation2 + $0x18] sm:$0xff]
        %v2406 = vpack.c.bf16 %v2402, %v2402
        %v2407 = vpack.c.bf16 %v2403, %v2403
        %v2408 = vpack.c.bf16 %v2404, %v2404
        %v2409 = vpack.c.bf16 %v2405, %v2405
        %v2414 = vunpack.c.l.b16 %v2406
        %v2415 = vunpack.c.l.b16 %v2407
        %v2416 = vunpack.c.l.b16 %v2408
        %v2417 = vunpack.c.l.b16 %v2409
        %v2418 = vpack.c.b16 %v2415, %v2414
        %v2419 = vpack.c.b16 %v2417, %v2416
        %2420 = vrot.lane.b32.xlu0 %v2418, 19
        %v2421 = vpop.permute.xlu0 %2420
        %2422 = vrot.lane.b32.xlu0 %v2419, 19
        %v2423 = vpop.permute.xlu0 %2422
        %v2424 = vrot.slane %v2421, 4
        %v2425 = vrot.slane %v2423, 4
        %v2426 = vsel %vm360, %v2424, %v2425
        %v2427 = vsel %vm362, %v2421, %v2426
        %v2428 = vsel %vm362, %v2423, %v2425
        %2431 = vst [vmem:[#allocation3] sm:$0xff] %v2427
        %2432 = vst [vmem:[#allocation3 + $0x8] sm:$0xf] %v2428
        %v2433 = vld [vmem:[#allocation2] sm:$0xff]
        %v2434 = vld [vmem:[#allocation2 + $0x8] sm:$0xff]
        %v2435 = vld [vmem:[#allocation2 + $0x10] sm:$0xff]
        %v2436 = vld [vmem:[#allocation2 + $0x18] sm:$0xff]
        %v2437 = vpack.c.bf16 %v2433, %v2433
        %v2438 = vpack.c.bf16 %v2434, %v2434
        %v2439 = vpack.c.bf16 %v2435, %v2435
        %v2440 = vpack.c.bf16 %v2436, %v2436
        %v2445 = vunpack.c.l.b16 %v2437
        %v2446 = vunpack.c.l.b16 %v2438
        %v2447 = vunpack.c.l.b16 %v2439
        %v2448 = vunpack.c.l.b16 %v2440
        %v2449 = vpack.c.b16 %v2446, %v2445
        %v2450 = vpack.c.b16 %v2448, %v2447
        %2451 = vrot.lane.b32.xlu0 %v2449, 18
        %v2452 = vpop.permute.xlu0 %2451
        %2453 = vrot.lane.b32.xlu0 %v2450, 18
        %v2454 = vpop.permute.xlu0 %2453
        %v2455 = vrot.slane %v2452, 4
        %v2456 = vrot.slane %v2454, 4
        %v2457 = vsel %vm360, %v2455, %v2456
        %v2458 = vsel %vm394, %v2452, %v2457
        %v2459 = vsel %vm394, %v2454, %v2456
        %2462 = vst [vmem:[#allocation3 + $0xc] sm:$0xff] %v2458
        %2463 = vst [vmem:[#allocation3 + $0x14] sm:$0xf] %v2459
        %v2464 = vld [vmem:[#allocation2] sm:$0xff]
        %v2465 = vld [vmem:[#allocation2 + $0x8] sm:$0xff]
        %v2466 = vld [vmem:[#allocation2 + $0x10] sm:$0xff]
        %v2467 = vld [vmem:[#allocation2 + $0x18] sm:$0xff]
        %v2468 = vpack.c.bf16 %v2464, %v2464
        %v2469 = vpack.c.bf16 %v2465, %v2465
        %v2470 = vpack.c.bf16 %v2466, %v2466
        %v2471 = vpack.c.bf16 %v2467, %v2467
        %v2476 = vunpack.c.l.b16 %v2468
        %v2477 = vunpack.c.l.b16 %v2469
        %v2478 = vunpack.c.l.b16 %v2470
        %v2479 = vunpack.c.l.b16 %v2471
        %v2480 = vpack.c.b16 %v2477, %v2476
        %v2481 = vpack.c.b16 %v2479, %v2478
        %2482 = vrot.lane.b32.xlu0 %v2480, 17
        %v2483 = vpop.permute.xlu0 %2482
        %2484 = vrot.lane.b32.xlu0 %v2481, 17
        %v2485 = vpop.permute.xlu0 %2484
        %v2486 = vrot.slane %v2483, 4
        %v2487 = vrot.slane %v2485, 4
        %v2488 = vsel %vm360, %v2486, %v2487
        %v2489 = vsel %vm426, %v2483, %v2488
        %v2490 = vsel %vm426, %v2485, %v2487
        %2493 = vst [vmem:[#allocation3 + $0x18] sm:$0xff] %v2489
        %2494 = vst [vmem:[#allocation3 + $0x20] sm:$0xf] %v2490
        %v2495 = vld [vmem:[#allocation2] sm:$0xff]
        %v2496 = vld [vmem:[#allocation2 + $0x8] sm:$0xff]
        %v2497 = vld [vmem:[#allocation2 + $0x10] sm:$0xff]
        %v2498 = vld [vmem:[#allocation2 + $0x18] sm:$0xff]
        %v2499 = vpack.c.bf16 %v2495, %v2495
        %v2500 = vpack.c.bf16 %v2496, %v2496
        %v2501 = vpack.c.bf16 %v2497, %v2497
        %v2502 = vpack.c.bf16 %v2498, %v2498
        %v2507 = vunpack.c.l.b16 %v2499
        %v2508 = vunpack.c.l.b16 %v2500
        %v2509 = vunpack.c.l.b16 %v2501
        %v2510 = vunpack.c.l.b16 %v2502
        %v2511 = vpack.c.b16 %v2508, %v2507
        %v2512 = vpack.c.b16 %v2510, %v2509
        %2513 = vrot.lane.b32.xlu0 %v2511, 1
        %v2514 = vpop.permute.xlu0 %2513
        %2515 = vrot.lane.b32.xlu0 %v2512, 1
        %v2516 = vpop.permute.xlu0 %2515
        %v2517 = vrot.slane %v2514, 4
        %v2518 = vrot.slane %v2516, 4
        %v2519 = vsel %vm360, %v2517, %v2518
        %v2520 = vsel %vm458, %v2514, %v2519
        %v2521 = vsel %vm458, %v2516, %v2518
        %2524 = vst [vmem:[#allocation3 + $0x24] sm:$0xff] %v2520
        %2525 = vst [vmem:[#allocation3 + $0x2c] sm:$0xf] %v2521
        %v2526 = vld [vmem:[#allocation2 + $0x8] sm:$0xff]
        %v2527 = vld [vmem:[#allocation2 + $0x10] sm:$0xff]
        %v2528 = vld [vmem:[#allocation2 + $0x18] sm:$0xff]
        %v2529 = vpack.c.bf16 %v2526, %v2526
        %v2530 = vpack.c.bf16 %v2527, %v2527
        %v2531 = vpack.c.bf16 %v2528, %v2528
        %v2535 = vunpack.c.l.b16 %v2529
        %v2536 = vunpack.c.l.b16 %v2530
        %v2537 = vunpack.c.l.b16 %v2531
        %v2538 = vpack.c.b16 %v2536, %v2535
        %v2539 = vpack.c.b16 %v2537, %v2537
        %2542 = vst [vmem:[#allocation3 + $0x30] sm:$0xff] %v2538
        %2543 = vst [vmem:[#allocation3 + $0x38] sm:$0xf] %v2539
        %v2544 = vld [vmem:[#allocation2 + $0x8] sm:$0xff]
        %v2545 = vld [vmem:[#allocation2 + $0x10] sm:$0xff]
        %v2546 = vld [vmem:[#allocation2 + $0x18] sm:$0xff]
        %v2547 = vld [vmem:[#allocation2 + $0x20] sm:$0xff]
        %v2548 = vpack.c.bf16 %v2544, %v2544
        %v2549 = vpack.c.bf16 %v2545, %v2545
        %v2550 = vpack.c.bf16 %v2546, %v2546
        %v2551 = vpack.c.bf16 %v2547, %v2547
        %v2556 = vunpack.c.l.b16 %v2548
        %v2557 = vunpack.c.l.b16 %v2549
        %v2558 = vunpack.c.l.b16 %v2550
        %v2559 = vunpack.c.l.b16 %v2551
        %v2560 = vpack.c.b16 %v2557, %v2556
        %v2561 = vpack.c.b16 %v2559, %v2558
        %2562 = vrot.lane.b32.xlu0 %v2560, 127
        %v2563 = vpop.permute.xlu0 %2562
        %2564 = vrot.lane.b32.xlu0 %v2561, 127
        %v2565 = vpop.permute.xlu0 %2564
        %v2566 = vrot.slane %v2563, 4
        %v2567 = vrot.slane %v2565, 4
        %v2568 = vsel %vm360, %v2566, %v2567
        %v2569 = vsel %vm508, %v2563, %v2568
        %v2570 = vsel %vm508, %v2565, %v2567
        %2573 = vst [vmem:[#allocation3 + $0x3c] sm:$0xff] %v2569
        %2574 = vst [vmem:[#allocation3 + $0x44] sm:$0xf] %v2570
        %v2575 = vld [vmem:[#allocation2 + $0x8] sm:$0xff]
        %v2576 = vld [vmem:[#allocation2 + $0x10] sm:$0xff]
        %v2577 = vld [vmem:[#allocation2 + $0x18] sm:$0xff]
        %v2578 = vld [vmem:[#allocation2 + $0x20] sm:$0xff]
        %v2579 = vpack.c.bf16 %v2575, %v2575
        %v2580 = vpack.c.bf16 %v2576, %v2576
        %v2581 = vpack.c.bf16 %v2577, %v2577
        %v2582 = vpack.c.bf16 %v2578, %v2578
        %v2587 = vunpack.c.l.b16 %v2579
        %v2588 = vunpack.c.l.b16 %v2580
        %v2589 = vunpack.c.l.b16 %v2581
        %v2590 = vunpack.c.l.b16 %v2582
        %v2591 = vpack.c.b16 %v2588, %v2587
        %v2592 = vpack.c.b16 %v2590, %v2589
        %2593 = vrot.lane.b32.xlu0 %v2591, 111
        %v2594 = vpop.permute.xlu0 %2593
        %2595 = vrot.lane.b32.xlu0 %v2592, 111
        %v2596 = vpop.permute.xlu0 %2595
        %v2597 = vrot.slane %v2594, 4
        %v2598 = vrot.slane %v2596, 4
        %v2599 = vsel %vm360, %v2597, %v2598
        %v2600 = vsel %vm540, %v2594, %v2599
        %v2601 = vsel %vm540, %v2596, %v2598
        %2604 = vst [vmem:[#allocation3 + $0x48] sm:$0xff] %v2600
        %2605 = vst [vmem:[#allocation3 + $0x50] sm:$0xf] %v2601
        %v2606 = vld [vmem:[#allocation2 + $0x8] sm:$0xff]
        %v2607 = vld [vmem:[#allocation2 + $0x10] sm:$0xff]
        %v2608 = vld [vmem:[#allocation2 + $0x18] sm:$0xff]
        %v2609 = vld [vmem:[#allocation2 + $0x20] sm:$0xff]
        %v2610 = vpack.c.bf16 %v2606, %v2606
        %v2611 = vpack.c.bf16 %v2607, %v2607
        %v2612 = vpack.c.bf16 %v2608, %v2608
        %v2613 = vpack.c.bf16 %v2609, %v2609
        %v2618 = vunpack.c.l.b16 %v2610
        %v2619 = vunpack.c.l.b16 %v2611
        %v2620 = vunpack.c.l.b16 %v2612
        %v2621 = vunpack.c.l.b16 %v2613
        %v2622 = vpack.c.b16 %v2619, %v2618
        %v2623 = vpack.c.b16 %v2621, %v2620
        %2624 = vrot.lane.b32.xlu0 %v2622, 110
        %v2625 = vpop.permute.xlu0 %2624
        %2626 = vrot.lane.b32.xlu0 %v2623, 110
        %v2627 = vpop.permute.xlu0 %2626
        %v2628 = vrot.slane %v2625, 4
        %v2629 = vrot.slane %v2627, 4
        %v2630 = vsel %vm360, %v2628, %v2629
        %v2631 = vsel %vm572, %v2625, %v2630
        %v2632 = vsel %vm572, %v2627, %v2629
        %2635 = vst [vmem:[#allocation3 + $0x54] sm:$0xff] %v2631
        %2636 = vst [vmem:[#allocation3 + $0x5c] sm:$0xf] %v2632
        %v2637 = vld [vmem:[#allocation2 + $0x8] sm:$0xff]
        %v2638 = vld [vmem:[#allocation2 + $0x10] sm:$0xff]
        %v2639 = vld [vmem:[#allocation2 + $0x18] sm:$0xff]
        %v2640 = vld [vmem:[#allocation2 + $0x20] sm:$0xff]
        %v2641 = vpack.c.bf16 %v2637, %v2637
        %v2642 = vpack.c.bf16 %v2638, %v2638
        %v2643 = vpack.c.bf16 %v2639, %v2639
        %v2644 = vpack.c.bf16 %v2640, %v2640
        %v2649 = vunpack.c.l.b16 %v2641
        %v2650 = vunpack.c.l.b16 %v2642
        %v2651 = vunpack.c.l.b16 %v2643
        %v2652 = vunpack.c.l.b16 %v2644
        %v2653 = vpack.c.b16 %v2650, %v2649
        %v2654 = vpack.c.b16 %v2652, %v2651
        %2655 = vrot.lane.b32.xlu0 %v2653, 109
        %v2656 = vpop.permute.xlu0 %2655
        %2657 = vrot.lane.b32.xlu0 %v2654, 109
        %v2658 = vpop.permute.xlu0 %2657
        %v2659 = vrot.slane %v2656, 4
        %v2660 = vrot.slane %v2658, 4
        %v2661 = vsel %vm360, %v2659, %v2660
        %v2662 = vsel %vm604, %v2656, %v2661
        %v2663 = vsel %vm604, %v2658, %v2660
        %2666 = vst [vmem:[#allocation3 + $0x60] sm:$0xff] %v2662
        %2667 = vst [vmem:[#allocation3 + $0x68] sm:$0xf] %v2663
        %v2668 = vld [vmem:[#allocation3] sm:$0xff]
        %v2669 = vld [vmem:[#allocation3 + $0x8] sm:$0xf]
        %v2670 = vld [vmem:[#allocation3 + $0xc] sm:$0xff]
        %v2671 = vld [vmem:[#allocation3 + $0x14] sm:$0xf]
        %v2672 = vld [vmem:[#allocation3 + $0x18] sm:$0xff]
        %v2673 = vld [vmem:[#allocation3 + $0x20] sm:$0xf]
        %v2674 = vld [vmem:[#allocation3 + $0x24] sm:$0xff]
        %v2675 = vld [vmem:[#allocation3 + $0x2c] sm:$0xf]
        %v2676 = vld [vmem:[#allocation3 + $0x30] sm:$0xff]
        %v2677 = vld [vmem:[#allocation3 + $0x38] sm:$0xf]
        %v2678 = vld [vmem:[#allocation3 + $0x3c] sm:$0xff]
        %v2679 = vld [vmem:[#allocation3 + $0x44] sm:$0xf]
        %v2680 = vld [vmem:[#allocation3 + $0x48] sm:$0xff]
        %v2681 = vld [vmem:[#allocation3 + $0x50] sm:$0xf]
        %v2682 = vld [vmem:[#allocation3 + $0x54] sm:$0xff]
        %v2683 = vld [vmem:[#allocation3 + $0x5c] sm:$0xf]
        %v2684 = vld [vmem:[#allocation3 + $0x60] sm:$0xff]
        %v2685 = vld [vmem:[#allocation3 + $0x68] sm:$0xf]
        %2687 = vset.pattern.permute.xlu0 0
        %2688 = vperm.xlu0 %2687, %v2401
        %v2689 = vpop.permute.xlu0 %2688
        %v2709 = vunpack.c.l.b16 %v2668
        %v2710 = vunpack.c.h.b16 %v2668
        %v2711 = vunpack.c.l.b16 %v2669
        %v2712 = vunpack.c.l.b16 %v2670
        %v2713 = vunpack.c.h.b16 %v2670
        %v2714 = vunpack.c.l.b16 %v2671
        %v2715 = vunpack.c.l.b16 %v2672
        %v2716 = vunpack.c.h.b16 %v2672
        %v2717 = vunpack.c.l.b16 %v2673
        %v2718 = vunpack.c.l.b16 %v2674
        %v2719 = vunpack.c.h.b16 %v2674
        %v2720 = vunpack.c.l.b16 %v2675
        %v2721 = vunpack.c.l.b16 %v2676
        %v2722 = vunpack.c.h.b16 %v2676
        %v2723 = vunpack.c.l.b16 %v2677
        %v2724 = vunpack.c.l.b16 %v2678
        %v2725 = vunpack.c.h.b16 %v2678
        %v2726 = vunpack.c.l.b16 %v2679
        %v2727 = vunpack.c.l.b16 %v2680
        %v2728 = vunpack.c.h.b16 %v2680
        %v2729 = vunpack.c.l.b16 %v2681
        %v2730 = vunpack.c.l.b16 %v2682
        %v2731 = vunpack.c.h.b16 %v2682
        %v2732 = vunpack.c.l.b16 %v2683
        %v2733 = vunpack.c.l.b16 %v2684
        %v2734 = vunpack.c.h.b16 %v2684
        %v2735 = vunpack.c.l.b16 %v2685
        %v2736 = vpack.c.b16 %v2712, %v2709
        %v2737 = vpack.c.b16 %v2713, %v2710
        %v2738 = vpack.c.b16 %v2714, %v2711
        %v2739 = vpack.c.b16 %v2718, %v2715
        %v2740 = vpack.c.b16 %v2719, %v2716
        %v2741 = vpack.c.b16 %v2720, %v2717
        %v2742 = vpack.c.b16 %v2724, %v2721
        %v2743 = vpack.c.b16 %v2725, %v2722
        %v2744 = vpack.c.b16 %v2726, %v2723
        %v2745 = vpack.c.b16 %v2730, %v2727
        %v2746 = vpack.c.b16 %v2731, %v2728
        %v2747 = vpack.c.b16 %v2732, %v2729
        %v2748 = vpack.c.b16 %v2733, %v2733
        %v2749 = vpack.c.b16 %v2734, %v2734
        %v2750 = vpack.c.b16 %v2735, %v2735
        %v2764 = vsel %vm706, %v2399, 0
        %v2767 = vsel %vm710, %v2748, 0
        %v2770 = vsel %vm710, %v2749, 0
        %v2773 = vsel %vm710, %v2750, 0
        %2775 = vmatprep.subr.bf16.mxu0 %v2737
        %2776 = vmatpush1.bf16.msra.mxu0 %v2736
        %2777 = vmatprep.subr.bf16.mxu0 %v2740
        %2778 = vmatpush1.bf16.msra.mxu0 %v2739
        %2779 = vmatprep.subr.bf16.mxu0 %v2743
        %2780 = vmatpush1.bf16.msra.mxu0 %v2742
        %2781 = vmatprep.subr.bf16.mxu0 %v2746
        %2782 = vmatpush1.bf16.msra.mxu0 %v2745
        %2783 = vmatprep.subr.bf16.mxu0 %v2770
        %2784 = vmatpush1.bf16.msra.mxu0 %v2767
        %2785 = vmatprep.subr.bf16.mxu0 0
        %2786 = vmatpush1.bf16.msra.mxu0 0
        %2787 = vmatprep.subr.bf16.mxu0 0
        %2788 = vmatpush1.bf16.msra.mxu0 0
        %2789 = vmatprep.subr.bf16.mxu0 0
        %2790 = vmatpush1.bf16.msra.mxu0 0
        %2791 = vmatprep.subr.bf16.mxu0 0
        %2792 = vmatpush1.bf16.msra.mxu0 0
        %2793 = vmatprep.subr.bf16.mxu0 0
        %2794 = vmatpush1.bf16.msra.mxu0 0
        %2795 = vmatprep.subr.bf16.mxu0 0
        %2796 = vmatpush1.bf16.msra.mxu0 0
        %2797 = vmatprep.subr.bf16.mxu0 0
        %2798 = vmatpush1.bf16.msra.mxu0 0
        %2799 = vmatprep.subr.bf16.mxu0 0
        %2800 = vmatpush1.bf16.msra.mxu0 0
        %2801 = vmatprep.subr.bf16.mxu0 0
        %2802 = vmatpush1.bf16.msra.mxu0 0
        %2803 = vmatprep.subr.bf16.mxu0 0
        %2804 = vmatpush1.bf16.msra.mxu0 0
        %2805 = vmatprep.subr.bf16.mxu0 0
        %2806 = vmatpush1.bf16.msra.mxu0 0
        %2807 = vmatprep.mubr.bf16.mxu0 0
        %2808 = vmatmul.mubr.bf16.gmra.mrb[0].mxu0 %v2764
        %v2809 = vpop.f32.mrb[0].mxu0
        %v2810 = vadd.f32 %v2689, %v2809
        %v2811 = vpop.f32.mrb[0].mxu0
        %v2812 = vadd.f32 %v2689, %v2811
        %v2813 = vpop.f32.mrb[0].mxu0
        %v2814 = vpop.f32.mrb[0].mxu0
        %2815 = vdwg.mxu0
        %2816 = vmatprep.subr.bf16.mxu0 0
        %2817 = vmatpush1.bf16.msra.mxu0 %v2738
        %2818 = vmatprep.subr.bf16.mxu0 0
        %2819 = vmatpush1.bf16.msra.mxu0 %v2741
        %2820 = vmatprep.subr.bf16.mxu0 0
        %2821 = vmatpush1.bf16.msra.mxu0 %v2744
        %2822 = vmatprep.subr.bf16.mxu0 0
        %2823 = vmatpush1.bf16.msra.mxu0 %v2747
        %2824 = vmatprep.subr.bf16.mxu0 0
        %2825 = vmatpush1.bf16.msra.mxu0 %v2773
        %2826 = vmatprep.subr.bf16.mxu0 0
        %2827 = vmatpush1.bf16.msra.mxu0 0
        %2828 = vmatprep.subr.bf16.mxu0 0
        %2829 = vmatpush1.bf16.msra.mxu0 0
        %2830 = vmatprep.subr.bf16.mxu0 0
        %2831 = vmatpush1.bf16.msra.mxu0 0
        %2832 = vmatprep.subr.bf16.mxu0 0
        %2833 = vmatpush1.bf16.msra.mxu0 0
        %2834 = vmatprep.subr.bf16.mxu0 0
        %2835 = vmatpush1.bf16.msra.mxu0 0
        %2836 = vmatprep.subr.bf16.mxu0 0
        %2837 = vmatpush1.bf16.msra.mxu0 0
        %2838 = vmatprep.subr.bf16.mxu0 0
        %2839 = vmatpush1.bf16.msra.mxu0 0
        %2840 = vmatprep.subr.bf16.mxu0 0
        %2841 = vmatpush1.bf16.msra.mxu0 0
        %2842 = vmatprep.subr.bf16.mxu0 0
        %2843 = vmatpush1.bf16.msra.mxu0 0
        %2844 = vmatprep.subr.bf16.mxu0 0
        %2845 = vmatpush1.bf16.msra.mxu0 0
        %2846 = vmatprep.subr.bf16.mxu0 0
        %2847 = vmatpush1.bf16.msra.mxu0 0
        %2848 = vmatprep.mubr.bf16.mxu0 0
        %2849 = vmatmul.mubr.bf16.gmra.mrb[0].mxu0 %v2764
        %v2850 = vpop.f32.mrb[0].mxu0
        %v2851 = vadd.f32 %v2689, %v2850
        %v2852 = vpop.f32.mrb[0].mxu0
        %v2853 = vpop.f32.mrb[0].mxu0
        %v2854 = vpop.f32.mrb[0].mxu0
        %2855 = vdwg.mxu0
        %v2856 = vadd.f32 %v1922, %v2810
        %v2857 = vadd.f32 %v1923, %v2812
        %v2858 = vadd.f32 %v1924, %v2851
        %2859 = vst [vmem:[%s322] sm:$0xff] %v2856
        %2860 = vst [vmem:[%s322 + $0x8] sm:$0xff] %v2857
        %2861 = vst [vmem:[%s322 + $0x10] sm:$0xff] %v2858
        %s2862 = sand.u32 %s190, 1
        %s2863 = scalar_lea.sflag [#allocation6], %s2862
        %s2864 = sand.u32 %s190, 1
        %s2865 = smul.addr %s2864, 24
        %s2866 = scalar_lea.vmem [#allocation9], %s2865
        // Predicated region
        $region57: #{tpu_custom_call.1} parent=47 // pred_check
          %p2867 = pneg %p200
        $region58: #{tpu_custom_call.1} parent=47 // pred_check_branch
          %2869 = sbr.rel (%p2867) target = $region60
        $region59: #{tpu_custom_call.1} parent=47 // pred_region
          %s2871 = ssub.s32 384, 384
          %2872 = vsyncadd %s2863, %s2871
          %s2873 = smul.addr %s25, 3
          %s2874 = smul.addr %s2873, 128
          %s2875 = scalar_lea.hbm %s7, %s2874
          %s2877 = sshll.u32 %s2866, 4
          %s2878 = int_to_ptr.vmem [resolvable:$true] %s2877
          %2880 = dma.vmem_to_hbm [thread:$0]  %s2878, 384, %s2875, %s2863
        $region60: #{tpu_custom_call.1} parent=47 // pred_fallthru
          _
      $region48: #{tpu_custom_call.1} parent=5 // pred_fallthru
        _
      %p2881 = scmp.le.s32.totalorder 2, %s20
      // Predicated region
      $region61: #{tpu_custom_call.1} parent=5 // pred_check
        %p2882 = pneg %p2881
      $region62: #{tpu_custom_call.1} parent=5 // pred_check_branch
        %2884 = sbr.rel (%p2882) target = $region64
      $region63: #{tpu_custom_call.1} parent=5 // pred_region
        %s2885 = ssub.s32 %s20, 2
        // Predicated region
        $region65: #{tpu_custom_call.1} parent=63 // pred_check
          %p2886 = pneg %p206
        $region66: #{tpu_custom_call.1} parent=63 // pred_check_branch
          %2888 = sbr.rel (%p2886) target = $region68
        $region67: #{tpu_custom_call.1} parent=63 // pred_region
          %s2889 = sand.u32 %s191, 1
          %s2890 = scalar_lea.sflag [#allocation6], %s2889
          %s2891 = sand.u32 %s191, 1
          %s2892 = smul.addr %s2891, 24
          %s2893 = scalar_lea.vmem [#allocation9], %s2892
          %2894 = dma.done %s2890, 384
        $region68: #{tpu_custom_call.1} parent=63 // pred_fallthru
          _
      $region64: #{tpu_custom_call.1} parent=5 // pred_fallthru
        _
    $region6: #{tpu_custom_call.1} parent=1 // loop_footer
      %s24 = sadd.s32 1, %s20
    $region7: #{tpu_custom_call.1} parent=1 // loop_footer_branch
      %19 = sbr.rel target = $region3
    $region8: #{tpu_custom_call.1} parent=1 // loop_exit
      _
    %2895 = vsyncpa [#allocation5], 1
    %s2896 = scalar_lea.sflag [#allocation5], 1
    %2897 = vsyncpa %s2896, 1
    %2898 = vsyncpa [#allocation8], 1
    %2899 = vsyncpa [#allocation6], 1
    %s2900 = scalar_lea.sflag [#allocation6], 1
    %2901 = vsyncpa %s2900, 1

</llo_original>
